<compile_context>
chip_gen: v7x
topology: tpu7x:2x2x1
jax: 0.10.0
libtpu: 0.0.40
codegen_flags: <defaults>
</compile_context>

<pallas_src>
import jax
import jax.numpy as jnp
from jax.experimental import pallas as pl
from jax.experimental.pallas import tpu as pltpu

# Small shapes consistent with the module structure (EMB=HID like the original 64/64).
BATCH = 4
SEQ_LEN = 8
VOCAB = 50
EMB = 32          # DIS_EMBEDDING_DIM (scaled down)
HID = 32          # DIS_HIDDEN_DIM   (scaled down)
N_CLASSES = 14


def _gru_cell(gi, h, whh, bhh_b, H):
    """One PyTorch-convention GRU cell step with precomputed input projection gi.

    gates ordered (r, z, n); r and z share one fused sigmoid dispatch."""
    gh = jnp.dot(h, whh, preferred_element_type=jnp.float32) + bhh_b
    rz = jax.nn.sigmoid(gi[:, :2 * H] + gh[:, :2 * H])
    r = rz[:, :H]
    z = rz[:, H:]
    n = jnp.tanh(gi[:, 2 * H:] + r * gh[:, 2 * H:])
    return (1.0 - z) * n + z * h


def text_classifier_kernel(
    emb_ref,                                            # (T*B, E) time-major, flattened
    wih0_ref, bih0_ref,                                 # (E, 6H) = [fwd|bwd], (1, 6H)
    whh0f_ref, bhh0f_ref, whh0b_ref, bhh0b_ref,         # layer0 recurrent weights
    wih1_ref, bih1_ref,                                 # (2H, 6H) = [fwd|bwd], (1, 6H)
    whh1f_ref, bhh1f_ref, whh1b_ref, bhh1b_ref,         # layer1 recurrent weights
    wg2h_ref, bg2h_ref, wh2o_ref, bh2o_ref,             # heads
    out_ref,                                            # (B, 14)
):
    TB, _ = emb_ref.shape
    H = whh0f_ref.shape[0]
    B = out_ref.shape[0]
    T = TB // B

    # ---- hoist loop-invariant weight loads and bias broadcasts ----
    whh0f = whh0f_ref[...]
    whh0b = whh0b_ref[...]
    whh1f = whh1f_ref[...]
    whh1b = whh1b_ref[...]
    bhh0f = jnp.broadcast_to(bhh0f_ref[...], (B, 3 * H))
    bhh0b = jnp.broadcast_to(bhh0b_ref[...], (B, 3 * H))
    bhh1f = jnp.broadcast_to(bhh1f_ref[...], (B, 3 * H))
    bhh1b = jnp.broadcast_to(bhh1b_ref[...], (B, 3 * H))

    # ---- layer 0: batched input projection for all timesteps & both directions ----
    # (T*B, E) @ (E, 6H): fwd gates in lanes [:3H], bwd gates in lanes [3H:].
    gi0 = (jnp.dot(emb_ref[...], wih0_ref[...], preferred_element_type=jnp.float32)
           + bih0_ref[...])

    h0 = jnp.zeros((B, H), jnp.float32)
    hf, hb = h0, h0
    y0f = [None] * T
    y0b = [None] * T
    # Interleaved fwd/bwd recurrence, fully unrolled (T is static and small): two
    # independent dependency chains per step; per-step work is only h @ W_hh + gates.
    for step in range(T):
        tf = step
        tb = T - 1 - step
        gif = gi0[tf * B:(tf + 1) * B, :3 * H]
        gib = gi0[tb * B:(tb + 1) * B, 3 * H:]
        hf = _gru_cell(gif, hf, whh0f, bhh0f, H)
        hb = _gru_cell(gib, hb, whh0b, bhh0b, H)
        y0f[tf] = hf
        y0b[tb] = hb

    # ---- layer 1: batched input projection over concat(y0f, y0b), kept in vregs ----
    y0 = jnp.concatenate(
        [jnp.concatenate([y0f[t], y0b[t]], axis=1) for t in range(T)], axis=0)  # (T*B, 2H)
    gi1 = (jnp.dot(y0, wih1_ref[...], preferred_element_type=jnp.float32)
           + bih1_ref[...])

    h1f, h1b = h0, h0
    for step in range(T):
        tf = step
        tb = T - 1 - step
        gif = gi1[tf * B:(tf + 1) * B, :3 * H]
        gib = gi1[tb * B:(tb + 1) * B, 3 * H:]
        h1f = _gru_cell(gif, h1f, whh1f, bhh1f, H)
        h1b = _gru_cell(gib, h1b, whh1b, bhh1b, H)

    # ---- heads ----
    # hidden.permute(1,0,2).view(B, 4H) order is [l0_fwd, l0_bwd, l1_fwd, l1_bwd];
    # single lane-concat to (B, 128) then one K=128 MXU pass for gru2hidden.
    hcat = jnp.concatenate([hf, hb, h1f, h1b], axis=1)          # (B, 4H)
    hid = jnp.tanh(jnp.dot(hcat, wg2h_ref[...], preferred_element_type=jnp.float32)
                   + bg2h_ref[...])
    # TODO(synk): dropout_linear (p=0.2) is identity at inference.
    logits = jnp.dot(hid, wh2o_ref[...], preferred_element_type=jnp.float32) + bh2o_ref[...]
    out_ref[...] = jax.nn.softmax(logits, axis=-1)


def text_classifier_forward(tokens, params):
    # Glue: embedding gather + permute(1,0,2) (batch-major -> time-major) + flatten,
    # and per-direction W_ih / b_ih concatenation along the output axis.
    emb = params["emb_table"][tokens]                            # (B, T, E)
    B, T, E = emb.shape
    emb = jnp.transpose(emb, (1, 0, 2)).reshape(T * B, E).astype(jnp.float32)

    wih0 = jnp.concatenate([params["wih0f"], params["wih0b"]], axis=1)   # (E, 6H)
    bih0 = jnp.concatenate([params["bih0f"], params["bih0b"]], axis=1)   # (1, 6H)
    wih1 = jnp.concatenate([params["wih1f"], params["wih1b"]], axis=1)   # (2H, 6H)
    bih1 = jnp.concatenate([params["bih1f"], params["bih1b"]], axis=1)   # (1, 6H)

    inputs = [
        emb,
        wih0, bih0,
        params["whh0f"], params["bhh0f"], params["whh0b"], params["bhh0b"],
        wih1, bih1,
        params["whh1f"], params["bhh1f"], params["whh1b"], params["bhh1b"],
        params["wg2h"], params["bg2h"], params["wh2o"], params["bh2o"],
    ]
    vmem_spec = pl.BlockSpec(memory_space=pltpu.MemorySpace.VMEM)
    # Total resident footprint (weights + activations) << 1 MiB: no grid / tiling needed
    # on any TPU generation.
    return pl.pallas_call(
        text_classifier_kernel,
        out_shape=jax.ShapeDtypeStruct((B, N_CLASSES), jnp.float32),
        in_specs=[vmem_spec] * len(inputs),
        out_specs=vmem_spec,
    )(*inputs)


def init_params(key):
    keys = iter(jax.random.split(key, 24))
    bound = 1.0 / (HID ** 0.5)

    def u(k, shape):
        return jax.random.uniform(k, shape, jnp.float32, -bound, bound)

    params = {"emb_table": 0.1 * jax.random.normal(next(keys), (VOCAB, EMB), jnp.float32)}
    # (name, input_size): layer0 consumes embeddings, layer1 consumes 2H (bi-dir concat)
    for name, in_dim in (("0f", EMB), ("0b", EMB), ("1f", 2 * HID), ("1b", 2 * HID)):
        params[f"wih{name}"] = u(next(keys), (in_dim, 3 * HID))
        params[f"whh{name}"] = u(next(keys), (HID, 3 * HID))
        params[f"bih{name}"] = u(next(keys), (1, 3 * HID))
        params[f"bhh{name}"] = u(next(keys), (1, 3 * HID))
    params["wg2h"] = u(next(keys), (4 * HID, HID))
    params["bg2h"] = u(next(keys), (1, HID))
    params["wh2o"] = u(next(keys), (HID, N_CLASSES))
    params["bh2o"] = u(next(keys), (1, N_CLASSES))
    return params


def ref_forward(tokens, params):
    """Pure-JAX reference matching PyTorch GRU/linear/softmax semantics."""
    x = jnp.transpose(params["emb_table"][tokens], (1, 0, 2)).astype(jnp.float32)  # (T,B,E)
    T, B, _ = x.shape
    H = HID

    def step(xt, h, tag):
        gi = xt @ params[f"wih{tag}"] + params[f"bih{tag}"]
        gh = h @ params[f"whh{tag}"] + params[f"bhh{tag}"]
        r = jax.nn.sigmoid(gi[:, :H] + gh[:, :H])
        z = jax.nn.sigmoid(gi[:, H:2 * H] + gh[:, H:2 * H])
        n = jnp.tanh(gi[:, 2 * H:] + r * gh[:, 2 * H:])
        return (1.0 - z) * n + z * h

    h0 = jnp.zeros((B, H), jnp.float32)
    hf = h0
    y0f = []
    for t in range(T):
        hf = step(x[t], hf, "0f")
        y0f.append(hf)
    hb = h0
    y0b = [None] * T
    for i in range(T):
        t = T - 1 - i
        hb = step(x[t], hb, "0b")
        y0b[t] = hb
    y1 = [jnp.concatenate([y0f[t], y0b[t]], axis=-1) for t in range(T)]
    h1f = h0
    for t in range(T):
        h1f = step(y1[t], h1f, "1f")
    h1b = h0
    for i in range(T):
        h1b = step(y1[T - 1 - i], h1b, "1b")
    hcat = jnp.concatenate([hf, hb, h1f, h1b], axis=-1)           # (B, 4H)
    hid = jnp.tanh(hcat @ params["wg2h"] + params["bg2h"])
    logits = hid @ params["wh2o"] + params["bh2o"]
    return jax.nn.softmax(logits, axis=-1)


if __name__ == "__main__":
    key = jax.random.PRNGKey(0)
    pkey, tkey = jax.random.split(key)
    params = init_params(pkey)
    tokens = jax.random.randint(tkey, (BATCH, SEQ_LEN), 0, VOCAB, dtype=jnp.int32)

    out = text_classifier_forward(tokens, params)
    out = jax.block_until_ready(out)

    ref = ref_forward(tokens, params)
    assert out.shape == (BATCH, N_CLASSES)
    max_err = float(jnp.max(jnp.abs(out - ref)))
    assert jnp.allclose(out, ref, atol=1e-4, rtol=1e-4), f"max_err={max_err}"
    # rows sum to 1 (softmax)
    assert jnp.allclose(jnp.sum(out, axis=-1), jnp.ones((BATCH,)), atol=1e-5)
    print("KERNEL_OK")
</pallas_src>

<mosaic_0001>
module attributes {stable_mosaic.version = 11 : i64} {
  func.func @text_classifier_kernel(%arg0: memref<32x32xf32, #tpu.memory_space<vmem>>, %arg1: memref<32x192xf32, #tpu.memory_space<vmem>>, %arg2: memref<1x192xf32, #tpu.memory_space<vmem>>, %arg3: memref<32x96xf32, #tpu.memory_space<vmem>>, %arg4: memref<1x96xf32, #tpu.memory_space<vmem>>, %arg5: memref<32x96xf32, #tpu.memory_space<vmem>>, %arg6: memref<1x96xf32, #tpu.memory_space<vmem>>, %arg7: memref<64x192xf32, #tpu.memory_space<vmem>>, %arg8: memref<1x192xf32, #tpu.memory_space<vmem>>, %arg9: memref<32x96xf32, #tpu.memory_space<vmem>>, %arg10: memref<1x96xf32, #tpu.memory_space<vmem>>, %arg11: memref<32x96xf32, #tpu.memory_space<vmem>>, %arg12: memref<1x96xf32, #tpu.memory_space<vmem>>, %arg13: memref<128x32xf32, #tpu.memory_space<vmem>>, %arg14: memref<1x32xf32, #tpu.memory_space<vmem>>, %arg15: memref<32x14xf32, #tpu.memory_space<vmem>>, %arg16: memref<1x14xf32, #tpu.memory_space<vmem>>, %arg17: memref<4x14xf32, #tpu.memory_space<vmem>>) attributes {dimension_semantics = [], scalar_prefetch = 0 : i64, scratch_operands = 0 : i64, tpu.core_type = #tpu.core_type<tc>} {
    %c0 = arith.constant 0 : index
    %c0_0 = arith.constant 0 : index
    %0 = vector.load %arg3[%c0, %c0_0] : memref<32x96xf32, #tpu.memory_space<vmem>>, vector<32x96xf32>
    %c0_1 = arith.constant 0 : index
    %c0_2 = arith.constant 0 : index
    %1 = vector.load %arg5[%c0_1, %c0_2] : memref<32x96xf32, #tpu.memory_space<vmem>>, vector<32x96xf32>
    %c0_3 = arith.constant 0 : index
    %c0_4 = arith.constant 0 : index
    %2 = vector.load %arg9[%c0_3, %c0_4] : memref<32x96xf32, #tpu.memory_space<vmem>>, vector<32x96xf32>
    %c0_5 = arith.constant 0 : index
    %c0_6 = arith.constant 0 : index
    %3 = vector.load %arg11[%c0_5, %c0_6] : memref<32x96xf32, #tpu.memory_space<vmem>>, vector<32x96xf32>
    %c0_7 = arith.constant 0 : index
    %c0_8 = arith.constant 0 : index
    %4 = vector.load %arg4[%c0_7, %c0_8] : memref<1x96xf32, #tpu.memory_space<vmem>>, vector<1x96xf32>
    %5 = vector.shape_cast %4 : vector<1x96xf32> to vector<1x96xf32>
    %6 = vector.broadcast %5 : vector<1x96xf32> to vector<4x96xf32>
    %c0_9 = arith.constant 0 : index
    %c0_10 = arith.constant 0 : index
    %7 = vector.load %arg6[%c0_9, %c0_10] : memref<1x96xf32, #tpu.memory_space<vmem>>, vector<1x96xf32>
    %8 = vector.shape_cast %7 : vector<1x96xf32> to vector<1x96xf32>
    %9 = vector.broadcast %8 : vector<1x96xf32> to vector<4x96xf32>
    %c0_11 = arith.constant 0 : index
    %c0_12 = arith.constant 0 : index
    %10 = vector.load %arg10[%c0_11, %c0_12] : memref<1x96xf32, #tpu.memory_space<vmem>>, vector<1x96xf32>
    %11 = vector.shape_cast %10 : vector<1x96xf32> to vector<1x96xf32>
    %12 = vector.broadcast %11 : vector<1x96xf32> to vector<4x96xf32>
    %c0_13 = arith.constant 0 : index
    %c0_14 = arith.constant 0 : index
    %13 = vector.load %arg12[%c0_13, %c0_14] : memref<1x96xf32, #tpu.memory_space<vmem>>, vector<1x96xf32>
    %14 = vector.shape_cast %13 : vector<1x96xf32> to vector<1x96xf32>
    %15 = vector.broadcast %14 : vector<1x96xf32> to vector<4x96xf32>
    %c0_15 = arith.constant 0 : index
    %c0_16 = arith.constant 0 : index
    %16 = vector.load %arg0[%c0_15, %c0_16] : memref<32x32xf32, #tpu.memory_space<vmem>>, vector<32x32xf32>
    %c0_17 = arith.constant 0 : index
    %c0_18 = arith.constant 0 : index
    %17 = vector.load %arg1[%c0_17, %c0_18] : memref<32x192xf32, #tpu.memory_space<vmem>>, vector<32x192xf32>
    %cst = arith.constant dense<0.000000e+00> : vector<32x192xf32>
    %18 = tpu.matmul %16, %17, %cst {dimension_numbers = #tpu.dot_dimension_numbers<[1], [0], [0], [1], [0, 0, 1, 1], [], []>} : vector<32x32xf32>, vector<32x192xf32>, vector<32x192xf32> -> vector<32x192xf32>
    %c0_19 = arith.constant 0 : index
    %c0_20 = arith.constant 0 : index
    %19 = vector.load %arg2[%c0_19, %c0_20] : memref<1x192xf32, #tpu.memory_space<vmem>>, vector<1x192xf32>
    %20 = vector.broadcast %19 : vector<1x192xf32> to vector<32x192xf32>
    %21 = arith.addf %18, %20 : vector<32x192xf32>
    %cst_21 = arith.constant 0.000000e+00 : f32
    %22 = vector.broadcast %cst_21 : f32 to vector<4x32xf32>
    %23 = vector.extract_strided_slice %21 {offsets = [0, 0], sizes = [4, 96], strides = [1, 1]} : vector<32x192xf32> to vector<4x96xf32>
    %24 = vector.extract_strided_slice %21 {offsets = [28, 96], sizes = [4, 96], strides = [1, 1]} : vector<32x192xf32> to vector<4x96xf32>
    %cst_22 = arith.constant dense<0.000000e+00> : vector<4x96xf32>
    %25 = tpu.matmul %22, %0, %cst_22 {dimension_numbers = #tpu.dot_dimension_numbers<[1], [0], [0], [1], [0, 0, 1, 1], [], []>} : vector<4x32xf32>, vector<32x96xf32>, vector<4x96xf32> -> vector<4x96xf32>
    %26 = arith.addf %25, %6 : vector<4x96xf32>
    %27 = vector.extract_strided_slice %23 {offsets = [0, 0], sizes = [4, 64], strides = [1, 1]} : vector<4x96xf32> to vector<4x64xf32>
    %28 = vector.extract_strided_slice %26 {offsets = [0, 0], sizes = [4, 64], strides = [1, 1]} : vector<4x96xf32> to vector<4x64xf32>
    %29 = arith.addf %27, %28 : vector<4x64xf32>
    %30 = arith.negf %29 : vector<4x64xf32>
    %31 = math.exp %30 : vector<4x64xf32>
    %cst_23 = arith.constant 1.000000e+00 : f32
    %32 = vector.broadcast %cst_23 : f32 to vector<4x64xf32>
    %33 = arith.addf %32, %31 : vector<4x64xf32>
    %34 = arith.divf %32, %33 : vector<4x64xf32>
    %35 = vector.extract_strided_slice %34 {offsets = [0, 0], sizes = [4, 32], strides = [1, 1]} : vector<4x64xf32> to vector<4x32xf32>
    %36 = vector.extract_strided_slice %34 {offsets = [0, 32], sizes = [4, 32], strides = [1, 1]} : vector<4x64xf32> to vector<4x32xf32>
    %37 = vector.extract_strided_slice %23 {offsets = [0, 64], sizes = [4, 32], strides = [1, 1]} : vector<4x96xf32> to vector<4x32xf32>
    %38 = vector.extract_strided_slice %26 {offsets = [0, 64], sizes = [4, 32], strides = [1, 1]} : vector<4x96xf32> to vector<4x32xf32>
    %39 = arith.mulf %35, %38 : vector<4x32xf32>
    %40 = arith.addf %37, %39 : vector<4x32xf32>
    %41 = math.tanh %40 : vector<4x32xf32>
    %cst_24 = arith.constant 1.000000e+00 : f32
    %42 = vector.broadcast %cst_24 : f32 to vector<4x32xf32>
    %43 = arith.subf %42, %36 : vector<4x32xf32>
    %44 = arith.mulf %43, %41 : vector<4x32xf32>
    %45 = arith.mulf %36, %22 : vector<4x32xf32>
    %46 = arith.addf %44, %45 : vector<4x32xf32>
    %cst_25 = arith.constant dense<0.000000e+00> : vector<4x96xf32>
    %47 = tpu.matmul %22, %1, %cst_25 {dimension_numbers = #tpu.dot_dimension_numbers<[1], [0], [0], [1], [0, 0, 1, 1], [], []>} : vector<4x32xf32>, vector<32x96xf32>, vector<4x96xf32> -> vector<4x96xf32>
    %48 = arith.addf %47, %9 : vector<4x96xf32>
    %49 = vector.extract_strided_slice %24 {offsets = [0, 0], sizes = [4, 64], strides = [1, 1]} : vector<4x96xf32> to vector<4x64xf32>
    %50 = vector.extract_strided_slice %48 {offsets = [0, 0], sizes = [4, 64], strides = [1, 1]} : vector<4x96xf32> to vector<4x64xf32>
    %51 = arith.addf %49, %50 : vector<4x64xf32>
    %52 = arith.negf %51 : vector<4x64xf32>
    %53 = math.exp %52 : vector<4x64xf32>
    %cst_26 = arith.constant 1.000000e+00 : f32
    %54 = vector.broadcast %cst_26 : f32 to vector<4x64xf32>
    %55 = arith.addf %54, %53 : vector<4x64xf32>
    %56 = arith.divf %54, %55 : vector<4x64xf32>
    %57 = vector.extract_strided_slice %56 {offsets = [0, 0], sizes = [4, 32], strides = [1, 1]} : vector<4x64xf32> to vector<4x32xf32>
    %58 = vector.extract_strided_slice %56 {offsets = [0, 32], sizes = [4, 32], strides = [1, 1]} : vector<4x64xf32> to vector<4x32xf32>
    %59 = vector.extract_strided_slice %24 {offsets = [0, 64], sizes = [4, 32], strides = [1, 1]} : vector<4x96xf32> to vector<4x32xf32>
    %60 = vector.extract_strided_slice %48 {offsets = [0, 64], sizes = [4, 32], strides = [1, 1]} : vector<4x96xf32> to vector<4x32xf32>
    %61 = arith.mulf %57, %60 : vector<4x32xf32>
    %62 = arith.addf %59, %61 : vector<4x32xf32>
    %63 = math.tanh %62 : vector<4x32xf32>
    %cst_27 = arith.constant 1.000000e+00 : f32
    %64 = vector.broadcast %cst_27 : f32 to vector<4x32xf32>
    %65 = arith.subf %64, %58 : vector<4x32xf32>
    %66 = arith.mulf %65, %63 : vector<4x32xf32>
    %67 = arith.mulf %58, %22 : vector<4x32xf32>
    %68 = arith.addf %66, %67 : vector<4x32xf32>
    %69 = vector.extract_strided_slice %21 {offsets = [4, 0], sizes = [4, 96], strides = [1, 1]} : vector<32x192xf32> to vector<4x96xf32>
    %70 = vector.extract_strided_slice %21 {offsets = [24, 96], sizes = [4, 96], strides = [1, 1]} : vector<32x192xf32> to vector<4x96xf32>
    %cst_28 = arith.constant dense<0.000000e+00> : vector<4x96xf32>
    %71 = tpu.matmul %46, %0, %cst_28 {dimension_numbers = #tpu.dot_dimension_numbers<[1], [0], [0], [1], [0, 0, 1, 1], [], []>} : vector<4x32xf32>, vector<32x96xf32>, vector<4x96xf32> -> vector<4x96xf32>
    %72 = arith.addf %71, %6 : vector<4x96xf32>
    %73 = vector.extract_strided_slice %69 {offsets = [0, 0], sizes = [4, 64], strides = [1, 1]} : vector<4x96xf32> to vector<4x64xf32>
    %74 = vector.extract_strided_slice %72 {offsets = [0, 0], sizes = [4, 64], strides = [1, 1]} : vector<4x96xf32> to vector<4x64xf32>
    %75 = arith.addf %73, %74 : vector<4x64xf32>
    %76 = arith.negf %75 : vector<4x64xf32>
    %77 = math.exp %76 : vector<4x64xf32>
    %cst_29 = arith.constant 1.000000e+00 : f32
    %78 = vector.broadcast %cst_29 : f32 to vector<4x64xf32>
    %79 = arith.addf %78, %77 : vector<4x64xf32>
    %80 = arith.divf %78, %79 : vector<4x64xf32>
    %81 = vector.extract_strided_slice %80 {offsets = [0, 0], sizes = [4, 32], strides = [1, 1]} : vector<4x64xf32> to vector<4x32xf32>
    %82 = vector.extract_strided_slice %80 {offsets = [0, 32], sizes = [4, 32], strides = [1, 1]} : vector<4x64xf32> to vector<4x32xf32>
    %83 = vector.extract_strided_slice %69 {offsets = [0, 64], sizes = [4, 32], strides = [1, 1]} : vector<4x96xf32> to vector<4x32xf32>
    %84 = vector.extract_strided_slice %72 {offsets = [0, 64], sizes = [4, 32], strides = [1, 1]} : vector<4x96xf32> to vector<4x32xf32>
    %85 = arith.mulf %81, %84 : vector<4x32xf32>
    %86 = arith.addf %83, %85 : vector<4x32xf32>
    %87 = math.tanh %86 : vector<4x32xf32>
    %cst_30 = arith.constant 1.000000e+00 : f32
    %88 = vector.broadcast %cst_30 : f32 to vector<4x32xf32>
    %89 = arith.subf %88, %82 : vector<4x32xf32>
    %90 = arith.mulf %89, %87 : vector<4x32xf32>
    %91 = arith.mulf %82, %46 : vector<4x32xf32>
    %92 = arith.addf %90, %91 : vector<4x32xf32>
    %cst_31 = arith.constant dense<0.000000e+00> : vector<4x96xf32>
    %93 = tpu.matmul %68, %1, %cst_31 {dimension_numbers = #tpu.dot_dimension_numbers<[1], [0], [0], [1], [0, 0, 1, 1], [], []>} : vector<4x32xf32>, vector<32x96xf32>, vector<4x96xf32> -> vector<4x96xf32>
    %94 = arith.addf %93, %9 : vector<4x96xf32>
    %95 = vector.extract_strided_slice %70 {offsets = [0, 0], sizes = [4, 64], strides = [1, 1]} : vector<4x96xf32> to vector<4x64xf32>
    %96 = vector.extract_strided_slice %94 {offsets = [0, 0], sizes = [4, 64], strides = [1, 1]} : vector<4x96xf32> to vector<4x64xf32>
    %97 = arith.addf %95, %96 : vector<4x64xf32>
    %98 = arith.negf %97 : vector<4x64xf32>
    %99 = math.exp %98 : vector<4x64xf32>
    %cst_32 = arith.constant 1.000000e+00 : f32
    %100 = vector.broadcast %cst_32 : f32 to vector<4x64xf32>
    %101 = arith.addf %100, %99 : vector<4x64xf32>
    %102 = arith.divf %100, %101 : vector<4x64xf32>
    %103 = vector.extract_strided_slice %102 {offsets = [0, 0], sizes = [4, 32], strides = [1, 1]} : vector<4x64xf32> to vector<4x32xf32>
    %104 = vector.extract_strided_slice %102 {offsets = [0, 32], sizes = [4, 32], strides = [1, 1]} : vector<4x64xf32> to vector<4x32xf32>
    %105 = vector.extract_strided_slice %70 {offsets = [0, 64], sizes = [4, 32], strides = [1, 1]} : vector<4x96xf32> to vector<4x32xf32>
    %106 = vector.extract_strided_slice %94 {offsets = [0, 64], sizes = [4, 32], strides = [1, 1]} : vector<4x96xf32> to vector<4x32xf32>
    %107 = arith.mulf %103, %106 : vector<4x32xf32>
    %108 = arith.addf %105, %107 : vector<4x32xf32>
    %109 = math.tanh %108 : vector<4x32xf32>
    %cst_33 = arith.constant 1.000000e+00 : f32
    %110 = vector.broadcast %cst_33 : f32 to vector<4x32xf32>
    %111 = arith.subf %110, %104 : vector<4x32xf32>
    %112 = arith.mulf %111, %109 : vector<4x32xf32>
    %113 = arith.mulf %104, %68 : vector<4x32xf32>
    %114 = arith.addf %112, %113 : vector<4x32xf32>
    %115 = vector.extract_strided_slice %21 {offsets = [8, 0], sizes = [4, 96], strides = [1, 1]} : vector<32x192xf32> to vector<4x96xf32>
    %116 = vector.extract_strided_slice %21 {offsets = [20, 96], sizes = [4, 96], strides = [1, 1]} : vector<32x192xf32> to vector<4x96xf32>
    %cst_34 = arith.constant dense<0.000000e+00> : vector<4x96xf32>
    %117 = tpu.matmul %92, %0, %cst_34 {dimension_numbers = #tpu.dot_dimension_numbers<[1], [0], [0], [1], [0, 0, 1, 1], [], []>} : vector<4x32xf32>, vector<32x96xf32>, vector<4x96xf32> -> vector<4x96xf32>
    %118 = arith.addf %117, %6 : vector<4x96xf32>
    %119 = vector.extract_strided_slice %115 {offsets = [0, 0], sizes = [4, 64], strides = [1, 1]} : vector<4x96xf32> to vector<4x64xf32>
    %120 = vector.extract_strided_slice %118 {offsets = [0, 0], sizes = [4, 64], strides = [1, 1]} : vector<4x96xf32> to vector<4x64xf32>
    %121 = arith.addf %119, %120 : vector<4x64xf32>
    %122 = arith.negf %121 : vector<4x64xf32>
    %123 = math.exp %122 : vector<4x64xf32>
    %cst_35 = arith.constant 1.000000e+00 : f32
    %124 = vector.broadcast %cst_35 : f32 to vector<4x64xf32>
    %125 = arith.addf %124, %123 : vector<4x64xf32>
    %126 = arith.divf %124, %125 : vector<4x64xf32>
    %127 = vector.extract_strided_slice %126 {offsets = [0, 0], sizes = [4, 32], strides = [1, 1]} : vector<4x64xf32> to vector<4x32xf32>
    %128 = vector.extract_strided_slice %126 {offsets = [0, 32], sizes = [4, 32], strides = [1, 1]} : vector<4x64xf32> to vector<4x32xf32>
    %129 = vector.extract_strided_slice %115 {offsets = [0, 64], sizes = [4, 32], strides = [1, 1]} : vector<4x96xf32> to vector<4x32xf32>
    %130 = vector.extract_strided_slice %118 {offsets = [0, 64], sizes = [4, 32], strides = [1, 1]} : vector<4x96xf32> to vector<4x32xf32>
    %131 = arith.mulf %127, %130 : vector<4x32xf32>
    %132 = arith.addf %129, %131 : vector<4x32xf32>
    %133 = math.tanh %132 : vector<4x32xf32>
    %cst_36 = arith.constant 1.000000e+00 : f32
    %134 = vector.broadcast %cst_36 : f32 to vector<4x32xf32>
    %135 = arith.subf %134, %128 : vector<4x32xf32>
    %136 = arith.mulf %135, %133 : vector<4x32xf32>
    %137 = arith.mulf %128, %92 : vector<4x32xf32>
    %138 = arith.addf %136, %137 : vector<4x32xf32>
    %cst_37 = arith.constant dense<0.000000e+00> : vector<4x96xf32>
    %139 = tpu.matmul %114, %1, %cst_37 {dimension_numbers = #tpu.dot_dimension_numbers<[1], [0], [0], [1], [0, 0, 1, 1], [], []>} : vector<4x32xf32>, vector<32x96xf32>, vector<4x96xf32> -> vector<4x96xf32>
    %140 = arith.addf %139, %9 : vector<4x96xf32>
    %141 = vector.extract_strided_slice %116 {offsets = [0, 0], sizes = [4, 64], strides = [1, 1]} : vector<4x96xf32> to vector<4x64xf32>
    %142 = vector.extract_strided_slice %140 {offsets = [0, 0], sizes = [4, 64], strides = [1, 1]} : vector<4x96xf32> to vector<4x64xf32>
    %143 = arith.addf %141, %142 : vector<4x64xf32>
    %144 = arith.negf %143 : vector<4x64xf32>
    %145 = math.exp %144 : vector<4x64xf32>
    %cst_38 = arith.constant 1.000000e+00 : f32
    %146 = vector.broadcast %cst_38 : f32 to vector<4x64xf32>
    %147 = arith.addf %146, %145 : vector<4x64xf32>
    %148 = arith.divf %146, %147 : vector<4x64xf32>
    %149 = vector.extract_strided_slice %148 {offsets = [0, 0], sizes = [4, 32], strides = [1, 1]} : vector<4x64xf32> to vector<4x32xf32>
    %150 = vector.extract_strided_slice %148 {offsets = [0, 32], sizes = [4, 32], strides = [1, 1]} : vector<4x64xf32> to vector<4x32xf32>
    %151 = vector.extract_strided_slice %116 {offsets = [0, 64], sizes = [4, 32], strides = [1, 1]} : vector<4x96xf32> to vector<4x32xf32>
    %152 = vector.extract_strided_slice %140 {offsets = [0, 64], sizes = [4, 32], strides = [1, 1]} : vector<4x96xf32> to vector<4x32xf32>
    %153 = arith.mulf %149, %152 : vector<4x32xf32>
    %154 = arith.addf %151, %153 : vector<4x32xf32>
    %155 = math.tanh %154 : vector<4x32xf32>
    %cst_39 = arith.constant 1.000000e+00 : f32
    %156 = vector.broadcast %cst_39 : f32 to vector<4x32xf32>
    %157 = arith.subf %156, %150 : vector<4x32xf32>
    %158 = arith.mulf %157, %155 : vector<4x32xf32>
    %159 = arith.mulf %150, %114 : vector<4x32xf32>
    %160 = arith.addf %158, %159 : vector<4x32xf32>
    %161 = vector.extract_strided_slice %21 {offsets = [12, 0], sizes = [4, 96], strides = [1, 1]} : vector<32x192xf32> to vector<4x96xf32>
    %162 = vector.extract_strided_slice %21 {offsets = [16, 96], sizes = [4, 96], strides = [1, 1]} : vector<32x192xf32> to vector<4x96xf32>
    %cst_40 = arith.constant dense<0.000000e+00> : vector<4x96xf32>
    %163 = tpu.matmul %138, %0, %cst_40 {dimension_numbers = #tpu.dot_dimension_numbers<[1], [0], [0], [1], [0, 0, 1, 1], [], []>} : vector<4x32xf32>, vector<32x96xf32>, vector<4x96xf32> -> vector<4x96xf32>
    %164 = arith.addf %163, %6 : vector<4x96xf32>
    %165 = vector.extract_strided_slice %161 {offsets = [0, 0], sizes = [4, 64], strides = [1, 1]} : vector<4x96xf32> to vector<4x64xf32>
    %166 = vector.extract_strided_slice %164 {offsets = [0, 0], sizes = [4, 64], strides = [1, 1]} : vector<4x96xf32> to vector<4x64xf32>
    %167 = arith.addf %165, %166 : vector<4x64xf32>
    %168 = arith.negf %167 : vector<4x64xf32>
    %169 = math.exp %168 : vector<4x64xf32>
    %cst_41 = arith.constant 1.000000e+00 : f32
    %170 = vector.broadcast %cst_41 : f32 to vector<4x64xf32>
    %171 = arith.addf %170, %169 : vector<4x64xf32>
    %172 = arith.divf %170, %171 : vector<4x64xf32>
    %173 = vector.extract_strided_slice %172 {offsets = [0, 0], sizes = [4, 32], strides = [1, 1]} : vector<4x64xf32> to vector<4x32xf32>
    %174 = vector.extract_strided_slice %172 {offsets = [0, 32], sizes = [4, 32], strides = [1, 1]} : vector<4x64xf32> to vector<4x32xf32>
    %175 = vector.extract_strided_slice %161 {offsets = [0, 64], sizes = [4, 32], strides = [1, 1]} : vector<4x96xf32> to vector<4x32xf32>
    %176 = vector.extract_strided_slice %164 {offsets = [0, 64], sizes = [4, 32], strides = [1, 1]} : vector<4x96xf32> to vector<4x32xf32>
    %177 = arith.mulf %173, %176 : vector<4x32xf32>
    %178 = arith.addf %175, %177 : vector<4x32xf32>
    %179 = math.tanh %178 : vector<4x32xf32>
    %cst_42 = arith.constant 1.000000e+00 : f32
    %180 = vector.broadcast %cst_42 : f32 to vector<4x32xf32>
    %181 = arith.subf %180, %174 : vector<4x32xf32>
    %182 = arith.mulf %181, %179 : vector<4x32xf32>
    %183 = arith.mulf %174, %138 : vector<4x32xf32>
    %184 = arith.addf %182, %183 : vector<4x32xf32>
    %cst_43 = arith.constant dense<0.000000e+00> : vector<4x96xf32>
    %185 = tpu.matmul %160, %1, %cst_43 {dimension_numbers = #tpu.dot_dimension_numbers<[1], [0], [0], [1], [0, 0, 1, 1], [], []>} : vector<4x32xf32>, vector<32x96xf32>, vector<4x96xf32> -> vector<4x96xf32>
    %186 = arith.addf %185, %9 : vector<4x96xf32>
    %187 = vector.extract_strided_slice %162 {offsets = [0, 0], sizes = [4, 64], strides = [1, 1]} : vector<4x96xf32> to vector<4x64xf32>
    %188 = vector.extract_strided_slice %186 {offsets = [0, 0], sizes = [4, 64], strides = [1, 1]} : vector<4x96xf32> to vector<4x64xf32>
    %189 = arith.addf %187, %188 : vector<4x64xf32>
    %190 = arith.negf %189 : vector<4x64xf32>
    %191 = math.exp %190 : vector<4x64xf32>
    %cst_44 = arith.constant 1.000000e+00 : f32
    %192 = vector.broadcast %cst_44 : f32 to vector<4x64xf32>
    %193 = arith.addf %192, %191 : vector<4x64xf32>
    %194 = arith.divf %192, %193 : vector<4x64xf32>
    %195 = vector.extract_strided_slice %194 {offsets = [0, 0], sizes = [4, 32], strides = [1, 1]} : vector<4x64xf32> to vector<4x32xf32>
    %196 = vector.extract_strided_slice %194 {offsets = [0, 32], sizes = [4, 32], strides = [1, 1]} : vector<4x64xf32> to vector<4x32xf32>
    %197 = vector.extract_strided_slice %162 {offsets = [0, 64], sizes = [4, 32], strides = [1, 1]} : vector<4x96xf32> to vector<4x32xf32>
    %198 = vector.extract_strided_slice %186 {offsets = [0, 64], sizes = [4, 32], strides = [1, 1]} : vector<4x96xf32> to vector<4x32xf32>
    %199 = arith.mulf %195, %198 : vector<4x32xf32>
    %200 = arith.addf %197, %199 : vector<4x32xf32>
    %201 = math.tanh %200 : vector<4x32xf32>
    %cst_45 = arith.constant 1.000000e+00 : f32
    %202 = vector.broadcast %cst_45 : f32 to vector<4x32xf32>
    %203 = arith.subf %202, %196 : vector<4x32xf32>
    %204 = arith.mulf %203, %201 : vector<4x32xf32>
    %205 = arith.mulf %196, %160 : vector<4x32xf32>
    %206 = arith.addf %204, %205 : vector<4x32xf32>
    %207 = vector.extract_strided_slice %21 {offsets = [16, 0], sizes = [4, 96], strides = [1, 1]} : vector<32x192xf32> to vector<4x96xf32>
    %208 = vector.extract_strided_slice %21 {offsets = [12, 96], sizes = [4, 96], strides = [1, 1]} : vector<32x192xf32> to vector<4x96xf32>
    %cst_46 = arith.constant dense<0.000000e+00> : vector<4x96xf32>
    %209 = tpu.matmul %184, %0, %cst_46 {dimension_numbers = #tpu.dot_dimension_numbers<[1], [0], [0], [1], [0, 0, 1, 1], [], []>} : vector<4x32xf32>, vector<32x96xf32>, vector<4x96xf32> -> vector<4x96xf32>
    %210 = arith.addf %209, %6 : vector<4x96xf32>
    %211 = vector.extract_strided_slice %207 {offsets = [0, 0], sizes = [4, 64], strides = [1, 1]} : vector<4x96xf32> to vector<4x64xf32>
    %212 = vector.extract_strided_slice %210 {offsets = [0, 0], sizes = [4, 64], strides = [1, 1]} : vector<4x96xf32> to vector<4x64xf32>
    %213 = arith.addf %211, %212 : vector<4x64xf32>
    %214 = arith.negf %213 : vector<4x64xf32>
    %215 = math.exp %214 : vector<4x64xf32>
    %cst_47 = arith.constant 1.000000e+00 : f32
    %216 = vector.broadcast %cst_47 : f32 to vector<4x64xf32>
    %217 = arith.addf %216, %215 : vector<4x64xf32>
    %218 = arith.divf %216, %217 : vector<4x64xf32>
    %219 = vector.extract_strided_slice %218 {offsets = [0, 0], sizes = [4, 32], strides = [1, 1]} : vector<4x64xf32> to vector<4x32xf32>
    %220 = vector.extract_strided_slice %218 {offsets = [0, 32], sizes = [4, 32], strides = [1, 1]} : vector<4x64xf32> to vector<4x32xf32>
    %221 = vector.extract_strided_slice %207 {offsets = [0, 64], sizes = [4, 32], strides = [1, 1]} : vector<4x96xf32> to vector<4x32xf32>
    %222 = vector.extract_strided_slice %210 {offsets = [0, 64], sizes = [4, 32], strides = [1, 1]} : vector<4x96xf32> to vector<4x32xf32>
    %223 = arith.mulf %219, %222 : vector<4x32xf32>
    %224 = arith.addf %221, %223 : vector<4x32xf32>
    %225 = math.tanh %224 : vector<4x32xf32>
    %cst_48 = arith.constant 1.000000e+00 : f32
    %226 = vector.broadcast %cst_48 : f32 to vector<4x32xf32>
    %227 = arith.subf %226, %220 : vector<4x32xf32>
    %228 = arith.mulf %227, %225 : vector<4x32xf32>
    %229 = arith.mulf %220, %184 : vector<4x32xf32>
    %230 = arith.addf %228, %229 : vector<4x32xf32>
    %cst_49 = arith.constant dense<0.000000e+00> : vector<4x96xf32>
    %231 = tpu.matmul %206, %1, %cst_49 {dimension_numbers = #tpu.dot_dimension_numbers<[1], [0], [0], [1], [0, 0, 1, 1], [], []>} : vector<4x32xf32>, vector<32x96xf32>, vector<4x96xf32> -> vector<4x96xf32>
    %232 = arith.addf %231, %9 : vector<4x96xf32>
    %233 = vector.extract_strided_slice %208 {offsets = [0, 0], sizes = [4, 64], strides = [1, 1]} : vector<4x96xf32> to vector<4x64xf32>
    %234 = vector.extract_strided_slice %232 {offsets = [0, 0], sizes = [4, 64], strides = [1, 1]} : vector<4x96xf32> to vector<4x64xf32>
    %235 = arith.addf %233, %234 : vector<4x64xf32>
    %236 = arith.negf %235 : vector<4x64xf32>
    %237 = math.exp %236 : vector<4x64xf32>
    %cst_50 = arith.constant 1.000000e+00 : f32
    %238 = vector.broadcast %cst_50 : f32 to vector<4x64xf32>
    %239 = arith.addf %238, %237 : vector<4x64xf32>
    %240 = arith.divf %238, %239 : vector<4x64xf32>
    %241 = vector.extract_strided_slice %240 {offsets = [0, 0], sizes = [4, 32], strides = [1, 1]} : vector<4x64xf32> to vector<4x32xf32>
    %242 = vector.extract_strided_slice %240 {offsets = [0, 32], sizes = [4, 32], strides = [1, 1]} : vector<4x64xf32> to vector<4x32xf32>
    %243 = vector.extract_strided_slice %208 {offsets = [0, 64], sizes = [4, 32], strides = [1, 1]} : vector<4x96xf32> to vector<4x32xf32>
    %244 = vector.extract_strided_slice %232 {offsets = [0, 64], sizes = [4, 32], strides = [1, 1]} : vector<4x96xf32> to vector<4x32xf32>
    %245 = arith.mulf %241, %244 : vector<4x32xf32>
    %246 = arith.addf %243, %245 : vector<4x32xf32>
    %247 = math.tanh %246 : vector<4x32xf32>
    %cst_51 = arith.constant 1.000000e+00 : f32
    %248 = vector.broadcast %cst_51 : f32 to vector<4x32xf32>
    %249 = arith.subf %248, %242 : vector<4x32xf32>
    %250 = arith.mulf %249, %247 : vector<4x32xf32>
    %251 = arith.mulf %242, %206 : vector<4x32xf32>
    %252 = arith.addf %250, %251 : vector<4x32xf32>
    %253 = vector.extract_strided_slice %21 {offsets = [20, 0], sizes = [4, 96], strides = [1, 1]} : vector<32x192xf32> to vector<4x96xf32>
    %254 = vector.extract_strided_slice %21 {offsets = [8, 96], sizes = [4, 96], strides = [1, 1]} : vector<32x192xf32> to vector<4x96xf32>
    %cst_52 = arith.constant dense<0.000000e+00> : vector<4x96xf32>
    %255 = tpu.matmul %230, %0, %cst_52 {dimension_numbers = #tpu.dot_dimension_numbers<[1], [0], [0], [1], [0, 0, 1, 1], [], []>} : vector<4x32xf32>, vector<32x96xf32>, vector<4x96xf32> -> vector<4x96xf32>
    %256 = arith.addf %255, %6 : vector<4x96xf32>
    %257 = vector.extract_strided_slice %253 {offsets = [0, 0], sizes = [4, 64], strides = [1, 1]} : vector<4x96xf32> to vector<4x64xf32>
    %258 = vector.extract_strided_slice %256 {offsets = [0, 0], sizes = [4, 64], strides = [1, 1]} : vector<4x96xf32> to vector<4x64xf32>
    %259 = arith.addf %257, %258 : vector<4x64xf32>
    %260 = arith.negf %259 : vector<4x64xf32>
    %261 = math.exp %260 : vector<4x64xf32>
    %cst_53 = arith.constant 1.000000e+00 : f32
    %262 = vector.broadcast %cst_53 : f32 to vector<4x64xf32>
    %263 = arith.addf %262, %261 : vector<4x64xf32>
    %264 = arith.divf %262, %263 : vector<4x64xf32>
    %265 = vector.extract_strided_slice %264 {offsets = [0, 0], sizes = [4, 32], strides = [1, 1]} : vector<4x64xf32> to vector<4x32xf32>
    %266 = vector.extract_strided_slice %264 {offsets = [0, 32], sizes = [4, 32], strides = [1, 1]} : vector<4x64xf32> to vector<4x32xf32>
    %267 = vector.extract_strided_slice %253 {offsets = [0, 64], sizes = [4, 32], strides = [1, 1]} : vector<4x96xf32> to vector<4x32xf32>
    %268 = vector.extract_strided_slice %256 {offsets = [0, 64], sizes = [4, 32], strides = [1, 1]} : vector<4x96xf32> to vector<4x32xf32>
    %269 = arith.mulf %265, %268 : vector<4x32xf32>
    %270 = arith.addf %267, %269 : vector<4x32xf32>
    %271 = math.tanh %270 : vector<4x32xf32>
    %cst_54 = arith.constant 1.000000e+00 : f32
    %272 = vector.broadcast %cst_54 : f32 to vector<4x32xf32>
    %273 = arith.subf %272, %266 : vector<4x32xf32>
    %274 = arith.mulf %273, %271 : vector<4x32xf32>
    %275 = arith.mulf %266, %230 : vector<4x32xf32>
    %276 = arith.addf %274, %275 : vector<4x32xf32>
    %cst_55 = arith.constant dense<0.000000e+00> : vector<4x96xf32>
    %277 = tpu.matmul %252, %1, %cst_55 {dimension_numbers = #tpu.dot_dimension_numbers<[1], [0], [0], [1], [0, 0, 1, 1], [], []>} : vector<4x32xf32>, vector<32x96xf32>, vector<4x96xf32> -> vector<4x96xf32>
    %278 = arith.addf %277, %9 : vector<4x96xf32>
    %279 = vector.extract_strided_slice %254 {offsets = [0, 0], sizes = [4, 64], strides = [1, 1]} : vector<4x96xf32> to vector<4x64xf32>
    %280 = vector.extract_strided_slice %278 {offsets = [0, 0], sizes = [4, 64], strides = [1, 1]} : vector<4x96xf32> to vector<4x64xf32>
    %281 = arith.addf %279, %280 : vector<4x64xf32>
    %282 = arith.negf %281 : vector<4x64xf32>
    %283 = math.exp %282 : vector<4x64xf32>
    %cst_56 = arith.constant 1.000000e+00 : f32
    %284 = vector.broadcast %cst_56 : f32 to vector<4x64xf32>
    %285 = arith.addf %284, %283 : vector<4x64xf32>
    %286 = arith.divf %284, %285 : vector<4x64xf32>
    %287 = vector.extract_strided_slice %286 {offsets = [0, 0], sizes = [4, 32], strides = [1, 1]} : vector<4x64xf32> to vector<4x32xf32>
    %288 = vector.extract_strided_slice %286 {offsets = [0, 32], sizes = [4, 32], strides = [1, 1]} : vector<4x64xf32> to vector<4x32xf32>
    %289 = vector.extract_strided_slice %254 {offsets = [0, 64], sizes = [4, 32], strides = [1, 1]} : vector<4x96xf32> to vector<4x32xf32>
    %290 = vector.extract_strided_slice %278 {offsets = [0, 64], sizes = [4, 32], strides = [1, 1]} : vector<4x96xf32> to vector<4x32xf32>
    %291 = arith.mulf %287, %290 : vector<4x32xf32>
    %292 = arith.addf %289, %291 : vector<4x32xf32>
    %293 = math.tanh %292 : vector<4x32xf32>
    %cst_57 = arith.constant 1.000000e+00 : f32
    %294 = vector.broadcast %cst_57 : f32 to vector<4x32xf32>
    %295 = arith.subf %294, %288 : vector<4x32xf32>
    %296 = arith.mulf %295, %293 : vector<4x32xf32>
    %297 = arith.mulf %288, %252 : vector<4x32xf32>
    %298 = arith.addf %296, %297 : vector<4x32xf32>
    %299 = vector.extract_strided_slice %21 {offsets = [24, 0], sizes = [4, 96], strides = [1, 1]} : vector<32x192xf32> to vector<4x96xf32>
    %300 = vector.extract_strided_slice %21 {offsets = [4, 96], sizes = [4, 96], strides = [1, 1]} : vector<32x192xf32> to vector<4x96xf32>
    %cst_58 = arith.constant dense<0.000000e+00> : vector<4x96xf32>
    %301 = tpu.matmul %276, %0, %cst_58 {dimension_numbers = #tpu.dot_dimension_numbers<[1], [0], [0], [1], [0, 0, 1, 1], [], []>} : vector<4x32xf32>, vector<32x96xf32>, vector<4x96xf32> -> vector<4x96xf32>
    %302 = arith.addf %301, %6 : vector<4x96xf32>
    %303 = vector.extract_strided_slice %299 {offsets = [0, 0], sizes = [4, 64], strides = [1, 1]} : vector<4x96xf32> to vector<4x64xf32>
    %304 = vector.extract_strided_slice %302 {offsets = [0, 0], sizes = [4, 64], strides = [1, 1]} : vector<4x96xf32> to vector<4x64xf32>
    %305 = arith.addf %303, %304 : vector<4x64xf32>
    %306 = arith.negf %305 : vector<4x64xf32>
    %307 = math.exp %306 : vector<4x64xf32>
    %cst_59 = arith.constant 1.000000e+00 : f32
    %308 = vector.broadcast %cst_59 : f32 to vector<4x64xf32>
    %309 = arith.addf %308, %307 : vector<4x64xf32>
    %310 = arith.divf %308, %309 : vector<4x64xf32>
    %311 = vector.extract_strided_slice %310 {offsets = [0, 0], sizes = [4, 32], strides = [1, 1]} : vector<4x64xf32> to vector<4x32xf32>
    %312 = vector.extract_strided_slice %310 {offsets = [0, 32], sizes = [4, 32], strides = [1, 1]} : vector<4x64xf32> to vector<4x32xf32>
    %313 = vector.extract_strided_slice %299 {offsets = [0, 64], sizes = [4, 32], strides = [1, 1]} : vector<4x96xf32> to vector<4x32xf32>
    %314 = vector.extract_strided_slice %302 {offsets = [0, 64], sizes = [4, 32], strides = [1, 1]} : vector<4x96xf32> to vector<4x32xf32>
    %315 = arith.mulf %311, %314 : vector<4x32xf32>
    %316 = arith.addf %313, %315 : vector<4x32xf32>
    %317 = math.tanh %316 : vector<4x32xf32>
    %cst_60 = arith.constant 1.000000e+00 : f32
    %318 = vector.broadcast %cst_60 : f32 to vector<4x32xf32>
    %319 = arith.subf %318, %312 : vector<4x32xf32>
    %320 = arith.mulf %319, %317 : vector<4x32xf32>
    %321 = arith.mulf %312, %276 : vector<4x32xf32>
    %322 = arith.addf %320, %321 : vector<4x32xf32>
    %cst_61 = arith.constant dense<0.000000e+00> : vector<4x96xf32>
    %323 = tpu.matmul %298, %1, %cst_61 {dimension_numbers = #tpu.dot_dimension_numbers<[1], [0], [0], [1], [0, 0, 1, 1], [], []>} : vector<4x32xf32>, vector<32x96xf32>, vector<4x96xf32> -> vector<4x96xf32>
    %324 = arith.addf %323, %9 : vector<4x96xf32>
    %325 = vector.extract_strided_slice %300 {offsets = [0, 0], sizes = [4, 64], strides = [1, 1]} : vector<4x96xf32> to vector<4x64xf32>
    %326 = vector.extract_strided_slice %324 {offsets = [0, 0], sizes = [4, 64], strides = [1, 1]} : vector<4x96xf32> to vector<4x64xf32>
    %327 = arith.addf %325, %326 : vector<4x64xf32>
    %328 = arith.negf %327 : vector<4x64xf32>
    %329 = math.exp %328 : vector<4x64xf32>
    %cst_62 = arith.constant 1.000000e+00 : f32
    %330 = vector.broadcast %cst_62 : f32 to vector<4x64xf32>
    %331 = arith.addf %330, %329 : vector<4x64xf32>
    %332 = arith.divf %330, %331 : vector<4x64xf32>
    %333 = vector.extract_strided_slice %332 {offsets = [0, 0], sizes = [4, 32], strides = [1, 1]} : vector<4x64xf32> to vector<4x32xf32>
    %334 = vector.extract_strided_slice %332 {offsets = [0, 32], sizes = [4, 32], strides = [1, 1]} : vector<4x64xf32> to vector<4x32xf32>
    %335 = vector.extract_strided_slice %300 {offsets = [0, 64], sizes = [4, 32], strides = [1, 1]} : vector<4x96xf32> to vector<4x32xf32>
    %336 = vector.extract_strided_slice %324 {offsets = [0, 64], sizes = [4, 32], strides = [1, 1]} : vector<4x96xf32> to vector<4x32xf32>
    %337 = arith.mulf %333, %336 : vector<4x32xf32>
    %338 = arith.addf %335, %337 : vector<4x32xf32>
    %339 = math.tanh %338 : vector<4x32xf32>
    %cst_63 = arith.constant 1.000000e+00 : f32
    %340 = vector.broadcast %cst_63 : f32 to vector<4x32xf32>
    %341 = arith.subf %340, %334 : vector<4x32xf32>
    %342 = arith.mulf %341, %339 : vector<4x32xf32>
    %343 = arith.mulf %334, %298 : vector<4x32xf32>
    %344 = arith.addf %342, %343 : vector<4x32xf32>
    %345 = vector.extract_strided_slice %21 {offsets = [28, 0], sizes = [4, 96], strides = [1, 1]} : vector<32x192xf32> to vector<4x96xf32>
    %346 = vector.extract_strided_slice %21 {offsets = [0, 96], sizes = [4, 96], strides = [1, 1]} : vector<32x192xf32> to vector<4x96xf32>
    %cst_64 = arith.constant dense<0.000000e+00> : vector<4x96xf32>
    %347 = tpu.matmul %322, %0, %cst_64 {dimension_numbers = #tpu.dot_dimension_numbers<[1], [0], [0], [1], [0, 0, 1, 1], [], []>} : vector<4x32xf32>, vector<32x96xf32>, vector<4x96xf32> -> vector<4x96xf32>
    %348 = arith.addf %347, %6 : vector<4x96xf32>
    %349 = vector.extract_strided_slice %345 {offsets = [0, 0], sizes = [4, 64], strides = [1, 1]} : vector<4x96xf32> to vector<4x64xf32>
    %350 = vector.extract_strided_slice %348 {offsets = [0, 0], sizes = [4, 64], strides = [1, 1]} : vector<4x96xf32> to vector<4x64xf32>
    %351 = arith.addf %349, %350 : vector<4x64xf32>
    %352 = arith.negf %351 : vector<4x64xf32>
    %353 = math.exp %352 : vector<4x64xf32>
    %cst_65 = arith.constant 1.000000e+00 : f32
    %354 = vector.broadcast %cst_65 : f32 to vector<4x64xf32>
    %355 = arith.addf %354, %353 : vector<4x64xf32>
    %356 = arith.divf %354, %355 : vector<4x64xf32>
    %357 = vector.extract_strided_slice %356 {offsets = [0, 0], sizes = [4, 32], strides = [1, 1]} : vector<4x64xf32> to vector<4x32xf32>
    %358 = vector.extract_strided_slice %356 {offsets = [0, 32], sizes = [4, 32], strides = [1, 1]} : vector<4x64xf32> to vector<4x32xf32>
    %359 = vector.extract_strided_slice %345 {offsets = [0, 64], sizes = [4, 32], strides = [1, 1]} : vector<4x96xf32> to vector<4x32xf32>
    %360 = vector.extract_strided_slice %348 {offsets = [0, 64], sizes = [4, 32], strides = [1, 1]} : vector<4x96xf32> to vector<4x32xf32>
    %361 = arith.mulf %357, %360 : vector<4x32xf32>
    %362 = arith.addf %359, %361 : vector<4x32xf32>
    %363 = math.tanh %362 : vector<4x32xf32>
    %cst_66 = arith.constant 1.000000e+00 : f32
    %364 = vector.broadcast %cst_66 : f32 to vector<4x32xf32>
    %365 = arith.subf %364, %358 : vector<4x32xf32>
    %366 = arith.mulf %365, %363 : vector<4x32xf32>
    %367 = arith.mulf %358, %322 : vector<4x32xf32>
    %368 = arith.addf %366, %367 : vector<4x32xf32>
    %cst_67 = arith.constant dense<0.000000e+00> : vector<4x96xf32>
    %369 = tpu.matmul %344, %1, %cst_67 {dimension_numbers = #tpu.dot_dimension_numbers<[1], [0], [0], [1], [0, 0, 1, 1], [], []>} : vector<4x32xf32>, vector<32x96xf32>, vector<4x96xf32> -> vector<4x96xf32>
    %370 = arith.addf %369, %9 : vector<4x96xf32>
    %371 = vector.extract_strided_slice %346 {offsets = [0, 0], sizes = [4, 64], strides = [1, 1]} : vector<4x96xf32> to vector<4x64xf32>
    %372 = vector.extract_strided_slice %370 {offsets = [0, 0], sizes = [4, 64], strides = [1, 1]} : vector<4x96xf32> to vector<4x64xf32>
    %373 = arith.addf %371, %372 : vector<4x64xf32>
    %374 = arith.negf %373 : vector<4x64xf32>
    %375 = math.exp %374 : vector<4x64xf32>
    %cst_68 = arith.constant 1.000000e+00 : f32
    %376 = vector.broadcast %cst_68 : f32 to vector<4x64xf32>
    %377 = arith.addf %376, %375 : vector<4x64xf32>
    %378 = arith.divf %376, %377 : vector<4x64xf32>
    %379 = vector.extract_strided_slice %378 {offsets = [0, 0], sizes = [4, 32], strides = [1, 1]} : vector<4x64xf32> to vector<4x32xf32>
    %380 = vector.extract_strided_slice %378 {offsets = [0, 32], sizes = [4, 32], strides = [1, 1]} : vector<4x64xf32> to vector<4x32xf32>
    %381 = vector.extract_strided_slice %346 {offsets = [0, 64], sizes = [4, 32], strides = [1, 1]} : vector<4x96xf32> to vector<4x32xf32>
    %382 = vector.extract_strided_slice %370 {offsets = [0, 64], sizes = [4, 32], strides = [1, 1]} : vector<4x96xf32> to vector<4x32xf32>
    %383 = arith.mulf %379, %382 : vector<4x32xf32>
    %384 = arith.addf %381, %383 : vector<4x32xf32>
    %385 = math.tanh %384 : vector<4x32xf32>
    %cst_69 = arith.constant 1.000000e+00 : f32
    %386 = vector.broadcast %cst_69 : f32 to vector<4x32xf32>
    %387 = arith.subf %386, %380 : vector<4x32xf32>
    %388 = arith.mulf %387, %385 : vector<4x32xf32>
    %389 = arith.mulf %380, %344 : vector<4x32xf32>
    %390 = arith.addf %388, %389 : vector<4x32xf32>
    %391 = tpu.concatenate %46, %390 in 1 : vector<4x32xf32>, vector<4x32xf32> -> vector<4x64xf32>
    %392 = tpu.concatenate %92, %344 in 1 : vector<4x32xf32>, vector<4x32xf32> -> vector<4x64xf32>
    %393 = tpu.concatenate %138, %298 in 1 : vector<4x32xf32>, vector<4x32xf32> -> vector<4x64xf32>
    %394 = tpu.concatenate %184, %252 in 1 : vector<4x32xf32>, vector<4x32xf32> -> vector<4x64xf32>
    %395 = tpu.concatenate %230, %206 in 1 : vector<4x32xf32>, vector<4x32xf32> -> vector<4x64xf32>
    %396 = tpu.concatenate %276, %160 in 1 : vector<4x32xf32>, vector<4x32xf32> -> vector<4x64xf32>
    %397 = tpu.concatenate %322, %114 in 1 : vector<4x32xf32>, vector<4x32xf32> -> vector<4x64xf32>
    %398 = tpu.concatenate %368, %68 in 1 : vector<4x32xf32>, vector<4x32xf32> -> vector<4x64xf32>
    %399 = tpu.concatenate %391, %392, %393, %394, %395, %396, %397, %398 in 0 : vector<4x64xf32>, vector<4x64xf32>, vector<4x64xf32>, vector<4x64xf32>, vector<4x64xf32>, vector<4x64xf32>, vector<4x64xf32>, vector<4x64xf32> -> vector<32x64xf32>
    %c0_70 = arith.constant 0 : index
    %c0_71 = arith.constant 0 : index
    %400 = vector.load %arg7[%c0_70, %c0_71] : memref<64x192xf32, #tpu.memory_space<vmem>>, vector<64x192xf32>
    %cst_72 = arith.constant dense<0.000000e+00> : vector<32x192xf32>
    %401 = tpu.matmul %399, %400, %cst_72 {dimension_numbers = #tpu.dot_dimension_numbers<[1], [0], [0], [1], [0, 0, 1, 1], [], []>} : vector<32x64xf32>, vector<64x192xf32>, vector<32x192xf32> -> vector<32x192xf32>
    %c0_73 = arith.constant 0 : index
    %c0_74 = arith.constant 0 : index
    %402 = vector.load %arg8[%c0_73, %c0_74] : memref<1x192xf32, #tpu.memory_space<vmem>>, vector<1x192xf32>
    %403 = vector.broadcast %402 : vector<1x192xf32> to vector<32x192xf32>
    %404 = arith.addf %401, %403 : vector<32x192xf32>
    %405 = vector.extract_strided_slice %404 {offsets = [0, 0], sizes = [4, 96], strides = [1, 1]} : vector<32x192xf32> to vector<4x96xf32>
    %406 = vector.extract_strided_slice %404 {offsets = [28, 96], sizes = [4, 96], strides = [1, 1]} : vector<32x192xf32> to vector<4x96xf32>
    %cst_75 = arith.constant dense<0.000000e+00> : vector<4x96xf32>
    %407 = tpu.matmul %22, %2, %cst_75 {dimension_numbers = #tpu.dot_dimension_numbers<[1], [0], [0], [1], [0, 0, 1, 1], [], []>} : vector<4x32xf32>, vector<32x96xf32>, vector<4x96xf32> -> vector<4x96xf32>
    %408 = arith.addf %407, %12 : vector<4x96xf32>
    %409 = vector.extract_strided_slice %405 {offsets = [0, 0], sizes = [4, 64], strides = [1, 1]} : vector<4x96xf32> to vector<4x64xf32>
    %410 = vector.extract_strided_slice %408 {offsets = [0, 0], sizes = [4, 64], strides = [1, 1]} : vector<4x96xf32> to vector<4x64xf32>
    %411 = arith.addf %409, %410 : vector<4x64xf32>
    %412 = arith.negf %411 : vector<4x64xf32>
    %413 = math.exp %412 : vector<4x64xf32>
    %cst_76 = arith.constant 1.000000e+00 : f32
    %414 = vector.broadcast %cst_76 : f32 to vector<4x64xf32>
    %415 = arith.addf %414, %413 : vector<4x64xf32>
    %416 = arith.divf %414, %415 : vector<4x64xf32>
    %417 = vector.extract_strided_slice %416 {offsets = [0, 0], sizes = [4, 32], strides = [1, 1]} : vector<4x64xf32> to vector<4x32xf32>
    %418 = vector.extract_strided_slice %416 {offsets = [0, 32], sizes = [4, 32], strides = [1, 1]} : vector<4x64xf32> to vector<4x32xf32>
    %419 = vector.extract_strided_slice %405 {offsets = [0, 64], sizes = [4, 32], strides = [1, 1]} : vector<4x96xf32> to vector<4x32xf32>
    %420 = vector.extract_strided_slice %408 {offsets = [0, 64], sizes = [4, 32], strides = [1, 1]} : vector<4x96xf32> to vector<4x32xf32>
    %421 = arith.mulf %417, %420 : vector<4x32xf32>
    %422 = arith.addf %419, %421 : vector<4x32xf32>
    %423 = math.tanh %422 : vector<4x32xf32>
    %cst_77 = arith.constant 1.000000e+00 : f32
    %424 = vector.broadcast %cst_77 : f32 to vector<4x32xf32>
    %425 = arith.subf %424, %418 : vector<4x32xf32>
    %426 = arith.mulf %425, %423 : vector<4x32xf32>
    %427 = arith.mulf %418, %22 : vector<4x32xf32>
    %428 = arith.addf %426, %427 : vector<4x32xf32>
    %cst_78 = arith.constant dense<0.000000e+00> : vector<4x96xf32>
    %429 = tpu.matmul %22, %3, %cst_78 {dimension_numbers = #tpu.dot_dimension_numbers<[1], [0], [0], [1], [0, 0, 1, 1], [], []>} : vector<4x32xf32>, vector<32x96xf32>, vector<4x96xf32> -> vector<4x96xf32>
    %430 = arith.addf %429, %15 : vector<4x96xf32>
    %431 = vector.extract_strided_slice %406 {offsets = [0, 0], sizes = [4, 64], strides = [1, 1]} : vector<4x96xf32> to vector<4x64xf32>
    %432 = vector.extract_strided_slice %430 {offsets = [0, 0], sizes = [4, 64], strides = [1, 1]} : vector<4x96xf32> to vector<4x64xf32>
    %433 = arith.addf %431, %432 : vector<4x64xf32>
    %434 = arith.negf %433 : vector<4x64xf32>
    %435 = math.exp %434 : vector<4x64xf32>
    %cst_79 = arith.constant 1.000000e+00 : f32
    %436 = vector.broadcast %cst_79 : f32 to vector<4x64xf32>
    %437 = arith.addf %436, %435 : vector<4x64xf32>
    %438 = arith.divf %436, %437 : vector<4x64xf32>
    %439 = vector.extract_strided_slice %438 {offsets = [0, 0], sizes = [4, 32], strides = [1, 1]} : vector<4x64xf32> to vector<4x32xf32>
    %440 = vector.extract_strided_slice %438 {offsets = [0, 32], sizes = [4, 32], strides = [1, 1]} : vector<4x64xf32> to vector<4x32xf32>
    %441 = vector.extract_strided_slice %406 {offsets = [0, 64], sizes = [4, 32], strides = [1, 1]} : vector<4x96xf32> to vector<4x32xf32>
    %442 = vector.extract_strided_slice %430 {offsets = [0, 64], sizes = [4, 32], strides = [1, 1]} : vector<4x96xf32> to vector<4x32xf32>
    %443 = arith.mulf %439, %442 : vector<4x32xf32>
    %444 = arith.addf %441, %443 : vector<4x32xf32>
    %445 = math.tanh %444 : vector<4x32xf32>
    %cst_80 = arith.constant 1.000000e+00 : f32
    %446 = vector.broadcast %cst_80 : f32 to vector<4x32xf32>
    %447 = arith.subf %446, %440 : vector<4x32xf32>
    %448 = arith.mulf %447, %445 : vector<4x32xf32>
    %449 = arith.mulf %440, %22 : vector<4x32xf32>
    %450 = arith.addf %448, %449 : vector<4x32xf32>
    %451 = vector.extract_strided_slice %404 {offsets = [4, 0], sizes = [4, 96], strides = [1, 1]} : vector<32x192xf32> to vector<4x96xf32>
    %452 = vector.extract_strided_slice %404 {offsets = [24, 96], sizes = [4, 96], strides = [1, 1]} : vector<32x192xf32> to vector<4x96xf32>
    %cst_81 = arith.constant dense<0.000000e+00> : vector<4x96xf32>
    %453 = tpu.matmul %428, %2, %cst_81 {dimension_numbers = #tpu.dot_dimension_numbers<[1], [0], [0], [1], [0, 0, 1, 1], [], []>} : vector<4x32xf32>, vector<32x96xf32>, vector<4x96xf32> -> vector<4x96xf32>
    %454 = arith.addf %453, %12 : vector<4x96xf32>
    %455 = vector.extract_strided_slice %451 {offsets = [0, 0], sizes = [4, 64], strides = [1, 1]} : vector<4x96xf32> to vector<4x64xf32>
    %456 = vector.extract_strided_slice %454 {offsets = [0, 0], sizes = [4, 64], strides = [1, 1]} : vector<4x96xf32> to vector<4x64xf32>
    %457 = arith.addf %455, %456 : vector<4x64xf32>
    %458 = arith.negf %457 : vector<4x64xf32>
    %459 = math.exp %458 : vector<4x64xf32>
    %cst_82 = arith.constant 1.000000e+00 : f32
    %460 = vector.broadcast %cst_82 : f32 to vector<4x64xf32>
    %461 = arith.addf %460, %459 : vector<4x64xf32>
    %462 = arith.divf %460, %461 : vector<4x64xf32>
    %463 = vector.extract_strided_slice %462 {offsets = [0, 0], sizes = [4, 32], strides = [1, 1]} : vector<4x64xf32> to vector<4x32xf32>
    %464 = vector.extract_strided_slice %462 {offsets = [0, 32], sizes = [4, 32], strides = [1, 1]} : vector<4x64xf32> to vector<4x32xf32>
    %465 = vector.extract_strided_slice %451 {offsets = [0, 64], sizes = [4, 32], strides = [1, 1]} : vector<4x96xf32> to vector<4x32xf32>
    %466 = vector.extract_strided_slice %454 {offsets = [0, 64], sizes = [4, 32], strides = [1, 1]} : vector<4x96xf32> to vector<4x32xf32>
    %467 = arith.mulf %463, %466 : vector<4x32xf32>
    %468 = arith.addf %465, %467 : vector<4x32xf32>
    %469 = math.tanh %468 : vector<4x32xf32>
    %cst_83 = arith.constant 1.000000e+00 : f32
    %470 = vector.broadcast %cst_83 : f32 to vector<4x32xf32>
    %471 = arith.subf %470, %464 : vector<4x32xf32>
    %472 = arith.mulf %471, %469 : vector<4x32xf32>
    %473 = arith.mulf %464, %428 : vector<4x32xf32>
    %474 = arith.addf %472, %473 : vector<4x32xf32>
    %cst_84 = arith.constant dense<0.000000e+00> : vector<4x96xf32>
    %475 = tpu.matmul %450, %3, %cst_84 {dimension_numbers = #tpu.dot_dimension_numbers<[1], [0], [0], [1], [0, 0, 1, 1], [], []>} : vector<4x32xf32>, vector<32x96xf32>, vector<4x96xf32> -> vector<4x96xf32>
    %476 = arith.addf %475, %15 : vector<4x96xf32>
    %477 = vector.extract_strided_slice %452 {offsets = [0, 0], sizes = [4, 64], strides = [1, 1]} : vector<4x96xf32> to vector<4x64xf32>
    %478 = vector.extract_strided_slice %476 {offsets = [0, 0], sizes = [4, 64], strides = [1, 1]} : vector<4x96xf32> to vector<4x64xf32>
    %479 = arith.addf %477, %478 : vector<4x64xf32>
    %480 = arith.negf %479 : vector<4x64xf32>
    %481 = math.exp %480 : vector<4x64xf32>
    %cst_85 = arith.constant 1.000000e+00 : f32
    %482 = vector.broadcast %cst_85 : f32 to vector<4x64xf32>
    %483 = arith.addf %482, %481 : vector<4x64xf32>
    %484 = arith.divf %482, %483 : vector<4x64xf32>
    %485 = vector.extract_strided_slice %484 {offsets = [0, 0], sizes = [4, 32], strides = [1, 1]} : vector<4x64xf32> to vector<4x32xf32>
    %486 = vector.extract_strided_slice %484 {offsets = [0, 32], sizes = [4, 32], strides = [1, 1]} : vector<4x64xf32> to vector<4x32xf32>
    %487 = vector.extract_strided_slice %452 {offsets = [0, 64], sizes = [4, 32], strides = [1, 1]} : vector<4x96xf32> to vector<4x32xf32>
    %488 = vector.extract_strided_slice %476 {offsets = [0, 64], sizes = [4, 32], strides = [1, 1]} : vector<4x96xf32> to vector<4x32xf32>
    %489 = arith.mulf %485, %488 : vector<4x32xf32>
    %490 = arith.addf %487, %489 : vector<4x32xf32>
    %491 = math.tanh %490 : vector<4x32xf32>
    %cst_86 = arith.constant 1.000000e+00 : f32
    %492 = vector.broadcast %cst_86 : f32 to vector<4x32xf32>
    %493 = arith.subf %492, %486 : vector<4x32xf32>
    %494 = arith.mulf %493, %491 : vector<4x32xf32>
    %495 = arith.mulf %486, %450 : vector<4x32xf32>
    %496 = arith.addf %494, %495 : vector<4x32xf32>
    %497 = vector.extract_strided_slice %404 {offsets = [8, 0], sizes = [4, 96], strides = [1, 1]} : vector<32x192xf32> to vector<4x96xf32>
    %498 = vector.extract_strided_slice %404 {offsets = [20, 96], sizes = [4, 96], strides = [1, 1]} : vector<32x192xf32> to vector<4x96xf32>
    %cst_87 = arith.constant dense<0.000000e+00> : vector<4x96xf32>
    %499 = tpu.matmul %474, %2, %cst_87 {dimension_numbers = #tpu.dot_dimension_numbers<[1], [0], [0], [1], [0, 0, 1, 1], [], []>} : vector<4x32xf32>, vector<32x96xf32>, vector<4x96xf32> -> vector<4x96xf32>
    %500 = arith.addf %499, %12 : vector<4x96xf32>
    %501 = vector.extract_strided_slice %497 {offsets = [0, 0], sizes = [4, 64], strides = [1, 1]} : vector<4x96xf32> to vector<4x64xf32>
    %502 = vector.extract_strided_slice %500 {offsets = [0, 0], sizes = [4, 64], strides = [1, 1]} : vector<4x96xf32> to vector<4x64xf32>
    %503 = arith.addf %501, %502 : vector<4x64xf32>
    %504 = arith.negf %503 : vector<4x64xf32>
    %505 = math.exp %504 : vector<4x64xf32>
    %cst_88 = arith.constant 1.000000e+00 : f32
    %506 = vector.broadcast %cst_88 : f32 to vector<4x64xf32>
    %507 = arith.addf %506, %505 : vector<4x64xf32>
    %508 = arith.divf %506, %507 : vector<4x64xf32>
    %509 = vector.extract_strided_slice %508 {offsets = [0, 0], sizes = [4, 32], strides = [1, 1]} : vector<4x64xf32> to vector<4x32xf32>
    %510 = vector.extract_strided_slice %508 {offsets = [0, 32], sizes = [4, 32], strides = [1, 1]} : vector<4x64xf32> to vector<4x32xf32>
    %511 = vector.extract_strided_slice %497 {offsets = [0, 64], sizes = [4, 32], strides = [1, 1]} : vector<4x96xf32> to vector<4x32xf32>
    %512 = vector.extract_strided_slice %500 {offsets = [0, 64], sizes = [4, 32], strides = [1, 1]} : vector<4x96xf32> to vector<4x32xf32>
    %513 = arith.mulf %509, %512 : vector<4x32xf32>
    %514 = arith.addf %511, %513 : vector<4x32xf32>
    %515 = math.tanh %514 : vector<4x32xf32>
    %cst_89 = arith.constant 1.000000e+00 : f32
    %516 = vector.broadcast %cst_89 : f32 to vector<4x32xf32>
    %517 = arith.subf %516, %510 : vector<4x32xf32>
    %518 = arith.mulf %517, %515 : vector<4x32xf32>
    %519 = arith.mulf %510, %474 : vector<4x32xf32>
    %520 = arith.addf %518, %519 : vector<4x32xf32>
    %cst_90 = arith.constant dense<0.000000e+00> : vector<4x96xf32>
    %521 = tpu.matmul %496, %3, %cst_90 {dimension_numbers = #tpu.dot_dimension_numbers<[1], [0], [0], [1], [0, 0, 1, 1], [], []>} : vector<4x32xf32>, vector<32x96xf32>, vector<4x96xf32> -> vector<4x96xf32>
    %522 = arith.addf %521, %15 : vector<4x96xf32>
    %523 = vector.extract_strided_slice %498 {offsets = [0, 0], sizes = [4, 64], strides = [1, 1]} : vector<4x96xf32> to vector<4x64xf32>
    %524 = vector.extract_strided_slice %522 {offsets = [0, 0], sizes = [4, 64], strides = [1, 1]} : vector<4x96xf32> to vector<4x64xf32>
    %525 = arith.addf %523, %524 : vector<4x64xf32>
    %526 = arith.negf %525 : vector<4x64xf32>
    %527 = math.exp %526 : vector<4x64xf32>
    %cst_91 = arith.constant 1.000000e+00 : f32
    %528 = vector.broadcast %cst_91 : f32 to vector<4x64xf32>
    %529 = arith.addf %528, %527 : vector<4x64xf32>
    %530 = arith.divf %528, %529 : vector<4x64xf32>
    %531 = vector.extract_strided_slice %530 {offsets = [0, 0], sizes = [4, 32], strides = [1, 1]} : vector<4x64xf32> to vector<4x32xf32>
    %532 = vector.extract_strided_slice %530 {offsets = [0, 32], sizes = [4, 32], strides = [1, 1]} : vector<4x64xf32> to vector<4x32xf32>
    %533 = vector.extract_strided_slice %498 {offsets = [0, 64], sizes = [4, 32], strides = [1, 1]} : vector<4x96xf32> to vector<4x32xf32>
    %534 = vector.extract_strided_slice %522 {offsets = [0, 64], sizes = [4, 32], strides = [1, 1]} : vector<4x96xf32> to vector<4x32xf32>
    %535 = arith.mulf %531, %534 : vector<4x32xf32>
    %536 = arith.addf %533, %535 : vector<4x32xf32>
    %537 = math.tanh %536 : vector<4x32xf32>
    %cst_92 = arith.constant 1.000000e+00 : f32
    %538 = vector.broadcast %cst_92 : f32 to vector<4x32xf32>
    %539 = arith.subf %538, %532 : vector<4x32xf32>
    %540 = arith.mulf %539, %537 : vector<4x32xf32>
    %541 = arith.mulf %532, %496 : vector<4x32xf32>
    %542 = arith.addf %540, %541 : vector<4x32xf32>
    %543 = vector.extract_strided_slice %404 {offsets = [12, 0], sizes = [4, 96], strides = [1, 1]} : vector<32x192xf32> to vector<4x96xf32>
    %544 = vector.extract_strided_slice %404 {offsets = [16, 96], sizes = [4, 96], strides = [1, 1]} : vector<32x192xf32> to vector<4x96xf32>
    %cst_93 = arith.constant dense<0.000000e+00> : vector<4x96xf32>
    %545 = tpu.matmul %520, %2, %cst_93 {dimension_numbers = #tpu.dot_dimension_numbers<[1], [0], [0], [1], [0, 0, 1, 1], [], []>} : vector<4x32xf32>, vector<32x96xf32>, vector<4x96xf32> -> vector<4x96xf32>
    %546 = arith.addf %545, %12 : vector<4x96xf32>
    %547 = vector.extract_strided_slice %543 {offsets = [0, 0], sizes = [4, 64], strides = [1, 1]} : vector<4x96xf32> to vector<4x64xf32>
    %548 = vector.extract_strided_slice %546 {offsets = [0, 0], sizes = [4, 64], strides = [1, 1]} : vector<4x96xf32> to vector<4x64xf32>
    %549 = arith.addf %547, %548 : vector<4x64xf32>
    %550 = arith.negf %549 : vector<4x64xf32>
    %551 = math.exp %550 : vector<4x64xf32>
    %cst_94 = arith.constant 1.000000e+00 : f32
    %552 = vector.broadcast %cst_94 : f32 to vector<4x64xf32>
    %553 = arith.addf %552, %551 : vector<4x64xf32>
    %554 = arith.divf %552, %553 : vector<4x64xf32>
    %555 = vector.extract_strided_slice %554 {offsets = [0, 0], sizes = [4, 32], strides = [1, 1]} : vector<4x64xf32> to vector<4x32xf32>
    %556 = vector.extract_strided_slice %554 {offsets = [0, 32], sizes = [4, 32], strides = [1, 1]} : vector<4x64xf32> to vector<4x32xf32>
    %557 = vector.extract_strided_slice %543 {offsets = [0, 64], sizes = [4, 32], strides = [1, 1]} : vector<4x96xf32> to vector<4x32xf32>
    %558 = vector.extract_strided_slice %546 {offsets = [0, 64], sizes = [4, 32], strides = [1, 1]} : vector<4x96xf32> to vector<4x32xf32>
    %559 = arith.mulf %555, %558 : vector<4x32xf32>
    %560 = arith.addf %557, %559 : vector<4x32xf32>
    %561 = math.tanh %560 : vector<4x32xf32>
    %cst_95 = arith.constant 1.000000e+00 : f32
    %562 = vector.broadcast %cst_95 : f32 to vector<4x32xf32>
    %563 = arith.subf %562, %556 : vector<4x32xf32>
    %564 = arith.mulf %563, %561 : vector<4x32xf32>
    %565 = arith.mulf %556, %520 : vector<4x32xf32>
    %566 = arith.addf %564, %565 : vector<4x32xf32>
    %cst_96 = arith.constant dense<0.000000e+00> : vector<4x96xf32>
    %567 = tpu.matmul %542, %3, %cst_96 {dimension_numbers = #tpu.dot_dimension_numbers<[1], [0], [0], [1], [0, 0, 1, 1], [], []>} : vector<4x32xf32>, vector<32x96xf32>, vector<4x96xf32> -> vector<4x96xf32>
    %568 = arith.addf %567, %15 : vector<4x96xf32>
    %569 = vector.extract_strided_slice %544 {offsets = [0, 0], sizes = [4, 64], strides = [1, 1]} : vector<4x96xf32> to vector<4x64xf32>
    %570 = vector.extract_strided_slice %568 {offsets = [0, 0], sizes = [4, 64], strides = [1, 1]} : vector<4x96xf32> to vector<4x64xf32>
    %571 = arith.addf %569, %570 : vector<4x64xf32>
    %572 = arith.negf %571 : vector<4x64xf32>
    %573 = math.exp %572 : vector<4x64xf32>
    %cst_97 = arith.constant 1.000000e+00 : f32
    %574 = vector.broadcast %cst_97 : f32 to vector<4x64xf32>
    %575 = arith.addf %574, %573 : vector<4x64xf32>
    %576 = arith.divf %574, %575 : vector<4x64xf32>
    %577 = vector.extract_strided_slice %576 {offsets = [0, 0], sizes = [4, 32], strides = [1, 1]} : vector<4x64xf32> to vector<4x32xf32>
    %578 = vector.extract_strided_slice %576 {offsets = [0, 32], sizes = [4, 32], strides = [1, 1]} : vector<4x64xf32> to vector<4x32xf32>
    %579 = vector.extract_strided_slice %544 {offsets = [0, 64], sizes = [4, 32], strides = [1, 1]} : vector<4x96xf32> to vector<4x32xf32>
    %580 = vector.extract_strided_slice %568 {offsets = [0, 64], sizes = [4, 32], strides = [1, 1]} : vector<4x96xf32> to vector<4x32xf32>
    %581 = arith.mulf %577, %580 : vector<4x32xf32>
    %582 = arith.addf %579, %581 : vector<4x32xf32>
    %583 = math.tanh %582 : vector<4x32xf32>
    %cst_98 = arith.constant 1.000000e+00 : f32
    %584 = vector.broadcast %cst_98 : f32 to vector<4x32xf32>
    %585 = arith.subf %584, %578 : vector<4x32xf32>
    %586 = arith.mulf %585, %583 : vector<4x32xf32>
    %587 = arith.mulf %578, %542 : vector<4x32xf32>
    %588 = arith.addf %586, %587 : vector<4x32xf32>
    %589 = vector.extract_strided_slice %404 {offsets = [16, 0], sizes = [4, 96], strides = [1, 1]} : vector<32x192xf32> to vector<4x96xf32>
    %590 = vector.extract_strided_slice %404 {offsets = [12, 96], sizes = [4, 96], strides = [1, 1]} : vector<32x192xf32> to vector<4x96xf32>
    %cst_99 = arith.constant dense<0.000000e+00> : vector<4x96xf32>
    %591 = tpu.matmul %566, %2, %cst_99 {dimension_numbers = #tpu.dot_dimension_numbers<[1], [0], [0], [1], [0, 0, 1, 1], [], []>} : vector<4x32xf32>, vector<32x96xf32>, vector<4x96xf32> -> vector<4x96xf32>
    %592 = arith.addf %591, %12 : vector<4x96xf32>
    %593 = vector.extract_strided_slice %589 {offsets = [0, 0], sizes = [4, 64], strides = [1, 1]} : vector<4x96xf32> to vector<4x64xf32>
    %594 = vector.extract_strided_slice %592 {offsets = [0, 0], sizes = [4, 64], strides = [1, 1]} : vector<4x96xf32> to vector<4x64xf32>
    %595 = arith.addf %593, %594 : vector<4x64xf32>
    %596 = arith.negf %595 : vector<4x64xf32>
    %597 = math.exp %596 : vector<4x64xf32>
    %cst_100 = arith.constant 1.000000e+00 : f32
    %598 = vector.broadcast %cst_100 : f32 to vector<4x64xf32>
    %599 = arith.addf %598, %597 : vector<4x64xf32>
    %600 = arith.divf %598, %599 : vector<4x64xf32>
    %601 = vector.extract_strided_slice %600 {offsets = [0, 0], sizes = [4, 32], strides = [1, 1]} : vector<4x64xf32> to vector<4x32xf32>
    %602 = vector.extract_strided_slice %600 {offsets = [0, 32], sizes = [4, 32], strides = [1, 1]} : vector<4x64xf32> to vector<4x32xf32>
    %603 = vector.extract_strided_slice %589 {offsets = [0, 64], sizes = [4, 32], strides = [1, 1]} : vector<4x96xf32> to vector<4x32xf32>
    %604 = vector.extract_strided_slice %592 {offsets = [0, 64], sizes = [4, 32], strides = [1, 1]} : vector<4x96xf32> to vector<4x32xf32>
    %605 = arith.mulf %601, %604 : vector<4x32xf32>
    %606 = arith.addf %603, %605 : vector<4x32xf32>
    %607 = math.tanh %606 : vector<4x32xf32>
    %cst_101 = arith.constant 1.000000e+00 : f32
    %608 = vector.broadcast %cst_101 : f32 to vector<4x32xf32>
    %609 = arith.subf %608, %602 : vector<4x32xf32>
    %610 = arith.mulf %609, %607 : vector<4x32xf32>
    %611 = arith.mulf %602, %566 : vector<4x32xf32>
    %612 = arith.addf %610, %611 : vector<4x32xf32>
    %cst_102 = arith.constant dense<0.000000e+00> : vector<4x96xf32>
    %613 = tpu.matmul %588, %3, %cst_102 {dimension_numbers = #tpu.dot_dimension_numbers<[1], [0], [0], [1], [0, 0, 1, 1], [], []>} : vector<4x32xf32>, vector<32x96xf32>, vector<4x96xf32> -> vector<4x96xf32>
    %614 = arith.addf %613, %15 : vector<4x96xf32>
    %615 = vector.extract_strided_slice %590 {offsets = [0, 0], sizes = [4, 64], strides = [1, 1]} : vector<4x96xf32> to vector<4x64xf32>
    %616 = vector.extract_strided_slice %614 {offsets = [0, 0], sizes = [4, 64], strides = [1, 1]} : vector<4x96xf32> to vector<4x64xf32>
    %617 = arith.addf %615, %616 : vector<4x64xf32>
    %618 = arith.negf %617 : vector<4x64xf32>
    %619 = math.exp %618 : vector<4x64xf32>
    %cst_103 = arith.constant 1.000000e+00 : f32
    %620 = vector.broadcast %cst_103 : f32 to vector<4x64xf32>
    %621 = arith.addf %620, %619 : vector<4x64xf32>
    %622 = arith.divf %620, %621 : vector<4x64xf32>
    %623 = vector.extract_strided_slice %622 {offsets = [0, 0], sizes = [4, 32], strides = [1, 1]} : vector<4x64xf32> to vector<4x32xf32>
    %624 = vector.extract_strided_slice %622 {offsets = [0, 32], sizes = [4, 32], strides = [1, 1]} : vector<4x64xf32> to vector<4x32xf32>
    %625 = vector.extract_strided_slice %590 {offsets = [0, 64], sizes = [4, 32], strides = [1, 1]} : vector<4x96xf32> to vector<4x32xf32>
    %626 = vector.extract_strided_slice %614 {offsets = [0, 64], sizes = [4, 32], strides = [1, 1]} : vector<4x96xf32> to vector<4x32xf32>
    %627 = arith.mulf %623, %626 : vector<4x32xf32>
    %628 = arith.addf %625, %627 : vector<4x32xf32>
    %629 = math.tanh %628 : vector<4x32xf32>
    %cst_104 = arith.constant 1.000000e+00 : f32
    %630 = vector.broadcast %cst_104 : f32 to vector<4x32xf32>
    %631 = arith.subf %630, %624 : vector<4x32xf32>
    %632 = arith.mulf %631, %629 : vector<4x32xf32>
    %633 = arith.mulf %624, %588 : vector<4x32xf32>
    %634 = arith.addf %632, %633 : vector<4x32xf32>
    %635 = vector.extract_strided_slice %404 {offsets = [20, 0], sizes = [4, 96], strides = [1, 1]} : vector<32x192xf32> to vector<4x96xf32>
    %636 = vector.extract_strided_slice %404 {offsets = [8, 96], sizes = [4, 96], strides = [1, 1]} : vector<32x192xf32> to vector<4x96xf32>
    %cst_105 = arith.constant dense<0.000000e+00> : vector<4x96xf32>
    %637 = tpu.matmul %612, %2, %cst_105 {dimension_numbers = #tpu.dot_dimension_numbers<[1], [0], [0], [1], [0, 0, 1, 1], [], []>} : vector<4x32xf32>, vector<32x96xf32>, vector<4x96xf32> -> vector<4x96xf32>
    %638 = arith.addf %637, %12 : vector<4x96xf32>
    %639 = vector.extract_strided_slice %635 {offsets = [0, 0], sizes = [4, 64], strides = [1, 1]} : vector<4x96xf32> to vector<4x64xf32>
    %640 = vector.extract_strided_slice %638 {offsets = [0, 0], sizes = [4, 64], strides = [1, 1]} : vector<4x96xf32> to vector<4x64xf32>
    %641 = arith.addf %639, %640 : vector<4x64xf32>
    %642 = arith.negf %641 : vector<4x64xf32>
    %643 = math.exp %642 : vector<4x64xf32>
    %cst_106 = arith.constant 1.000000e+00 : f32
    %644 = vector.broadcast %cst_106 : f32 to vector<4x64xf32>
    %645 = arith.addf %644, %643 : vector<4x64xf32>
    %646 = arith.divf %644, %645 : vector<4x64xf32>
    %647 = vector.extract_strided_slice %646 {offsets = [0, 0], sizes = [4, 32], strides = [1, 1]} : vector<4x64xf32> to vector<4x32xf32>
    %648 = vector.extract_strided_slice %646 {offsets = [0, 32], sizes = [4, 32], strides = [1, 1]} : vector<4x64xf32> to vector<4x32xf32>
    %649 = vector.extract_strided_slice %635 {offsets = [0, 64], sizes = [4, 32], strides = [1, 1]} : vector<4x96xf32> to vector<4x32xf32>
    %650 = vector.extract_strided_slice %638 {offsets = [0, 64], sizes = [4, 32], strides = [1, 1]} : vector<4x96xf32> to vector<4x32xf32>
    %651 = arith.mulf %647, %650 : vector<4x32xf32>
    %652 = arith.addf %649, %651 : vector<4x32xf32>
    %653 = math.tanh %652 : vector<4x32xf32>
    %cst_107 = arith.constant 1.000000e+00 : f32
    %654 = vector.broadcast %cst_107 : f32 to vector<4x32xf32>
    %655 = arith.subf %654, %648 : vector<4x32xf32>
    %656 = arith.mulf %655, %653 : vector<4x32xf32>
    %657 = arith.mulf %648, %612 : vector<4x32xf32>
    %658 = arith.addf %656, %657 : vector<4x32xf32>
    %cst_108 = arith.constant dense<0.000000e+00> : vector<4x96xf32>
    %659 = tpu.matmul %634, %3, %cst_108 {dimension_numbers = #tpu.dot_dimension_numbers<[1], [0], [0], [1], [0, 0, 1, 1], [], []>} : vector<4x32xf32>, vector<32x96xf32>, vector<4x96xf32> -> vector<4x96xf32>
    %660 = arith.addf %659, %15 : vector<4x96xf32>
    %661 = vector.extract_strided_slice %636 {offsets = [0, 0], sizes = [4, 64], strides = [1, 1]} : vector<4x96xf32> to vector<4x64xf32>
    %662 = vector.extract_strided_slice %660 {offsets = [0, 0], sizes = [4, 64], strides = [1, 1]} : vector<4x96xf32> to vector<4x64xf32>
    %663 = arith.addf %661, %662 : vector<4x64xf32>
    %664 = arith.negf %663 : vector<4x64xf32>
    %665 = math.exp %664 : vector<4x64xf32>
    %cst_109 = arith.constant 1.000000e+00 : f32
    %666 = vector.broadcast %cst_109 : f32 to vector<4x64xf32>
    %667 = arith.addf %666, %665 : vector<4x64xf32>
    %668 = arith.divf %666, %667 : vector<4x64xf32>
    %669 = vector.extract_strided_slice %668 {offsets = [0, 0], sizes = [4, 32], strides = [1, 1]} : vector<4x64xf32> to vector<4x32xf32>
    %670 = vector.extract_strided_slice %668 {offsets = [0, 32], sizes = [4, 32], strides = [1, 1]} : vector<4x64xf32> to vector<4x32xf32>
    %671 = vector.extract_strided_slice %636 {offsets = [0, 64], sizes = [4, 32], strides = [1, 1]} : vector<4x96xf32> to vector<4x32xf32>
    %672 = vector.extract_strided_slice %660 {offsets = [0, 64], sizes = [4, 32], strides = [1, 1]} : vector<4x96xf32> to vector<4x32xf32>
    %673 = arith.mulf %669, %672 : vector<4x32xf32>
    %674 = arith.addf %671, %673 : vector<4x32xf32>
    %675 = math.tanh %674 : vector<4x32xf32>
    %cst_110 = arith.constant 1.000000e+00 : f32
    %676 = vector.broadcast %cst_110 : f32 to vector<4x32xf32>
    %677 = arith.subf %676, %670 : vector<4x32xf32>
    %678 = arith.mulf %677, %675 : vector<4x32xf32>
    %679 = arith.mulf %670, %634 : vector<4x32xf32>
    %680 = arith.addf %678, %679 : vector<4x32xf32>
    %681 = vector.extract_strided_slice %404 {offsets = [24, 0], sizes = [4, 96], strides = [1, 1]} : vector<32x192xf32> to vector<4x96xf32>
    %682 = vector.extract_strided_slice %404 {offsets = [4, 96], sizes = [4, 96], strides = [1, 1]} : vector<32x192xf32> to vector<4x96xf32>
    %cst_111 = arith.constant dense<0.000000e+00> : vector<4x96xf32>
    %683 = tpu.matmul %658, %2, %cst_111 {dimension_numbers = #tpu.dot_dimension_numbers<[1], [0], [0], [1], [0, 0, 1, 1], [], []>} : vector<4x32xf32>, vector<32x96xf32>, vector<4x96xf32> -> vector<4x96xf32>
    %684 = arith.addf %683, %12 : vector<4x96xf32>
    %685 = vector.extract_strided_slice %681 {offsets = [0, 0], sizes = [4, 64], strides = [1, 1]} : vector<4x96xf32> to vector<4x64xf32>
    %686 = vector.extract_strided_slice %684 {offsets = [0, 0], sizes = [4, 64], strides = [1, 1]} : vector<4x96xf32> to vector<4x64xf32>
    %687 = arith.addf %685, %686 : vector<4x64xf32>
    %688 = arith.negf %687 : vector<4x64xf32>
    %689 = math.exp %688 : vector<4x64xf32>
    %cst_112 = arith.constant 1.000000e+00 : f32
    %690 = vector.broadcast %cst_112 : f32 to vector<4x64xf32>
    %691 = arith.addf %690, %689 : vector<4x64xf32>
    %692 = arith.divf %690, %691 : vector<4x64xf32>
    %693 = vector.extract_strided_slice %692 {offsets = [0, 0], sizes = [4, 32], strides = [1, 1]} : vector<4x64xf32> to vector<4x32xf32>
    %694 = vector.extract_strided_slice %692 {offsets = [0, 32], sizes = [4, 32], strides = [1, 1]} : vector<4x64xf32> to vector<4x32xf32>
    %695 = vector.extract_strided_slice %681 {offsets = [0, 64], sizes = [4, 32], strides = [1, 1]} : vector<4x96xf32> to vector<4x32xf32>
    %696 = vector.extract_strided_slice %684 {offsets = [0, 64], sizes = [4, 32], strides = [1, 1]} : vector<4x96xf32> to vector<4x32xf32>
    %697 = arith.mulf %693, %696 : vector<4x32xf32>
    %698 = arith.addf %695, %697 : vector<4x32xf32>
    %699 = math.tanh %698 : vector<4x32xf32>
    %cst_113 = arith.constant 1.000000e+00 : f32
    %700 = vector.broadcast %cst_113 : f32 to vector<4x32xf32>
    %701 = arith.subf %700, %694 : vector<4x32xf32>
    %702 = arith.mulf %701, %699 : vector<4x32xf32>
    %703 = arith.mulf %694, %658 : vector<4x32xf32>
    %704 = arith.addf %702, %703 : vector<4x32xf32>
    %cst_114 = arith.constant dense<0.000000e+00> : vector<4x96xf32>
    %705 = tpu.matmul %680, %3, %cst_114 {dimension_numbers = #tpu.dot_dimension_numbers<[1], [0], [0], [1], [0, 0, 1, 1], [], []>} : vector<4x32xf32>, vector<32x96xf32>, vector<4x96xf32> -> vector<4x96xf32>
    %706 = arith.addf %705, %15 : vector<4x96xf32>
    %707 = vector.extract_strided_slice %682 {offsets = [0, 0], sizes = [4, 64], strides = [1, 1]} : vector<4x96xf32> to vector<4x64xf32>
    %708 = vector.extract_strided_slice %706 {offsets = [0, 0], sizes = [4, 64], strides = [1, 1]} : vector<4x96xf32> to vector<4x64xf32>
    %709 = arith.addf %707, %708 : vector<4x64xf32>
    %710 = arith.negf %709 : vector<4x64xf32>
    %711 = math.exp %710 : vector<4x64xf32>
    %cst_115 = arith.constant 1.000000e+00 : f32
    %712 = vector.broadcast %cst_115 : f32 to vector<4x64xf32>
    %713 = arith.addf %712, %711 : vector<4x64xf32>
    %714 = arith.divf %712, %713 : vector<4x64xf32>
    %715 = vector.extract_strided_slice %714 {offsets = [0, 0], sizes = [4, 32], strides = [1, 1]} : vector<4x64xf32> to vector<4x32xf32>
    %716 = vector.extract_strided_slice %714 {offsets = [0, 32], sizes = [4, 32], strides = [1, 1]} : vector<4x64xf32> to vector<4x32xf32>
    %717 = vector.extract_strided_slice %682 {offsets = [0, 64], sizes = [4, 32], strides = [1, 1]} : vector<4x96xf32> to vector<4x32xf32>
    %718 = vector.extract_strided_slice %706 {offsets = [0, 64], sizes = [4, 32], strides = [1, 1]} : vector<4x96xf32> to vector<4x32xf32>
    %719 = arith.mulf %715, %718 : vector<4x32xf32>
    %720 = arith.addf %717, %719 : vector<4x32xf32>
    %721 = math.tanh %720 : vector<4x32xf32>
    %cst_116 = arith.constant 1.000000e+00 : f32
    %722 = vector.broadcast %cst_116 : f32 to vector<4x32xf32>
    %723 = arith.subf %722, %716 : vector<4x32xf32>
    %724 = arith.mulf %723, %721 : vector<4x32xf32>
    %725 = arith.mulf %716, %680 : vector<4x32xf32>
    %726 = arith.addf %724, %725 : vector<4x32xf32>
    %727 = vector.extract_strided_slice %404 {offsets = [28, 0], sizes = [4, 96], strides = [1, 1]} : vector<32x192xf32> to vector<4x96xf32>
    %728 = vector.extract_strided_slice %404 {offsets = [0, 96], sizes = [4, 96], strides = [1, 1]} : vector<32x192xf32> to vector<4x96xf32>
    %cst_117 = arith.constant dense<0.000000e+00> : vector<4x96xf32>
    %729 = tpu.matmul %704, %2, %cst_117 {dimension_numbers = #tpu.dot_dimension_numbers<[1], [0], [0], [1], [0, 0, 1, 1], [], []>} : vector<4x32xf32>, vector<32x96xf32>, vector<4x96xf32> -> vector<4x96xf32>
    %730 = arith.addf %729, %12 : vector<4x96xf32>
    %731 = vector.extract_strided_slice %727 {offsets = [0, 0], sizes = [4, 64], strides = [1, 1]} : vector<4x96xf32> to vector<4x64xf32>
    %732 = vector.extract_strided_slice %730 {offsets = [0, 0], sizes = [4, 64], strides = [1, 1]} : vector<4x96xf32> to vector<4x64xf32>
    %733 = arith.addf %731, %732 : vector<4x64xf32>
    %734 = arith.negf %733 : vector<4x64xf32>
    %735 = math.exp %734 : vector<4x64xf32>
    %cst_118 = arith.constant 1.000000e+00 : f32
    %736 = vector.broadcast %cst_118 : f32 to vector<4x64xf32>
    %737 = arith.addf %736, %735 : vector<4x64xf32>
    %738 = arith.divf %736, %737 : vector<4x64xf32>
    %739 = vector.extract_strided_slice %738 {offsets = [0, 0], sizes = [4, 32], strides = [1, 1]} : vector<4x64xf32> to vector<4x32xf32>
    %740 = vector.extract_strided_slice %738 {offsets = [0, 32], sizes = [4, 32], strides = [1, 1]} : vector<4x64xf32> to vector<4x32xf32>
    %741 = vector.extract_strided_slice %727 {offsets = [0, 64], sizes = [4, 32], strides = [1, 1]} : vector<4x96xf32> to vector<4x32xf32>
    %742 = vector.extract_strided_slice %730 {offsets = [0, 64], sizes = [4, 32], strides = [1, 1]} : vector<4x96xf32> to vector<4x32xf32>
    %743 = arith.mulf %739, %742 : vector<4x32xf32>
    %744 = arith.addf %741, %743 : vector<4x32xf32>
    %745 = math.tanh %744 : vector<4x32xf32>
    %cst_119 = arith.constant 1.000000e+00 : f32
    %746 = vector.broadcast %cst_119 : f32 to vector<4x32xf32>
    %747 = arith.subf %746, %740 : vector<4x32xf32>
    %748 = arith.mulf %747, %745 : vector<4x32xf32>
    %749 = arith.mulf %740, %704 : vector<4x32xf32>
    %750 = arith.addf %748, %749 : vector<4x32xf32>
    %cst_120 = arith.constant dense<0.000000e+00> : vector<4x96xf32>
    %751 = tpu.matmul %726, %3, %cst_120 {dimension_numbers = #tpu.dot_dimension_numbers<[1], [0], [0], [1], [0, 0, 1, 1], [], []>} : vector<4x32xf32>, vector<32x96xf32>, vector<4x96xf32> -> vector<4x96xf32>
    %752 = arith.addf %751, %15 : vector<4x96xf32>
    %753 = vector.extract_strided_slice %728 {offsets = [0, 0], sizes = [4, 64], strides = [1, 1]} : vector<4x96xf32> to vector<4x64xf32>
    %754 = vector.extract_strided_slice %752 {offsets = [0, 0], sizes = [4, 64], strides = [1, 1]} : vector<4x96xf32> to vector<4x64xf32>
    %755 = arith.addf %753, %754 : vector<4x64xf32>
    %756 = arith.negf %755 : vector<4x64xf32>
    %757 = math.exp %756 : vector<4x64xf32>
    %cst_121 = arith.constant 1.000000e+00 : f32
    %758 = vector.broadcast %cst_121 : f32 to vector<4x64xf32>
    %759 = arith.addf %758, %757 : vector<4x64xf32>
    %760 = arith.divf %758, %759 : vector<4x64xf32>
    %761 = vector.extract_strided_slice %760 {offsets = [0, 0], sizes = [4, 32], strides = [1, 1]} : vector<4x64xf32> to vector<4x32xf32>
    %762 = vector.extract_strided_slice %760 {offsets = [0, 32], sizes = [4, 32], strides = [1, 1]} : vector<4x64xf32> to vector<4x32xf32>
    %763 = vector.extract_strided_slice %728 {offsets = [0, 64], sizes = [4, 32], strides = [1, 1]} : vector<4x96xf32> to vector<4x32xf32>
    %764 = vector.extract_strided_slice %752 {offsets = [0, 64], sizes = [4, 32], strides = [1, 1]} : vector<4x96xf32> to vector<4x32xf32>
    %765 = arith.mulf %761, %764 : vector<4x32xf32>
    %766 = arith.addf %763, %765 : vector<4x32xf32>
    %767 = math.tanh %766 : vector<4x32xf32>
    %cst_122 = arith.constant 1.000000e+00 : f32
    %768 = vector.broadcast %cst_122 : f32 to vector<4x32xf32>
    %769 = arith.subf %768, %762 : vector<4x32xf32>
    %770 = arith.mulf %769, %767 : vector<4x32xf32>
    %771 = arith.mulf %762, %726 : vector<4x32xf32>
    %772 = arith.addf %770, %771 : vector<4x32xf32>
    %773 = tpu.concatenate %368, %390, %750, %772 in 1 : vector<4x32xf32>, vector<4x32xf32>, vector<4x32xf32>, vector<4x32xf32> -> vector<4x128xf32>
    %c0_123 = arith.constant 0 : index
    %c0_124 = arith.constant 0 : index
    %774 = vector.load %arg13[%c0_123, %c0_124] : memref<128x32xf32, #tpu.memory_space<vmem>>, vector<128x32xf32>
    %cst_125 = arith.constant dense<0.000000e+00> : vector<4x32xf32>
    %775 = tpu.matmul %773, %774, %cst_125 {dimension_numbers = #tpu.dot_dimension_numbers<[1], [0], [0], [1], [0, 0, 1, 1], [], []>} : vector<4x128xf32>, vector<128x32xf32>, vector<4x32xf32> -> vector<4x32xf32>
    %c0_126 = arith.constant 0 : index
    %c0_127 = arith.constant 0 : index
    %776 = vector.load %arg14[%c0_126, %c0_127] : memref<1x32xf32, #tpu.memory_space<vmem>>, vector<1x32xf32>
    %777 = vector.broadcast %776 : vector<1x32xf32> to vector<4x32xf32>
    %778 = arith.addf %775, %777 : vector<4x32xf32>
    %779 = math.tanh %778 : vector<4x32xf32>
    %c0_128 = arith.constant 0 : index
    %c0_129 = arith.constant 0 : index
    %780 = vector.load %arg15[%c0_128, %c0_129] : memref<32x14xf32, #tpu.memory_space<vmem>>, vector<32x14xf32>
    %cst_130 = arith.constant dense<0.000000e+00> : vector<4x14xf32>
    %781 = tpu.matmul %779, %780, %cst_130 {dimension_numbers = #tpu.dot_dimension_numbers<[1], [0], [0], [1], [0, 0, 1, 1], [], []>} : vector<4x32xf32>, vector<32x14xf32>, vector<4x14xf32> -> vector<4x14xf32>
    %c0_131 = arith.constant 0 : index
    %c0_132 = arith.constant 0 : index
    %782 = vector.load %arg16[%c0_131, %c0_132] : memref<1x14xf32, #tpu.memory_space<vmem>>, vector<1x14xf32>
    %783 = vector.broadcast %782 : vector<1x14xf32> to vector<4x14xf32>
    %784 = arith.addf %781, %783 : vector<4x14xf32>
    %cst_133 = arith.constant dense<0xFF800000> : vector<4xf32>
    %785 = vector.multi_reduction <maximumf>, %784, %cst_133 [1] : vector<4x14xf32> to vector<4xf32>
    %cst_134 = arith.constant 0xFF800000 : f32
    %786 = vector.broadcast %cst_134 : f32 to vector<4xf32>
    %787 = arith.maximumf %786, %785 : vector<4xf32>
    %788 = vector.shape_cast %787 : vector<4xf32> to vector<4x1xf32>
    %789 = vector.broadcast %788 : vector<4x1xf32> to vector<4x14xf32>
    %790 = arith.subf %784, %789 : vector<4x14xf32>
    %791 = math.exp %790 : vector<4x14xf32>
    %cst_135 = arith.constant dense<0.000000e+00> : vector<4xf32>
    %792 = vector.multi_reduction <add>, %791, %cst_135 [1] : vector<4x14xf32> to vector<4xf32>
    %793 = vector.shape_cast %792 : vector<4xf32> to vector<4x1xf32>
    %794 = vector.broadcast %793 : vector<4x1xf32> to vector<4x14xf32>
    %795 = arith.divf %791, %794 : vector<4x14xf32>
    %c0_136 = arith.constant 0 : index
    %c0_137 = arith.constant 0 : index
    %796 = vector.load %arg17[%c0_136, %c0_137] : memref<4x14xf32, #tpu.memory_space<vmem>>, vector<4x14xf32>
    tpu.vector_store %arg17[%c0_136, %c0_137], %795 {strides = array<i32>} : memref<4x14xf32, #tpu.memory_space<vmem>>, vector<4x14xf32>,
    return
  }
}

</mosaic_0001>

<llo_original>
// kernel: tpu_custom_call.1
$region0: #{tpu_custom_call.1}
  #allocation0 [shape = 'u32[]', space=smem, size = 0x4, offset = 0x4, fixed_abs, tag = 'smem constant byte address 0x4 - core index']
  #allocation1 [shape = 'u32[144,128]{1,0:T(1,128)}', space=vmem, size = 0x12000, scoped, tag = 'internal scratch']
  %s0 = inlined_call_operand.hbm [shape: f32[32,32], index: 0, kind: input, shape index: {}]
  %s1 = inlined_call_operand.vmem [shape: f32[32,192], index: 1, kind: input, shape index: {}]
  %s2 = inlined_call_operand.vmem [shape: f32[1,192], index: 2, kind: input, shape index: {}]
  %s3 = inlined_call_operand.hbm [shape: f32[32,96], index: 3, kind: input, shape index: {}]
  %s4 = inlined_call_operand.hbm [shape: f32[1,96], index: 4, kind: input, shape index: {}]
  %s5 = inlined_call_operand.hbm [shape: f32[32,96], index: 5, kind: input, shape index: {}]
  %s6 = inlined_call_operand.hbm [shape: f32[1,96], index: 6, kind: input, shape index: {}]
  %s7 = inlined_call_operand.vmem [shape: f32[64,192], index: 7, kind: input, shape index: {}]
  %s8 = inlined_call_operand.hbm [shape: f32[1,192], index: 8, kind: input, shape index: {}]
  %s9 = inlined_call_operand.hbm [shape: f32[32,96], index: 9, kind: input, shape index: {}]
  %s10 = inlined_call_operand.vmem [shape: f32[1,96], index: 10, kind: input, shape index: {}]
  %s11 = inlined_call_operand.hbm [shape: f32[32,96], index: 11, kind: input, shape index: {}]
  %s12 = inlined_call_operand.vmem [shape: f32[1,96], index: 12, kind: input, shape index: {}]
  %s13 = inlined_call_operand.vmem [shape: f32[128,32], index: 13, kind: input, shape index: {}]
  %s14 = inlined_call_operand.vmem [shape: f32[1,32], index: 14, kind: input, shape index: {}]
  %s15 = inlined_call_operand.vmem [shape: f32[32,14], index: 15, kind: input, shape index: {}]
  %s16 = inlined_call_operand.vmem [shape: f32[1,14], index: 16, kind: input, shape index: {}]
  %s17 = inlined_call_operand.hbm [shape: f32[4,14], index: 17, kind: output, shape index: {}]
  %s18 = sld [smem:[#allocation0]]
  $region110: #{tpu_custom_call.1} parent=0
    _
  %s20 = ssub.s32 1, %s18
  %s21 = scalar_select 0, %s20, %s18
  $region1: #{tpu_custom_call.1} parent=0
    #allocation2 [shape = 'u8[16384]{0}', space=vmem, size = 0x4000, scoped, tag = 'input window, operand 0, single buffered']
    #allocation3 [shape = 's32[1]{0}', space=sflag, size = 0x4, scoped, tag = 'scoped memory for tpu_custom_call.1']
    #allocation4 [shape = 's32[1]{0}', space=sflag, size = 0x4, scoped, tag = 'scoped memory for tpu_custom_call.1']
    #allocation5 [shape = 'u8[16384]{0}', space=vmem, size = 0x4000, scoped, tag = 'input window, operand 3, single buffered']
    #allocation6 [shape = 's32[1]{0}', space=sflag, size = 0x4, scoped, tag = 'scoped memory for tpu_custom_call.1']
    #allocation7 [shape = 'u8[512]{0}', space=vmem, size = 0x400, scoped, tag = 'input window, operand 4, single buffered']
    #allocation8 [shape = 'u8[16384]{0}', space=vmem, size = 0x4000, scoped, tag = 'input window, operand 5, single buffered']
    #allocation9 [shape = 's32[1]{0}', space=sflag, size = 0x4, scoped, tag = 'scoped memory for tpu_custom_call.1']
    #allocation10 [shape = 'u8[512]{0}', space=vmem, size = 0x400, scoped, tag = 'input window, operand 6, single buffered']
    #allocation11 [shape = 'u8[1024]{0}', space=vmem, size = 0x400, scoped, tag = 'input window, operand 8, single buffered']
    #allocation12 [shape = 's32[1]{0}', space=sflag, size = 0x4, scoped, tag = 'scoped memory for tpu_custom_call.1']
    #allocation13 [shape = 'u8[16384]{0}', space=vmem, size = 0x4000, scoped, tag = 'input window, operand 9, single buffered']
    #allocation14 [shape = 'u8[16384]{0}', space=vmem, size = 0x4000, scoped, tag = 'input window, operand 11, single buffered']
    #allocation15 [shape = 's32[1]{0}', space=sflag, size = 0x4, scoped, tag = 'scoped memory for tpu_custom_call.1']
    #allocation16 [shape = 'u8[2048]{0}', space=vmem, size = 0x800, scoped, tag = 'output window, operand 0, single buffered']
    %22 = vsyncpa [#allocation3], 0
    %23 = vsyncpa [#allocation6], 0
    %24 = vsyncpa [#allocation9], 0
    %25 = vsyncpa [#allocation12], 0
    %26 = vsyncpa [#allocation15], 0
    %27 = vsyncpa [#allocation4], 0
    // Predicated region
    $region2: #{tpu_custom_call.1} parent=1 // pred_check
      _
    $region3: #{tpu_custom_call.1} parent=1 // pred_check_branch
      %29 = sbr.rel (0) target = $region5
    $region4: #{tpu_custom_call.1} parent=1 // pred_region
      %s31 = ssub.s32 512, 512
      %32 = vsyncadd [#allocation3], %s31
      %s33 = sshll.u32 [#allocation2], 4
      %s34 = int_to_ptr.vmem [resolvable:$true] %s33
      %39 = dma.hbm_to_vmem [thread:$0]  %s0, 512, %s34, [#allocation3], 128, 128, 8
    $region5: #{tpu_custom_call.1} parent=1 // pred_fallthru
      _
    // Predicated region
    $region6: #{tpu_custom_call.1} parent=1 // pred_check
      _
    $region7: #{tpu_custom_call.1} parent=1 // pred_check_branch
      %41 = sbr.rel (0) target = $region9
    $region8: #{tpu_custom_call.1} parent=1 // pred_region
      _
    $region9: #{tpu_custom_call.1} parent=1 // pred_fallthru
      _
    // Predicated region
    $region10: #{tpu_custom_call.1} parent=1 // pred_check
      _
    $region11: #{tpu_custom_call.1} parent=1 // pred_check_branch
      %43 = sbr.rel (0) target = $region13
    $region12: #{tpu_custom_call.1} parent=1 // pred_region
      _
    $region13: #{tpu_custom_call.1} parent=1 // pred_fallthru
      _
    // Predicated region
    $region14: #{tpu_custom_call.1} parent=1 // pred_check
      _
    $region15: #{tpu_custom_call.1} parent=1 // pred_check_branch
      %45 = sbr.rel (0) target = $region17
    $region16: #{tpu_custom_call.1} parent=1 // pred_region
      %s47 = ssub.s32 512, 512
      %48 = vsyncadd [#allocation6], %s47
      %s49 = sshll.u32 [#allocation5], 4
      %s50 = int_to_ptr.vmem [resolvable:$true] %s49
      %55 = dma.hbm_to_vmem [thread:$0]  %s3, 512, %s50, [#allocation6], 128, 128, 8
    $region17: #{tpu_custom_call.1} parent=1 // pred_fallthru
      _
    // Predicated region
    $region18: #{tpu_custom_call.1} parent=1 // pred_check
      _
    $region19: #{tpu_custom_call.1} parent=1 // pred_check_branch
      %57 = sbr.rel (0) target = $region21
    $region20: #{tpu_custom_call.1} parent=1 // pred_region
      %s59 = ssub.s32 16, 16
      %60 = vsyncadd [#allocation6], %s59
      %s62 = sshll.u32 [#allocation7], 4
      %s63 = int_to_ptr.vmem [resolvable:$true] %s62
      %65 = dma.hbm_to_vmem [thread:$0]  %s4, 16, %s63, [#allocation6]
    $region21: #{tpu_custom_call.1} parent=1 // pred_fallthru
      _
    // Predicated region
    $region22: #{tpu_custom_call.1} parent=1 // pred_check
      _
    $region23: #{tpu_custom_call.1} parent=1 // pred_check_branch
      %67 = sbr.rel (0) target = $region25
    $region24: #{tpu_custom_call.1} parent=1 // pred_region
      %s69 = ssub.s32 512, 512
      %70 = vsyncadd [#allocation9], %s69
      %s71 = sshll.u32 [#allocation8], 4
      %s72 = int_to_ptr.vmem [resolvable:$true] %s71
      %77 = dma.hbm_to_vmem [thread:$0]  %s5, 512, %s72, [#allocation9], 128, 128, 8
    $region25: #{tpu_custom_call.1} parent=1 // pred_fallthru
      _
    // Predicated region
    $region26: #{tpu_custom_call.1} parent=1 // pred_check
      _
    $region27: #{tpu_custom_call.1} parent=1 // pred_check_branch
      %79 = sbr.rel (0) target = $region29
    $region28: #{tpu_custom_call.1} parent=1 // pred_region
      %s81 = ssub.s32 16, 16
      %82 = vsyncadd [#allocation9], %s81
      %s84 = sshll.u32 [#allocation10], 4
      %s85 = int_to_ptr.vmem [resolvable:$true] %s84
      %87 = dma.hbm_to_vmem [thread:$0]  %s6, 16, %s85, [#allocation9]
    $region29: #{tpu_custom_call.1} parent=1 // pred_fallthru
      _
    // Predicated region
    $region30: #{tpu_custom_call.1} parent=1 // pred_check
      _
    $region31: #{tpu_custom_call.1} parent=1 // pred_check_branch
      %89 = sbr.rel (0) target = $region33
    $region32: #{tpu_custom_call.1} parent=1 // pred_region
      _
    $region33: #{tpu_custom_call.1} parent=1 // pred_fallthru
      _
    // Predicated region
    $region34: #{tpu_custom_call.1} parent=1 // pred_check
      _
    $region35: #{tpu_custom_call.1} parent=1 // pred_check_branch
      %91 = sbr.rel (0) target = $region37
    $region36: #{tpu_custom_call.1} parent=1 // pred_region
      %s93 = ssub.s32 32, 32
      %94 = vsyncadd [#allocation12], %s93
      %s96 = sshll.u32 [#allocation11], 4
      %s97 = int_to_ptr.vmem [resolvable:$true] %s96
      %99 = dma.hbm_to_vmem [thread:$0]  %s8, 32, %s97, [#allocation12]
    $region37: #{tpu_custom_call.1} parent=1 // pred_fallthru
      _
    // Predicated region
    $region38: #{tpu_custom_call.1} parent=1 // pred_check
      _
    $region39: #{tpu_custom_call.1} parent=1 // pred_check_branch
      %101 = sbr.rel (0) target = $region41
    $region40: #{tpu_custom_call.1} parent=1 // pred_region
      %s103 = ssub.s32 512, 512
      %104 = vsyncadd [#allocation12], %s103
      %s105 = sshll.u32 [#allocation13], 4
      %s106 = int_to_ptr.vmem [resolvable:$true] %s105
      %111 = dma.hbm_to_vmem [thread:$0]  %s9, 512, %s106, [#allocation12], 128, 128, 8
    $region41: #{tpu_custom_call.1} parent=1 // pred_fallthru
      _
    // Predicated region
    $region42: #{tpu_custom_call.1} parent=1 // pred_check
      _
    $region43: #{tpu_custom_call.1} parent=1 // pred_check_branch
      %113 = sbr.rel (0) target = $region45
    $region44: #{tpu_custom_call.1} parent=1 // pred_region
      _
    $region45: #{tpu_custom_call.1} parent=1 // pred_fallthru
      _
    // Predicated region
    $region46: #{tpu_custom_call.1} parent=1 // pred_check
      _
    $region47: #{tpu_custom_call.1} parent=1 // pred_check_branch
      %115 = sbr.rel (0) target = $region49
    $region48: #{tpu_custom_call.1} parent=1 // pred_region
      %s117 = ssub.s32 512, 512
      %118 = vsyncadd [#allocation15], %s117
      %s119 = sshll.u32 [#allocation14], 4
      %s120 = int_to_ptr.vmem [resolvable:$true] %s119
      %125 = dma.hbm_to_vmem [thread:$0]  %s11, 512, %s120, [#allocation15], 128, 128, 8
    $region49: #{tpu_custom_call.1} parent=1 // pred_fallthru
      _
    // Predicated region
    $region50: #{tpu_custom_call.1} parent=1 // pred_check
      _
    $region51: #{tpu_custom_call.1} parent=1 // pred_check_branch
      %127 = sbr.rel (0) target = $region53
    $region52: #{tpu_custom_call.1} parent=1 // pred_region
      _
    $region53: #{tpu_custom_call.1} parent=1 // pred_fallthru
      _
    // Predicated region
    $region54: #{tpu_custom_call.1} parent=1 // pred_check
      _
    $region55: #{tpu_custom_call.1} parent=1 // pred_check_branch
      %129 = sbr.rel (0) target = $region57
    $region56: #{tpu_custom_call.1} parent=1 // pred_region
      _
    $region57: #{tpu_custom_call.1} parent=1 // pred_fallthru
      _
    // Predicated region
    $region58: #{tpu_custom_call.1} parent=1 // pred_check
      _
    $region59: #{tpu_custom_call.1} parent=1 // pred_check_branch
      %131 = sbr.rel (0) target = $region61
    $region60: #{tpu_custom_call.1} parent=1 // pred_region
      _
    $region61: #{tpu_custom_call.1} parent=1 // pred_fallthru
      _
    // Predicated region
    $region62: #{tpu_custom_call.1} parent=1 // pred_check
      _
    $region63: #{tpu_custom_call.1} parent=1 // pred_check_branch
      %133 = sbr.rel (0) target = $region65
    $region64: #{tpu_custom_call.1} parent=1 // pred_region
      _
    $region65: #{tpu_custom_call.1} parent=1 // pred_fallthru
      _
    // Predicated region
    $region66: #{tpu_custom_call.1} parent=1 // pred_check
      _
    $region67: #{tpu_custom_call.1} parent=1 // pred_check_branch
      %135 = sbr.rel (0) target = $region69
    $region68: #{tpu_custom_call.1} parent=1 // pred_region
      _
    $region69: #{tpu_custom_call.1} parent=1 // pred_fallthru
      _
    // Predicated region
    $region70: #{tpu_custom_call.1} parent=1 // pred_check
      _
    $region71: #{tpu_custom_call.1} parent=1 // pred_check_branch
      %137 = sbr.rel (0) target = $region73
    $region72: #{tpu_custom_call.1} parent=1 // pred_region
      %138 = dma.done [#allocation3], 512
    $region73: #{tpu_custom_call.1} parent=1 // pred_fallthru
      _
    // Predicated region
    $region74: #{tpu_custom_call.1} parent=1 // pred_check
      _
    $region75: #{tpu_custom_call.1} parent=1 // pred_check_branch
      %140 = sbr.rel (0) target = $region77
    $region76: #{tpu_custom_call.1} parent=1 // pred_region
      %141 = dma.done [#allocation6], 512
    $region77: #{tpu_custom_call.1} parent=1 // pred_fallthru
      _
    // Predicated region
    $region78: #{tpu_custom_call.1} parent=1 // pred_check
      _
    $region79: #{tpu_custom_call.1} parent=1 // pred_check_branch
      %143 = sbr.rel (0) target = $region81
    $region80: #{tpu_custom_call.1} parent=1 // pred_region
      %144 = dma.done [#allocation6], 16
    $region81: #{tpu_custom_call.1} parent=1 // pred_fallthru
      _
    // Predicated region
    $region82: #{tpu_custom_call.1} parent=1 // pred_check
      _
    $region83: #{tpu_custom_call.1} parent=1 // pred_check_branch
      %146 = sbr.rel (0) target = $region85
    $region84: #{tpu_custom_call.1} parent=1 // pred_region
      %147 = dma.done [#allocation9], 512
    $region85: #{tpu_custom_call.1} parent=1 // pred_fallthru
      _
    // Predicated region
    $region86: #{tpu_custom_call.1} parent=1 // pred_check
      _
    $region87: #{tpu_custom_call.1} parent=1 // pred_check_branch
      %149 = sbr.rel (0) target = $region89
    $region88: #{tpu_custom_call.1} parent=1 // pred_region
      %150 = dma.done [#allocation9], 16
    $region89: #{tpu_custom_call.1} parent=1 // pred_fallthru
      _
    // Predicated region
    $region90: #{tpu_custom_call.1} parent=1 // pred_check
      _
    $region91: #{tpu_custom_call.1} parent=1 // pred_check_branch
      %152 = sbr.rel (0) target = $region93
    $region92: #{tpu_custom_call.1} parent=1 // pred_region
      %153 = dma.done [#allocation12], 32
    $region93: #{tpu_custom_call.1} parent=1 // pred_fallthru
      _
    // Predicated region
    $region94: #{tpu_custom_call.1} parent=1 // pred_check
      _
    $region95: #{tpu_custom_call.1} parent=1 // pred_check_branch
      %155 = sbr.rel (0) target = $region97
    $region96: #{tpu_custom_call.1} parent=1 // pred_region
      %156 = dma.done [#allocation12], 512
    $region97: #{tpu_custom_call.1} parent=1 // pred_fallthru
      _
    // Predicated region
    $region98: #{tpu_custom_call.1} parent=1 // pred_check
      _
    $region99: #{tpu_custom_call.1} parent=1 // pred_check_branch
      %158 = sbr.rel (0) target = $region101
    $region100: #{tpu_custom_call.1} parent=1 // pred_region
      %159 = dma.done [#allocation15], 512
    $region101: #{tpu_custom_call.1} parent=1 // pred_fallthru
      _
    %v160 = vld [vmem:[#allocation5] sm:$0xff]
    %v161 = vld [vmem:[#allocation5 + $0x8] sm:$0xff]
    %v162 = vld [vmem:[#allocation5 + $0x10] sm:$0xff]
    %v163 = vld [vmem:[#allocation5 + $0x18] sm:$0xff]
    %v164 = vld [vmem:[#allocation8] sm:$0xff]
    %v165 = vld [vmem:[#allocation8 + $0x8] sm:$0xff]
    %v166 = vld [vmem:[#allocation8 + $0x10] sm:$0xff]
    %v167 = vld [vmem:[#allocation8 + $0x18] sm:$0xff]
    %v168 = vld [vmem:[#allocation13] sm:$0xff]
    %v169 = vld [vmem:[#allocation13 + $0x8] sm:$0xff]
    %v170 = vld [vmem:[#allocation13 + $0x10] sm:$0xff]
    %v171 = vld [vmem:[#allocation13 + $0x18] sm:$0xff]
    %v172 = vld [vmem:[#allocation14] sm:$0xff]
    %v173 = vld [vmem:[#allocation14 + $0x8] sm:$0xff]
    %v174 = vld [vmem:[#allocation14 + $0x10] sm:$0xff]
    %v175 = vld [vmem:[#allocation14 + $0x18] sm:$0xff]
    %v176 = vld [vmem:[#allocation7] sm:$0x1]
    %v178 = vlaneseq
    %v179 = vshrl.u32 %v178, 7
    %v180 = vsub.s32 0, %v179
    %v181 = vrot.slane %v176, %v180
    %v183 = vld [vmem:[#allocation10] sm:$0x1]
    %v185 = vlaneseq
    %v186 = vshrl.u32 %v185, 7
    %v187 = vsub.s32 0, %v186
    %v188 = vrot.slane %v183, %v187
    %v190 = vld [vmem:[%s10] sm:$0x1]
    %v192 = vlaneseq
    %v193 = vshrl.u32 %v192, 7
    %v194 = vsub.s32 0, %v193
    %v195 = vrot.slane %v190, %v194
    %v197 = vld [vmem:[%s12] sm:$0x1]
    %v199 = vlaneseq
    %v200 = vshrl.u32 %v199, 7
    %v201 = vsub.s32 0, %v200
    %v202 = vrot.slane %v197, %v201
    %v204 = vld [vmem:[#allocation2] sm:$0xff]
    %v205 = vld [vmem:[#allocation2 + $0x8] sm:$0xff]
    %v206 = vld [vmem:[#allocation2 + $0x10] sm:$0xff]
    %v207 = vld [vmem:[#allocation2 + $0x18] sm:$0xff]
    %v208 = vld [vmem:[%s1] sm:$0xff]
    %v209 = vld [vmem:[%s1 + $0x8] sm:$0xff]
    %v210 = vld [vmem:[%s1 + $0x10] sm:$0xff]
    %v211 = vld [vmem:[%s1 + $0x18] sm:$0xff]
    %v212 = vld [vmem:[%s1 + $0x20] sm:$0xff]
    %v213 = vld [vmem:[%s1 + $0x28] sm:$0xff]
    %v214 = vld [vmem:[%s1 + $0x30] sm:$0xff]
    %v215 = vld [vmem:[%s1 + $0x38] sm:$0xff]
    %v216 = vld [vmem:[%s2] sm:$0x3]
    %v218 = vlaneseq
    %v219 = vshrl.u32 %v218, 7
    %v220 = vsub.s32 0, %v219
    %v221 = vrot.slane %v216, %v220
    %v222 = vlaneseq
    %v223 = vshrl.u32 %v222, 7
    %v224 = vsub.s32 1, %v223
    %v225 = vrot.slane %v216, %v224
    %vm228 = vcmask 261120
    %v230 = vsel %vm228, %v204, 0
    %v233 = vsel %vm228, %v205, 0
    %v236 = vsel %vm228, %v206, 0
    %v239 = vsel %vm228, %v207, 0
    %241 = vmatprep.subr.mxu0 %v209
    %242 = vmatpush1.msra.mxu0 %v208
    %243 = vmatprep.subr.mxu0 %v211
    %244 = vmatpush1.msra.mxu0 %v210
    %245 = vmatprep.subr.mxu0 %v213
    %246 = vmatpush1.msra.mxu0 %v212
    %247 = vmatprep.subr.mxu0 %v215
    %248 = vmatpush1.msra.mxu0 %v214
    %249 = vmatprep.subr.mxu0 0.0
    %250 = vmatpush1.msra.mxu0 0.0
    %251 = vmatprep.subr.mxu0 0.0
    %252 = vmatpush1.msra.mxu0 0.0
    %253 = vmatprep.subr.mxu0 0.0
    %254 = vmatpush1.msra.mxu0 0.0
    %255 = vmatprep.subr.mxu0 0.0
    %256 = vmatpush1.msra.mxu0 0.0
    %257 = vmatprep.subr.mxu0 0.0
    %258 = vmatpush1.msra.mxu0 0.0
    %259 = vmatprep.subr.mxu0 0.0
    %260 = vmatpush1.msra.mxu0 0.0
    %261 = vmatprep.subr.mxu0 0.0
    %262 = vmatpush1.msra.mxu0 0.0
    %263 = vmatprep.subr.mxu0 0.0
    %264 = vmatpush1.msra.mxu0 0.0
    %265 = vmatprep.subr.mxu0 0.0
    %266 = vmatpush1.msra.mxu0 0.0
    %267 = vmatprep.subr.mxu0 0.0
    %268 = vmatpush1.msra.mxu0 0.0
    %269 = vmatprep.subr.mxu0 0.0
    %270 = vmatpush1.msra.mxu0 0.0
    %271 = vmatprep.subr.mxu0 0.0
    %272 = vmatpush1.msra.mxu0 0.0
    %273 = vmatprep.subr.mxu0 0.0
    %274 = vmatpush1.msra.mxu0 0.0
    %275 = vmatprep.subr.mxu0 0.0
    %276 = vmatpush1.msra.mxu0 0.0
    %277 = vmatprep.subr.mxu0 0.0
    %278 = vmatpush1.msra.mxu0 0.0
    %279 = vmatprep.subr.mxu0 0.0
    %280 = vmatpush1.msra.mxu0 0.0
    %281 = vmatprep.subr.mxu0 0.0
    %282 = vmatpush1.msra.mxu0 0.0
    %283 = vmatprep.subr.mxu0 0.0
    %284 = vmatpush1.msra.mxu0 0.0
    %285 = vmatprep.subr.mxu0 0.0
    %286 = vmatpush1.msra.mxu0 0.0
    %287 = vmatprep.subr.mxu0 0.0
    %288 = vmatpush1.msra.mxu0 0.0
    %289 = vmatprep.subr.mxu0 0.0
    %290 = vmatpush1.msra.mxu0 0.0
    %291 = vmatprep.subr.mxu0 0.0
    %292 = vmatpush1.msra.mxu0 0.0
    %293 = vmatprep.subr.mxu0 0.0
    %294 = vmatpush1.msra.mxu0 0.0
    %295 = vmatprep.subr.mxu0 0.0
    %296 = vmatpush1.msra.mxu0 0.0
    %297 = vmatprep.subr.mxu0 0.0
    %298 = vmatpush1.msra.mxu0 0.0
    %299 = vmatprep.subr.mxu0 0.0
    %300 = vmatpush1.msra.mxu0 0.0
    %301 = vmatprep.subr.mxu0 0.0
    %302 = vmatpush1.msra.mxu0 0.0
    %303 = vmatprep.subr.mxu0 0.0
    %304 = vmatpush1.msra.mxu0 0.0
    %305 = vmatprep.mubr.f32.mxu0 0.0
    %306 = vmatmul.mubr.f32.gmra.mrb[0].mxu0 %v230
    %v307 = vpop.f32.mrb[0].mxu0
    %v308 = vadd.f32 %v221, %v307
    %v309 = vpop.f32.mrb[0].mxu0
    %v310 = vadd.f32 %v225, %v309
    %311 = vmatprep.mubr.f32.mxu0 0.0
    %312 = vmatmul.mubr.f32.gmra.mrb[0].mxu0 %v233
    %v313 = vpop.f32.mrb[0].mxu0
    %v314 = vadd.f32 %v221, %v313
    %v315 = vpop.f32.mrb[0].mxu0
    %v316 = vadd.f32 %v225, %v315
    %317 = vmatprep.mubr.f32.mxu0 0.0
    %318 = vmatmul.mubr.f32.gmra.mrb[0].mxu0 %v236
    %v319 = vpop.f32.mrb[0].mxu0
    %v320 = vadd.f32 %v221, %v319
    %v321 = vpop.f32.mrb[0].mxu0
    %v322 = vadd.f32 %v225, %v321
    %323 = vmatprep.mubr.f32.mxu0 0.0
    %324 = vmatmul.mubr.f32.gmra.mrb[0].mxu0 %v239
    %v325 = vpop.f32.mrb[0].mxu0
    %v326 = vadd.f32 %v221, %v325
    %v327 = vpop.f32.mrb[0].mxu0
    %v328 = vadd.f32 %v225, %v327
    %329 = vdwg.mxu0
    %v331 = vsel %vm228, 0.0, 0
    %333 = vmatprep.subr.mxu0 0.0
    %334 = vmatpush1.msra.mxu0 %v160
    %335 = vmatprep.subr.mxu0 0.0
    %336 = vmatpush1.msra.mxu0 %v161
    %337 = vmatprep.subr.mxu0 0.0
    %338 = vmatpush1.msra.mxu0 %v162
    %339 = vmatprep.subr.mxu0 0.0
    %340 = vmatpush1.msra.mxu0 %v163
    %341 = vmatprep.subr.mxu0 0.0
    %342 = vmatpush1.msra.mxu0 0.0
    %343 = vmatprep.subr.mxu0 0.0
    %344 = vmatpush1.msra.mxu0 0.0
    %345 = vmatprep.subr.mxu0 0.0
    %346 = vmatpush1.msra.mxu0 0.0
    %347 = vmatprep.subr.mxu0 0.0
    %348 = vmatpush1.msra.mxu0 0.0
    %349 = vmatprep.subr.mxu0 0.0
    %350 = vmatpush1.msra.mxu0 0.0
    %351 = vmatprep.subr.mxu0 0.0
    %352 = vmatpush1.msra.mxu0 0.0
    %353 = vmatprep.subr.mxu0 0.0
    %354 = vmatpush1.msra.mxu0 0.0
    %355 = vmatprep.subr.mxu0 0.0
    %356 = vmatpush1.msra.mxu0 0.0
    %357 = vmatprep.subr.mxu0 0.0
    %358 = vmatpush1.msra.mxu0 0.0
    %359 = vmatprep.subr.mxu0 0.0
    %360 = vmatpush1.msra.mxu0 0.0
    %361 = vmatprep.subr.mxu0 0.0
    %362 = vmatpush1.msra.mxu0 0.0
    %363 = vmatprep.subr.mxu0 0.0
    %364 = vmatpush1.msra.mxu0 0.0
    %365 = vmatprep.subr.mxu0 0.0
    %366 = vmatpush1.msra.mxu0 0.0
    %367 = vmatprep.subr.mxu0 0.0
    %368 = vmatpush1.msra.mxu0 0.0
    %369 = vmatprep.subr.mxu0 0.0
    %370 = vmatpush1.msra.mxu0 0.0
    %371 = vmatprep.subr.mxu0 0.0
    %372 = vmatpush1.msra.mxu0 0.0
    %373 = vmatprep.subr.mxu0 0.0
    %374 = vmatpush1.msra.mxu0 0.0
    %375 = vmatprep.subr.mxu0 0.0
    %376 = vmatpush1.msra.mxu0 0.0
    %377 = vmatprep.subr.mxu0 0.0
    %378 = vmatpush1.msra.mxu0 0.0
    %379 = vmatprep.subr.mxu0 0.0
    %380 = vmatpush1.msra.mxu0 0.0
    %381 = vmatprep.subr.mxu0 0.0
    %382 = vmatpush1.msra.mxu0 0.0
    %383 = vmatprep.subr.mxu0 0.0
    %384 = vmatpush1.msra.mxu0 0.0
    %385 = vmatprep.subr.mxu0 0.0
    %386 = vmatpush1.msra.mxu0 0.0
    %387 = vmatprep.subr.mxu0 0.0
    %388 = vmatpush1.msra.mxu0 0.0
    %389 = vmatprep.subr.mxu0 0.0
    %390 = vmatpush1.msra.mxu0 0.0
    %391 = vmatprep.subr.mxu0 0.0
    %392 = vmatpush1.msra.mxu0 0.0
    %393 = vmatprep.subr.mxu0 0.0
    %394 = vmatpush1.msra.mxu0 0.0
    %395 = vmatprep.subr.mxu0 0.0
    %396 = vmatpush1.msra.mxu0 0.0
    %397 = vmatprep.mubr.f32.mxu0 0.0
    %398 = vmatmul.mubr.f32.gmra.mrb[0].mxu0 %v331
    %v399 = vpop.f32.mrb[0].mxu0
    %v400 = vadd.f32 %v181, %v399
    %v401 = vpop.f32.mrb[0].mxu0
    %402 = vdwg.mxu0
    %v403 = vadd.f32 %v308, %v400
    %v404 = vxor.u32 %v403, 2147483648
    %v405 = vmul.f32 %v404, 1.442695
    %v406 = vpow.pop %v405
    %v407 = vadd.f32 %v406, 1.0
    %v408 = vrcp.pop %v407
    %v409 = vmul.f32 1.0, %v408
    %411 = vrot.lane.b32.xlu0 %v400, 64
    %v412 = vpop.permute.xlu0 %411
    %v414 = vmul.f32 %v409, %v412
    %416 = vrot.lane.b32.xlu0 %v414, 64
    %v417 = vpop.permute.xlu0 %416
    %v419 = vadd.f32 %v308, %v417
    %v420 = vtanh.pop %v419
    %v421 = vsub.f32 1.0, %v409
    %423 = vrot.lane.b32.xlu0 %v420, 96
    %v424 = vpop.permute.xlu0 %423
    %v426 = vmul.f32 %v421, %v424
    %v427 = vmul.f32 %v409, 0.0
    %v428 = vadd.f32 %v426, %v427
    %429 = vmatprep.subr.mxu0 0.0
    %430 = vmatpush1.msra.mxu0 %v164
    %431 = vmatprep.subr.mxu0 0.0
    %432 = vmatpush1.msra.mxu0 %v165
    %433 = vmatprep.subr.mxu0 0.0
    %434 = vmatpush1.msra.mxu0 %v166
    %435 = vmatprep.subr.mxu0 0.0
    %436 = vmatpush1.msra.mxu0 %v167
    %437 = vmatprep.subr.mxu0 0.0
    %438 = vmatpush1.msra.mxu0 0.0
    %439 = vmatprep.subr.mxu0 0.0
    %440 = vmatpush1.msra.mxu0 0.0
    %441 = vmatprep.subr.mxu0 0.0
    %442 = vmatpush1.msra.mxu0 0.0
    %443 = vmatprep.subr.mxu0 0.0
    %444 = vmatpush1.msra.mxu0 0.0
    %445 = vmatprep.subr.mxu0 0.0
    %446 = vmatpush1.msra.mxu0 0.0
    %447 = vmatprep.subr.mxu0 0.0
    %448 = vmatpush1.msra.mxu0 0.0
    %449 = vmatprep.subr.mxu0 0.0
    %450 = vmatpush1.msra.mxu0 0.0
    %451 = vmatprep.subr.mxu0 0.0
    %452 = vmatpush1.msra.mxu0 0.0
    %453 = vmatprep.subr.mxu0 0.0
    %454 = vmatpush1.msra.mxu0 0.0
    %455 = vmatprep.subr.mxu0 0.0
    %456 = vmatpush1.msra.mxu0 0.0
    %457 = vmatprep.subr.mxu0 0.0
    %458 = vmatpush1.msra.mxu0 0.0
    %459 = vmatprep.subr.mxu0 0.0
    %460 = vmatpush1.msra.mxu0 0.0
    %461 = vmatprep.subr.mxu0 0.0
    %462 = vmatpush1.msra.mxu0 0.0
    %463 = vmatprep.subr.mxu0 0.0
    %464 = vmatpush1.msra.mxu0 0.0
    %465 = vmatprep.subr.mxu0 0.0
    %466 = vmatpush1.msra.mxu0 0.0
    %467 = vmatprep.subr.mxu0 0.0
    %468 = vmatpush1.msra.mxu0 0.0
    %469 = vmatprep.subr.mxu0 0.0
    %470 = vmatpush1.msra.mxu0 0.0
    %471 = vmatprep.subr.mxu0 0.0
    %472 = vmatpush1.msra.mxu0 0.0
    %473 = vmatprep.subr.mxu0 0.0
    %474 = vmatpush1.msra.mxu0 0.0
    %475 = vmatprep.subr.mxu0 0.0
    %476 = vmatpush1.msra.mxu0 0.0
    %477 = vmatprep.subr.mxu0 0.0
    %478 = vmatpush1.msra.mxu0 0.0
    %479 = vmatprep.subr.mxu0 0.0
    %480 = vmatpush1.msra.mxu0 0.0
    %481 = vmatprep.subr.mxu0 0.0
    %482 = vmatpush1.msra.mxu0 0.0
    %483 = vmatprep.subr.mxu0 0.0
    %484 = vmatpush1.msra.mxu0 0.0
    %485 = vmatprep.subr.mxu0 0.0
    %486 = vmatpush1.msra.mxu0 0.0
    %487 = vmatprep.subr.mxu0 0.0
    %488 = vmatpush1.msra.mxu0 0.0
    %489 = vmatprep.subr.mxu0 0.0
    %490 = vmatpush1.msra.mxu0 0.0
    %491 = vmatprep.subr.mxu0 0.0
    %492 = vmatpush1.msra.mxu0 0.0
    %493 = vmatprep.mubr.f32.mxu0 0.0
    %494 = vmatmul.mubr.f32.gmra.mrb[0].mxu0 %v331
    %v495 = vpop.f32.mrb[0].mxu0
    %v496 = vadd.f32 %v188, %v495
    %v497 = vpop.f32.mrb[0].mxu0
    %498 = vdwg.mxu0
    %v500 = vrot.slane %v496, 4
    %501 = vrot.lane.b32.xlu0 %v500, 96
    %v502 = vpop.permute.xlu0 %501
    %v504 = vadd.f32 %v326, %v502
    %v505 = vadd.f32 %v328, %v502
    %v506 = vxor.u32 %v504, 2147483648
    %v507 = vxor.u32 %v505, 2147483648
    %v508 = vmul.f32 %v506, 1.442695
    %v509 = vpow.pop %v508
    %v510 = vmul.f32 %v507, 1.442695
    %v511 = vpow.pop %v510
    %v512 = vadd.f32 %v509, 1.0
    %v513 = vadd.f32 %v511, 1.0
    %v514 = vrcp.pop %v512
    %v515 = vmul.f32 1.0, %v514
    %v516 = vrcp.pop %v513
    %v517 = vmul.f32 1.0, %v516
    %518 = vrot.lane.b32.xlu0 %v500, 32
    %v519 = vpop.permute.xlu0 %518
    %v521 = vmul.f32 %v515, %v519
    %523 = vrot.lane.b32.xlu0 %v521, 64
    %v524 = vpop.permute.xlu0 %523
    %v526 = vadd.f32 %v328, %v524
    %v527 = vtanh.pop %v526
    %v528 = vsub.f32 1.0, %v517
    %530 = vrot.lane.b32.xlu0 %v527, 96
    %v531 = vpop.permute.xlu0 %530
    %v533 = vmul.f32 %v528, %v531
    %v534 = vmul.f32 %v517, 0.0
    %v535 = vadd.f32 %v533, %v534
    %537 = vrot.lane.b32.xlu0 %v428, 96
    %v538 = vpop.permute.xlu0 %537
    %v539 = vsel %vm228, %v538, 0
    %541 = vmatprep.subr.mxu0 0.0
    %542 = vmatpush1.msra.mxu0 %v160
    %543 = vmatprep.subr.mxu0 0.0
    %544 = vmatpush1.msra.mxu0 %v161
    %545 = vmatprep.subr.mxu0 0.0
    %546 = vmatpush1.msra.mxu0 %v162
    %547 = vmatprep.subr.mxu0 0.0
    %548 = vmatpush1.msra.mxu0 %v163
    %549 = vmatprep.subr.mxu0 0.0
    %550 = vmatpush1.msra.mxu0 0.0
    %551 = vmatprep.subr.mxu0 0.0
    %552 = vmatpush1.msra.mxu0 0.0
    %553 = vmatprep.subr.mxu0 0.0
    %554 = vmatpush1.msra.mxu0 0.0
    %555 = vmatprep.subr.mxu0 0.0
    %556 = vmatpush1.msra.mxu0 0.0
    %557 = vmatprep.subr.mxu0 0.0
    %558 = vmatpush1.msra.mxu0 0.0
    %559 = vmatprep.subr.mxu0 0.0
    %560 = vmatpush1.msra.mxu0 0.0
    %561 = vmatprep.subr.mxu0 0.0
    %562 = vmatpush1.msra.mxu0 0.0
    %563 = vmatprep.subr.mxu0 0.0
    %564 = vmatpush1.msra.mxu0 0.0
    %565 = vmatprep.subr.mxu0 0.0
    %566 = vmatpush1.msra.mxu0 0.0
    %567 = vmatprep.subr.mxu0 0.0
    %568 = vmatpush1.msra.mxu0 0.0
    %569 = vmatprep.subr.mxu0 0.0
    %570 = vmatpush1.msra.mxu0 0.0
    %571 = vmatprep.subr.mxu0 0.0
    %572 = vmatpush1.msra.mxu0 0.0
    %573 = vmatprep.subr.mxu0 0.0
    %574 = vmatpush1.msra.mxu0 0.0
    %575 = vmatprep.subr.mxu0 0.0
    %576 = vmatpush1.msra.mxu0 0.0
    %577 = vmatprep.subr.mxu0 0.0
    %578 = vmatpush1.msra.mxu0 0.0
    %579 = vmatprep.subr.mxu0 0.0
    %580 = vmatpush1.msra.mxu0 0.0
    %581 = vmatprep.subr.mxu0 0.0
    %582 = vmatpush1.msra.mxu0 0.0
    %583 = vmatprep.subr.mxu0 0.0
    %584 = vmatpush1.msra.mxu0 0.0
    %585 = vmatprep.subr.mxu0 0.0
    %586 = vmatpush1.msra.mxu0 0.0
    %587 = vmatprep.subr.mxu0 0.0
    %588 = vmatpush1.msra.mxu0 0.0
    %589 = vmatprep.subr.mxu0 0.0
    %590 = vmatpush1.msra.mxu0 0.0
    %591 = vmatprep.subr.mxu0 0.0
    %592 = vmatpush1.msra.mxu0 0.0
    %593 = vmatprep.subr.mxu0 0.0
    %594 = vmatpush1.msra.mxu0 0.0
    %595 = vmatprep.subr.mxu0 0.0
    %596 = vmatpush1.msra.mxu0 0.0
    %597 = vmatprep.subr.mxu0 0.0
    %598 = vmatpush1.msra.mxu0 0.0
    %599 = vmatprep.subr.mxu0 0.0
    %600 = vmatpush1.msra.mxu0 0.0
    %601 = vmatprep.subr.mxu0 0.0
    %602 = vmatpush1.msra.mxu0 0.0
    %603 = vmatprep.subr.mxu0 0.0
    %604 = vmatpush1.msra.mxu0 0.0
    %605 = vmatprep.mubr.f32.mxu0 0.0
    %606 = vmatmul.mubr.f32.gmra.mrb[0].mxu0 %v539
    %v607 = vpop.f32.mrb[0].mxu0
    %v608 = vadd.f32 %v181, %v607
    %v609 = vpop.f32.mrb[0].mxu0
    %610 = vdwg.mxu0
    %v612 = vrot.slane %v608, 4
    %v614 = vadd.f32 %v308, %v612
    %v615 = vxor.u32 %v614, 2147483648
    %v616 = vmul.f32 %v615, 1.442695
    %v617 = vpow.pop %v616
    %v618 = vadd.f32 %v617, 1.0
    %v619 = vrcp.pop %v618
    %v620 = vmul.f32 1.0, %v619
    %621 = vrot.lane.b32.xlu0 %v612, 64
    %v622 = vpop.permute.xlu0 %621
    %v624 = vmul.f32 %v620, %v622
    %626 = vrot.lane.b32.xlu0 %v624, 64
    %v627 = vpop.permute.xlu0 %626
    %v629 = vadd.f32 %v308, %v627
    %v630 = vtanh.pop %v629
    %v631 = vsub.f32 1.0, %v620
    %633 = vrot.lane.b32.xlu0 %v630, 96
    %v634 = vpop.permute.xlu0 %633
    %v636 = vmul.f32 %v631, %v634
    %v637 = vrot.slane %v428, 4
    %v639 = vmul.f32 %v620, %v637
    %v640 = vadd.f32 %v636, %v639
    %v642 = vrot.slane %v535, 4
    %v643 = vsel %vm228, %v642, 0
    %645 = vmatprep.subr.mxu0 0.0
    %646 = vmatpush1.msra.mxu0 %v164
    %647 = vmatprep.subr.mxu0 0.0
    %648 = vmatpush1.msra.mxu0 %v165
    %649 = vmatprep.subr.mxu0 0.0
    %650 = vmatpush1.msra.mxu0 %v166
    %651 = vmatprep.subr.mxu0 0.0
    %652 = vmatpush1.msra.mxu0 %v167
    %653 = vmatprep.subr.mxu0 0.0
    %654 = vmatpush1.msra.mxu0 0.0
    %655 = vmatprep.subr.mxu0 0.0
    %656 = vmatpush1.msra.mxu0 0.0
    %657 = vmatprep.subr.mxu0 0.0
    %658 = vmatpush1.msra.mxu0 0.0
    %659 = vmatprep.subr.mxu0 0.0
    %660 = vmatpush1.msra.mxu0 0.0
    %661 = vmatprep.subr.mxu0 0.0
    %662 = vmatpush1.msra.mxu0 0.0
    %663 = vmatprep.subr.mxu0 0.0
    %664 = vmatpush1.msra.mxu0 0.0
    %665 = vmatprep.subr.mxu0 0.0
    %666 = vmatpush1.msra.mxu0 0.0
    %667 = vmatprep.subr.mxu0 0.0
    %668 = vmatpush1.msra.mxu0 0.0
    %669 = vmatprep.subr.mxu0 0.0
    %670 = vmatpush1.msra.mxu0 0.0
    %671 = vmatprep.subr.mxu0 0.0
    %672 = vmatpush1.msra.mxu0 0.0
    %673 = vmatprep.subr.mxu0 0.0
    %674 = vmatpush1.msra.mxu0 0.0
    %675 = vmatprep.subr.mxu0 0.0
    %676 = vmatpush1.msra.mxu0 0.0
    %677 = vmatprep.subr.mxu0 0.0
    %678 = vmatpush1.msra.mxu0 0.0
    %679 = vmatprep.subr.mxu0 0.0
    %680 = vmatpush1.msra.mxu0 0.0
    %681 = vmatprep.subr.mxu0 0.0
    %682 = vmatpush1.msra.mxu0 0.0
    %683 = vmatprep.subr.mxu0 0.0
    %684 = vmatpush1.msra.mxu0 0.0
    %685 = vmatprep.subr.mxu0 0.0
    %686 = vmatpush1.msra.mxu0 0.0
    %687 = vmatprep.subr.mxu0 0.0
    %688 = vmatpush1.msra.mxu0 0.0
    %689 = vmatprep.subr.mxu0 0.0
    %690 = vmatpush1.msra.mxu0 0.0
    %691 = vmatprep.subr.mxu0 0.0
    %692 = vmatpush1.msra.mxu0 0.0
    %693 = vmatprep.subr.mxu0 0.0
    %694 = vmatpush1.msra.mxu0 0.0
    %695 = vmatprep.subr.mxu0 0.0
    %696 = vmatpush1.msra.mxu0 0.0
    %697 = vmatprep.subr.mxu0 0.0
    %698 = vmatpush1.msra.mxu0 0.0
    %699 = vmatprep.subr.mxu0 0.0
    %700 = vmatpush1.msra.mxu0 0.0
    %701 = vmatprep.subr.mxu0 0.0
    %702 = vmatpush1.msra.mxu0 0.0
    %703 = vmatprep.subr.mxu0 0.0
    %704 = vmatpush1.msra.mxu0 0.0
    %705 = vmatprep.subr.mxu0 0.0
    %706 = vmatpush1.msra.mxu0 0.0
    %707 = vmatprep.subr.mxu0 0.0
    %708 = vmatpush1.msra.mxu0 0.0
    %709 = vmatprep.mubr.f32.mxu0 0.0
    %710 = vmatmul.mubr.f32.gmra.mrb[0].mxu0 %v643
    %v711 = vpop.f32.mrb[0].mxu0
    %v712 = vadd.f32 %v188, %v711
    %v713 = vpop.f32.mrb[0].mxu0
    %714 = vdwg.mxu0
    %716 = vrot.lane.b32.xlu0 %v712, 96
    %v717 = vpop.permute.xlu0 %716
    %v719 = vadd.f32 %v326, %v717
    %v720 = vadd.f32 %v328, %v717
    %v721 = vxor.u32 %v719, 2147483648
    %v722 = vxor.u32 %v720, 2147483648
    %v723 = vmul.f32 %v721, 1.442695
    %v724 = vpow.pop %v723
    %v725 = vmul.f32 %v722, 1.442695
    %v726 = vpow.pop %v725
    %v727 = vadd.f32 %v724, 1.0
    %v728 = vadd.f32 %v726, 1.0
    %v729 = vrcp.pop %v727
    %v730 = vmul.f32 1.0, %v729
    %v731 = vrcp.pop %v728
    %v732 = vmul.f32 1.0, %v731
    %733 = vrot.lane.b32.xlu0 %v712, 32
    %v734 = vpop.permute.xlu0 %733
    %v736 = vmul.f32 %v730, %v734
    %738 = vrot.lane.b32.xlu0 %v736, 64
    %v739 = vpop.permute.xlu0 %738
    %v741 = vadd.f32 %v328, %v739
    %v742 = vtanh.pop %v741
    %v743 = vsub.f32 1.0, %v732
    %745 = vrot.lane.b32.xlu0 %v742, 96
    %v746 = vpop.permute.xlu0 %745
    %v748 = vmul.f32 %v743, %v746
    %v750 = vmul.f32 %v732, %v642
    %v751 = vadd.f32 %v748, %v750
    %v753 = vrot.slane %v640, 4
    %754 = vrot.lane.b32.xlu0 %v753, 96
    %v755 = vpop.permute.xlu0 %754
    %v756 = vsel %vm228, %v755, 0
    %758 = vmatprep.subr.mxu0 0.0
    %759 = vmatpush1.msra.mxu0 %v160
    %760 = vmatprep.subr.mxu0 0.0
    %761 = vmatpush1.msra.mxu0 %v161
    %762 = vmatprep.subr.mxu0 0.0
    %763 = vmatpush1.msra.mxu0 %v162
    %764 = vmatprep.subr.mxu0 0.0
    %765 = vmatpush1.msra.mxu0 %v163
    %766 = vmatprep.subr.mxu0 0.0
    %767 = vmatpush1.msra.mxu0 0.0
    %768 = vmatprep.subr.mxu0 0.0
    %769 = vmatpush1.msra.mxu0 0.0
    %770 = vmatprep.subr.mxu0 0.0
    %771 = vmatpush1.msra.mxu0 0.0
    %772 = vmatprep.subr.mxu0 0.0
    %773 = vmatpush1.msra.mxu0 0.0
    %774 = vmatprep.subr.mxu0 0.0
    %775 = vmatpush1.msra.mxu0 0.0
    %776 = vmatprep.subr.mxu0 0.0
    %777 = vmatpush1.msra.mxu0 0.0
    %778 = vmatprep.subr.mxu0 0.0
    %779 = vmatpush1.msra.mxu0 0.0
    %780 = vmatprep.subr.mxu0 0.0
    %781 = vmatpush1.msra.mxu0 0.0
    %782 = vmatprep.subr.mxu0 0.0
    %783 = vmatpush1.msra.mxu0 0.0
    %784 = vmatprep.subr.mxu0 0.0
    %785 = vmatpush1.msra.mxu0 0.0
    %786 = vmatprep.subr.mxu0 0.0
    %787 = vmatpush1.msra.mxu0 0.0
    %788 = vmatprep.subr.mxu0 0.0
    %789 = vmatpush1.msra.mxu0 0.0
    %790 = vmatprep.subr.mxu0 0.0
    %791 = vmatpush1.msra.mxu0 0.0
    %792 = vmatprep.subr.mxu0 0.0
    %793 = vmatpush1.msra.mxu0 0.0
    %794 = vmatprep.subr.mxu0 0.0
    %795 = vmatpush1.msra.mxu0 0.0
    %796 = vmatprep.subr.mxu0 0.0
    %797 = vmatpush1.msra.mxu0 0.0
    %798 = vmatprep.subr.mxu0 0.0
    %799 = vmatpush1.msra.mxu0 0.0
    %800 = vmatprep.subr.mxu0 0.0
    %801 = vmatpush1.msra.mxu0 0.0
    %802 = vmatprep.subr.mxu0 0.0
    %803 = vmatpush1.msra.mxu0 0.0
    %804 = vmatprep.subr.mxu0 0.0
    %805 = vmatpush1.msra.mxu0 0.0
    %806 = vmatprep.subr.mxu0 0.0
    %807 = vmatpush1.msra.mxu0 0.0
    %808 = vmatprep.subr.mxu0 0.0
    %809 = vmatpush1.msra.mxu0 0.0
    %810 = vmatprep.subr.mxu0 0.0
    %811 = vmatpush1.msra.mxu0 0.0
    %812 = vmatprep.subr.mxu0 0.0
    %813 = vmatpush1.msra.mxu0 0.0
    %814 = vmatprep.subr.mxu0 0.0
    %815 = vmatpush1.msra.mxu0 0.0
    %816 = vmatprep.subr.mxu0 0.0
    %817 = vmatpush1.msra.mxu0 0.0
    %818 = vmatprep.subr.mxu0 0.0
    %819 = vmatpush1.msra.mxu0 0.0
    %820 = vmatprep.subr.mxu0 0.0
    %821 = vmatpush1.msra.mxu0 0.0
    %822 = vmatprep.mubr.f32.mxu0 0.0
    %823 = vmatmul.mubr.f32.gmra.mrb[0].mxu0 %v756
    %v824 = vpop.f32.mrb[0].mxu0
    %v825 = vadd.f32 %v181, %v824
    %v826 = vpop.f32.mrb[0].mxu0
    %827 = vdwg.mxu0
    %v828 = vadd.f32 %v314, %v825
    %v829 = vxor.u32 %v828, 2147483648
    %v830 = vmul.f32 %v829, 1.442695
    %v831 = vpow.pop %v830
    %v832 = vadd.f32 %v831, 1.0
    %v833 = vrcp.pop %v832
    %v834 = vmul.f32 1.0, %v833
    %836 = vrot.lane.b32.xlu0 %v825, 64
    %v837 = vpop.permute.xlu0 %836
    %v839 = vmul.f32 %v834, %v837
    %841 = vrot.lane.b32.xlu0 %v839, 64
    %v842 = vpop.permute.xlu0 %841
    %v844 = vadd.f32 %v314, %v842
    %v845 = vtanh.pop %v844
    %v846 = vsub.f32 1.0, %v834
    %848 = vrot.lane.b32.xlu0 %v845, 96
    %v849 = vpop.permute.xlu0 %848
    %v851 = vmul.f32 %v846, %v849
    %v853 = vmul.f32 %v834, %v753
    %v854 = vadd.f32 %v851, %v853
    %v856 = vsel %vm228, %v751, 0
    %858 = vmatprep.subr.mxu0 0.0
    %859 = vmatpush1.msra.mxu0 %v164
    %860 = vmatprep.subr.mxu0 0.0
    %861 = vmatpush1.msra.mxu0 %v165
    %862 = vmatprep.subr.mxu0 0.0
    %863 = vmatpush1.msra.mxu0 %v166
    %864 = vmatprep.subr.mxu0 0.0
    %865 = vmatpush1.msra.mxu0 %v167
    %866 = vmatprep.subr.mxu0 0.0
    %867 = vmatpush1.msra.mxu0 0.0
    %868 = vmatprep.subr.mxu0 0.0
    %869 = vmatpush1.msra.mxu0 0.0
    %870 = vmatprep.subr.mxu0 0.0
    %871 = vmatpush1.msra.mxu0 0.0
    %872 = vmatprep.subr.mxu0 0.0
    %873 = vmatpush1.msra.mxu0 0.0
    %874 = vmatprep.subr.mxu0 0.0
    %875 = vmatpush1.msra.mxu0 0.0
    %876 = vmatprep.subr.mxu0 0.0
    %877 = vmatpush1.msra.mxu0 0.0
    %878 = vmatprep.subr.mxu0 0.0
    %879 = vmatpush1.msra.mxu0 0.0
    %880 = vmatprep.subr.mxu0 0.0
    %881 = vmatpush1.msra.mxu0 0.0
    %882 = vmatprep.subr.mxu0 0.0
    %883 = vmatpush1.msra.mxu0 0.0
    %884 = vmatprep.subr.mxu0 0.0
    %885 = vmatpush1.msra.mxu0 0.0
    %886 = vmatprep.subr.mxu0 0.0
    %887 = vmatpush1.msra.mxu0 0.0
    %888 = vmatprep.subr.mxu0 0.0
    %889 = vmatpush1.msra.mxu0 0.0
    %890 = vmatprep.subr.mxu0 0.0
    %891 = vmatpush1.msra.mxu0 0.0
    %892 = vmatprep.subr.mxu0 0.0
    %893 = vmatpush1.msra.mxu0 0.0
    %894 = vmatprep.subr.mxu0 0.0
    %895 = vmatpush1.msra.mxu0 0.0
    %896 = vmatprep.subr.mxu0 0.0
    %897 = vmatpush1.msra.mxu0 0.0
    %898 = vmatprep.subr.mxu0 0.0
    %899 = vmatpush1.msra.mxu0 0.0
    %900 = vmatprep.subr.mxu0 0.0
    %901 = vmatpush1.msra.mxu0 0.0
    %902 = vmatprep.subr.mxu0 0.0
    %903 = vmatpush1.msra.mxu0 0.0
    %904 = vmatprep.subr.mxu0 0.0
    %905 = vmatpush1.msra.mxu0 0.0
    %906 = vmatprep.subr.mxu0 0.0
    %907 = vmatpush1.msra.mxu0 0.0
    %908 = vmatprep.subr.mxu0 0.0
    %909 = vmatpush1.msra.mxu0 0.0
    %910 = vmatprep.subr.mxu0 0.0
    %911 = vmatpush1.msra.mxu0 0.0
    %912 = vmatprep.subr.mxu0 0.0
    %913 = vmatpush1.msra.mxu0 0.0
    %914 = vmatprep.subr.mxu0 0.0
    %915 = vmatpush1.msra.mxu0 0.0
    %916 = vmatprep.subr.mxu0 0.0
    %917 = vmatpush1.msra.mxu0 0.0
    %918 = vmatprep.subr.mxu0 0.0
    %919 = vmatpush1.msra.mxu0 0.0
    %920 = vmatprep.subr.mxu0 0.0
    %921 = vmatpush1.msra.mxu0 0.0
    %922 = vmatprep.mubr.f32.mxu0 0.0
    %923 = vmatmul.mubr.f32.gmra.mrb[0].mxu0 %v856
    %v924 = vpop.f32.mrb[0].mxu0
    %v925 = vadd.f32 %v188, %v924
    %v926 = vpop.f32.mrb[0].mxu0
    %927 = vdwg.mxu0
    %v929 = vrot.slane %v925, 4
    %930 = vrot.lane.b32.xlu0 %v929, 96
    %v931 = vpop.permute.xlu0 %930
    %v933 = vadd.f32 %v320, %v931
    %v934 = vadd.f32 %v322, %v931
    %v935 = vxor.u32 %v933, 2147483648
    %v936 = vxor.u32 %v934, 2147483648
    %v937 = vmul.f32 %v935, 1.442695
    %v938 = vpow.pop %v937
    %v939 = vmul.f32 %v936, 1.442695
    %v940 = vpow.pop %v939
    %v941 = vadd.f32 %v938, 1.0
    %v942 = vadd.f32 %v940, 1.0
    %v943 = vrcp.pop %v941
    %v944 = vmul.f32 1.0, %v943
    %v945 = vrcp.pop %v942
    %v946 = vmul.f32 1.0, %v945
    %947 = vrot.lane.b32.xlu0 %v929, 32
    %v948 = vpop.permute.xlu0 %947
    %v950 = vmul.f32 %v944, %v948
    %952 = vrot.lane.b32.xlu0 %v950, 64
    %v953 = vpop.permute.xlu0 %952
    %v955 = vadd.f32 %v322, %v953
    %v956 = vtanh.pop %v955
    %v957 = vsub.f32 1.0, %v946
    %959 = vrot.lane.b32.xlu0 %v956, 96
    %v960 = vpop.permute.xlu0 %959
    %v962 = vmul.f32 %v957, %v960
    %v963 = vrot.slane %v751, 4
    %v965 = vmul.f32 %v946, %v963
    %v966 = vadd.f32 %v962, %v965
    %968 = vrot.lane.b32.xlu0 %v854, 96
    %v969 = vpop.permute.xlu0 %968
    %v970 = vsel %vm228, %v969, 0
    %972 = vmatprep.subr.mxu0 0.0
    %973 = vmatpush1.msra.mxu0 %v160
    %974 = vmatprep.subr.mxu0 0.0
    %975 = vmatpush1.msra.mxu0 %v161
    %976 = vmatprep.subr.mxu0 0.0
    %977 = vmatpush1.msra.mxu0 %v162
    %978 = vmatprep.subr.mxu0 0.0
    %979 = vmatpush1.msra.mxu0 %v163
    %980 = vmatprep.subr.mxu0 0.0
    %981 = vmatpush1.msra.mxu0 0.0
    %982 = vmatprep.subr.mxu0 0.0
    %983 = vmatpush1.msra.mxu0 0.0
    %984 = vmatprep.subr.mxu0 0.0
    %985 = vmatpush1.msra.mxu0 0.0
    %986 = vmatprep.subr.mxu0 0.0
    %987 = vmatpush1.msra.mxu0 0.0
    %988 = vmatprep.subr.mxu0 0.0
    %989 = vmatpush1.msra.mxu0 0.0
    %990 = vmatprep.subr.mxu0 0.0
    %991 = vmatpush1.msra.mxu0 0.0
    %992 = vmatprep.subr.mxu0 0.0
    %993 = vmatpush1.msra.mxu0 0.0
    %994 = vmatprep.subr.mxu0 0.0
    %995 = vmatpush1.msra.mxu0 0.0
    %996 = vmatprep.subr.mxu0 0.0
    %997 = vmatpush1.msra.mxu0 0.0
    %998 = vmatprep.subr.mxu0 0.0
    %999 = vmatpush1.msra.mxu0 0.0
    %1000 = vmatprep.subr.mxu0 0.0
    %1001 = vmatpush1.msra.mxu0 0.0
    %1002 = vmatprep.subr.mxu0 0.0
    %1003 = vmatpush1.msra.mxu0 0.0
    %1004 = vmatprep.subr.mxu0 0.0
    %1005 = vmatpush1.msra.mxu0 0.0
    %1006 = vmatprep.subr.mxu0 0.0
    %1007 = vmatpush1.msra.mxu0 0.0
    %1008 = vmatprep.subr.mxu0 0.0
    %1009 = vmatpush1.msra.mxu0 0.0
    %1010 = vmatprep.subr.mxu0 0.0
    %1011 = vmatpush1.msra.mxu0 0.0
    %1012 = vmatprep.subr.mxu0 0.0
    %1013 = vmatpush1.msra.mxu0 0.0
    %1014 = vmatprep.subr.mxu0 0.0
    %1015 = vmatpush1.msra.mxu0 0.0
    %1016 = vmatprep.subr.mxu0 0.0
    %1017 = vmatpush1.msra.mxu0 0.0
    %1018 = vmatprep.subr.mxu0 0.0
    %1019 = vmatpush1.msra.mxu0 0.0
    %1020 = vmatprep.subr.mxu0 0.0
    %1021 = vmatpush1.msra.mxu0 0.0
    %1022 = vmatprep.subr.mxu0 0.0
    %1023 = vmatpush1.msra.mxu0 0.0
    %1024 = vmatprep.subr.mxu0 0.0
    %1025 = vmatpush1.msra.mxu0 0.0
    %1026 = vmatprep.subr.mxu0 0.0
    %1027 = vmatpush1.msra.mxu0 0.0
    %1028 = vmatprep.subr.mxu0 0.0
    %1029 = vmatpush1.msra.mxu0 0.0
    %1030 = vmatprep.subr.mxu0 0.0
    %1031 = vmatpush1.msra.mxu0 0.0
    %1032 = vmatprep.subr.mxu0 0.0
    %1033 = vmatpush1.msra.mxu0 0.0
    %1034 = vmatprep.subr.mxu0 0.0
    %1035 = vmatpush1.msra.mxu0 0.0
    %1036 = vmatprep.mubr.f32.mxu0 0.0
    %1037 = vmatmul.mubr.f32.gmra.mrb[0].mxu0 %v970
    %v1038 = vpop.f32.mrb[0].mxu0
    %v1039 = vadd.f32 %v181, %v1038
    %v1040 = vpop.f32.mrb[0].mxu0
    %1041 = vdwg.mxu0
    %v1043 = vrot.slane %v1039, 4
    %v1045 = vadd.f32 %v314, %v1043
    %v1046 = vxor.u32 %v1045, 2147483648
    %v1047 = vmul.f32 %v1046, 1.442695
    %v1048 = vpow.pop %v1047
    %v1049 = vadd.f32 %v1048, 1.0
    %v1050 = vrcp.pop %v1049
    %v1051 = vmul.f32 1.0, %v1050
    %1052 = vrot.lane.b32.xlu0 %v1043, 64
    %v1053 = vpop.permute.xlu0 %1052
    %v1055 = vmul.f32 %v1051, %v1053
    %1057 = vrot.lane.b32.xlu0 %v1055, 64
    %v1058 = vpop.permute.xlu0 %1057
    %v1060 = vadd.f32 %v314, %v1058
    %v1061 = vtanh.pop %v1060
    %v1062 = vsub.f32 1.0, %v1051
    %1064 = vrot.lane.b32.xlu0 %v1061, 96
    %v1065 = vpop.permute.xlu0 %1064
    %v1067 = vmul.f32 %v1062, %v1065
    %v1068 = vrot.slane %v854, 4
    %v1070 = vmul.f32 %v1051, %v1068
    %v1071 = vadd.f32 %v1067, %v1070
    %v1073 = vrot.slane %v966, 4
    %v1074 = vsel %vm228, %v1073, 0
    %1076 = vmatprep.subr.mxu0 0.0
    %1077 = vmatpush1.msra.mxu0 %v164
    %1078 = vmatprep.subr.mxu0 0.0
    %1079 = vmatpush1.msra.mxu0 %v165
    %1080 = vmatprep.subr.mxu0 0.0
    %1081 = vmatpush1.msra.mxu0 %v166
    %1082 = vmatprep.subr.mxu0 0.0
    %1083 = vmatpush1.msra.mxu0 %v167
    %1084 = vmatprep.subr.mxu0 0.0
    %1085 = vmatpush1.msra.mxu0 0.0
    %1086 = vmatprep.subr.mxu0 0.0
    %1087 = vmatpush1.msra.mxu0 0.0
    %1088 = vmatprep.subr.mxu0 0.0
    %1089 = vmatpush1.msra.mxu0 0.0
    %1090 = vmatprep.subr.mxu0 0.0
    %1091 = vmatpush1.msra.mxu0 0.0
    %1092 = vmatprep.subr.mxu0 0.0
    %1093 = vmatpush1.msra.mxu0 0.0
    %1094 = vmatprep.subr.mxu0 0.0
    %1095 = vmatpush1.msra.mxu0 0.0
    %1096 = vmatprep.subr.mxu0 0.0
    %1097 = vmatpush1.msra.mxu0 0.0
    %1098 = vmatprep.subr.mxu0 0.0
    %1099 = vmatpush1.msra.mxu0 0.0
    %1100 = vmatprep.subr.mxu0 0.0
    %1101 = vmatpush1.msra.mxu0 0.0
    %1102 = vmatprep.subr.mxu0 0.0
    %1103 = vmatpush1.msra.mxu0 0.0
    %1104 = vmatprep.subr.mxu0 0.0
    %1105 = vmatpush1.msra.mxu0 0.0
    %1106 = vmatprep.subr.mxu0 0.0
    %1107 = vmatpush1.msra.mxu0 0.0
    %1108 = vmatprep.subr.mxu0 0.0
    %1109 = vmatpush1.msra.mxu0 0.0
    %1110 = vmatprep.subr.mxu0 0.0
    %1111 = vmatpush1.msra.mxu0 0.0
    %1112 = vmatprep.subr.mxu0 0.0
    %1113 = vmatpush1.msra.mxu0 0.0
    %1114 = vmatprep.subr.mxu0 0.0
    %1115 = vmatpush1.msra.mxu0 0.0
    %1116 = vmatprep.subr.mxu0 0.0
    %1117 = vmatpush1.msra.mxu0 0.0
    %1118 = vmatprep.subr.mxu0 0.0
    %1119 = vmatpush1.msra.mxu0 0.0
    %1120 = vmatprep.subr.mxu0 0.0
    %1121 = vmatpush1.msra.mxu0 0.0
    %1122 = vmatprep.subr.mxu0 0.0
    %1123 = vmatpush1.msra.mxu0 0.0
    %1124 = vmatprep.subr.mxu0 0.0
    %1125 = vmatpush1.msra.mxu0 0.0
    %1126 = vmatprep.subr.mxu0 0.0
    %1127 = vmatpush1.msra.mxu0 0.0
    %1128 = vmatprep.subr.mxu0 0.0
    %1129 = vmatpush1.msra.mxu0 0.0
    %1130 = vmatprep.subr.mxu0 0.0
    %1131 = vmatpush1.msra.mxu0 0.0
    %1132 = vmatprep.subr.mxu0 0.0
    %1133 = vmatpush1.msra.mxu0 0.0
    %1134 = vmatprep.subr.mxu0 0.0
    %1135 = vmatpush1.msra.mxu0 0.0
    %1136 = vmatprep.subr.mxu0 0.0
    %1137 = vmatpush1.msra.mxu0 0.0
    %1138 = vmatprep.subr.mxu0 0.0
    %1139 = vmatpush1.msra.mxu0 0.0
    %1140 = vmatprep.mubr.f32.mxu0 0.0
    %1141 = vmatmul.mubr.f32.gmra.mrb[0].mxu0 %v1074
    %v1142 = vpop.f32.mrb[0].mxu0
    %v1143 = vadd.f32 %v188, %v1142
    %v1144 = vpop.f32.mrb[0].mxu0
    %1145 = vdwg.mxu0
    %1147 = vrot.lane.b32.xlu0 %v1143, 96
    %v1148 = vpop.permute.xlu0 %1147
    %v1150 = vadd.f32 %v320, %v1148
    %v1151 = vadd.f32 %v322, %v1148
    %v1152 = vxor.u32 %v1150, 2147483648
    %v1153 = vxor.u32 %v1151, 2147483648
    %v1154 = vmul.f32 %v1152, 1.442695
    %v1155 = vpow.pop %v1154
    %v1156 = vmul.f32 %v1153, 1.442695
    %v1157 = vpow.pop %v1156
    %v1158 = vadd.f32 %v1155, 1.0
    %v1159 = vadd.f32 %v1157, 1.0
    %v1160 = vrcp.pop %v1158
    %v1161 = vmul.f32 1.0, %v1160
    %v1162 = vrcp.pop %v1159
    %v1163 = vmul.f32 1.0, %v1162
    %1164 = vrot.lane.b32.xlu0 %v1143, 32
    %v1165 = vpop.permute.xlu0 %1164
    %v1167 = vmul.f32 %v1161, %v1165
    %1169 = vrot.lane.b32.xlu0 %v1167, 64
    %v1170 = vpop.permute.xlu0 %1169
    %v1172 = vadd.f32 %v322, %v1170
    %v1173 = vtanh.pop %v1172
    %v1174 = vsub.f32 1.0, %v1163
    %1176 = vrot.lane.b32.xlu0 %v1173, 96
    %v1177 = vpop.permute.xlu0 %1176
    %v1179 = vmul.f32 %v1174, %v1177
    %v1181 = vmul.f32 %v1163, %v1073
    %v1182 = vadd.f32 %v1179, %v1181
    %v1184 = vrot.slane %v1071, 4
    %1185 = vrot.lane.b32.xlu0 %v1184, 96
    %v1186 = vpop.permute.xlu0 %1185
    %v1187 = vsel %vm228, %v1186, 0
    %1189 = vmatprep.subr.mxu0 0.0
    %1190 = vmatpush1.msra.mxu0 %v160
    %1191 = vmatprep.subr.mxu0 0.0
    %1192 = vmatpush1.msra.mxu0 %v161
    %1193 = vmatprep.subr.mxu0 0.0
    %1194 = vmatpush1.msra.mxu0 %v162
    %1195 = vmatprep.subr.mxu0 0.0
    %1196 = vmatpush1.msra.mxu0 %v163
    %1197 = vmatprep.subr.mxu0 0.0
    %1198 = vmatpush1.msra.mxu0 0.0
    %1199 = vmatprep.subr.mxu0 0.0
    %1200 = vmatpush1.msra.mxu0 0.0
    %1201 = vmatprep.subr.mxu0 0.0
    %1202 = vmatpush1.msra.mxu0 0.0
    %1203 = vmatprep.subr.mxu0 0.0
    %1204 = vmatpush1.msra.mxu0 0.0
    %1205 = vmatprep.subr.mxu0 0.0
    %1206 = vmatpush1.msra.mxu0 0.0
    %1207 = vmatprep.subr.mxu0 0.0
    %1208 = vmatpush1.msra.mxu0 0.0
    %1209 = vmatprep.subr.mxu0 0.0
    %1210 = vmatpush1.msra.mxu0 0.0
    %1211 = vmatprep.subr.mxu0 0.0
    %1212 = vmatpush1.msra.mxu0 0.0
    %1213 = vmatprep.subr.mxu0 0.0
    %1214 = vmatpush1.msra.mxu0 0.0
    %1215 = vmatprep.subr.mxu0 0.0
    %1216 = vmatpush1.msra.mxu0 0.0
    %1217 = vmatprep.subr.mxu0 0.0
    %1218 = vmatpush1.msra.mxu0 0.0
    %1219 = vmatprep.subr.mxu0 0.0
    %1220 = vmatpush1.msra.mxu0 0.0
    %1221 = vmatprep.subr.mxu0 0.0
    %1222 = vmatpush1.msra.mxu0 0.0
    %1223 = vmatprep.subr.mxu0 0.0
    %1224 = vmatpush1.msra.mxu0 0.0
    %1225 = vmatprep.subr.mxu0 0.0
    %1226 = vmatpush1.msra.mxu0 0.0
    %1227 = vmatprep.subr.mxu0 0.0
    %1228 = vmatpush1.msra.mxu0 0.0
    %1229 = vmatprep.subr.mxu0 0.0
    %1230 = vmatpush1.msra.mxu0 0.0
    %1231 = vmatprep.subr.mxu0 0.0
    %1232 = vmatpush1.msra.mxu0 0.0
    %1233 = vmatprep.subr.mxu0 0.0
    %1234 = vmatpush1.msra.mxu0 0.0
    %1235 = vmatprep.subr.mxu0 0.0
    %1236 = vmatpush1.msra.mxu0 0.0
    %1237 = vmatprep.subr.mxu0 0.0
    %1238 = vmatpush1.msra.mxu0 0.0
    %1239 = vmatprep.subr.mxu0 0.0
    %1240 = vmatpush1.msra.mxu0 0.0
    %1241 = vmatprep.subr.mxu0 0.0
    %1242 = vmatpush1.msra.mxu0 0.0
    %1243 = vmatprep.subr.mxu0 0.0
    %1244 = vmatpush1.msra.mxu0 0.0
    %1245 = vmatprep.subr.mxu0 0.0
    %1246 = vmatpush1.msra.mxu0 0.0
    %1247 = vmatprep.subr.mxu0 0.0
    %1248 = vmatpush1.msra.mxu0 0.0
    %1249 = vmatprep.subr.mxu0 0.0
    %1250 = vmatpush1.msra.mxu0 0.0
    %1251 = vmatprep.subr.mxu0 0.0
    %1252 = vmatpush1.msra.mxu0 0.0
    %1253 = vmatprep.mubr.f32.mxu0 0.0
    %1254 = vmatmul.mubr.f32.gmra.mrb[0].mxu0 %v1187
    %v1255 = vpop.f32.mrb[0].mxu0
    %v1256 = vadd.f32 %v181, %v1255
    %v1257 = vpop.f32.mrb[0].mxu0
    %1258 = vdwg.mxu0
    %v1259 = vadd.f32 %v320, %v1256
    %v1260 = vxor.u32 %v1259, 2147483648
    %v1261 = vmul.f32 %v1260, 1.442695
    %v1262 = vpow.pop %v1261
    %v1263 = vadd.f32 %v1262, 1.0
    %v1264 = vrcp.pop %v1263
    %v1265 = vmul.f32 1.0, %v1264
    %1267 = vrot.lane.b32.xlu0 %v1256, 64
    %v1268 = vpop.permute.xlu0 %1267
    %v1270 = vmul.f32 %v1265, %v1268
    %1272 = vrot.lane.b32.xlu0 %v1270, 64
    %v1273 = vpop.permute.xlu0 %1272
    %v1275 = vadd.f32 %v320, %v1273
    %v1276 = vtanh.pop %v1275
    %v1277 = vsub.f32 1.0, %v1265
    %1279 = vrot.lane.b32.xlu0 %v1276, 96
    %v1280 = vpop.permute.xlu0 %1279
    %v1282 = vmul.f32 %v1277, %v1280
    %v1284 = vmul.f32 %v1265, %v1184
    %v1285 = vadd.f32 %v1282, %v1284
    %v1287 = vsel %vm228, %v1182, 0
    %1289 = vmatprep.subr.mxu0 0.0
    %1290 = vmatpush1.msra.mxu0 %v164
    %1291 = vmatprep.subr.mxu0 0.0
    %1292 = vmatpush1.msra.mxu0 %v165
    %1293 = vmatprep.subr.mxu0 0.0
    %1294 = vmatpush1.msra.mxu0 %v166
    %1295 = vmatprep.subr.mxu0 0.0
    %1296 = vmatpush1.msra.mxu0 %v167
    %1297 = vmatprep.subr.mxu0 0.0
    %1298 = vmatpush1.msra.mxu0 0.0
    %1299 = vmatprep.subr.mxu0 0.0
    %1300 = vmatpush1.msra.mxu0 0.0
    %1301 = vmatprep.subr.mxu0 0.0
    %1302 = vmatpush1.msra.mxu0 0.0
    %1303 = vmatprep.subr.mxu0 0.0
    %1304 = vmatpush1.msra.mxu0 0.0
    %1305 = vmatprep.subr.mxu0 0.0
    %1306 = vmatpush1.msra.mxu0 0.0
    %1307 = vmatprep.subr.mxu0 0.0
    %1308 = vmatpush1.msra.mxu0 0.0
    %1309 = vmatprep.subr.mxu0 0.0
    %1310 = vmatpush1.msra.mxu0 0.0
    %1311 = vmatprep.subr.mxu0 0.0
    %1312 = vmatpush1.msra.mxu0 0.0
    %1313 = vmatprep.subr.mxu0 0.0
    %1314 = vmatpush1.msra.mxu0 0.0
    %1315 = vmatprep.subr.mxu0 0.0
    %1316 = vmatpush1.msra.mxu0 0.0
    %1317 = vmatprep.subr.mxu0 0.0
    %1318 = vmatpush1.msra.mxu0 0.0
    %1319 = vmatprep.subr.mxu0 0.0
    %1320 = vmatpush1.msra.mxu0 0.0
    %1321 = vmatprep.subr.mxu0 0.0
    %1322 = vmatpush1.msra.mxu0 0.0
    %1323 = vmatprep.subr.mxu0 0.0
    %1324 = vmatpush1.msra.mxu0 0.0
    %1325 = vmatprep.subr.mxu0 0.0
    %1326 = vmatpush1.msra.mxu0 0.0
    %1327 = vmatprep.subr.mxu0 0.0
    %1328 = vmatpush1.msra.mxu0 0.0
    %1329 = vmatprep.subr.mxu0 0.0
    %1330 = vmatpush1.msra.mxu0 0.0
    %1331 = vmatprep.subr.mxu0 0.0
    %1332 = vmatpush1.msra.mxu0 0.0
    %1333 = vmatprep.subr.mxu0 0.0
    %1334 = vmatpush1.msra.mxu0 0.0
    %1335 = vmatprep.subr.mxu0 0.0
    %1336 = vmatpush1.msra.mxu0 0.0
    %1337 = vmatprep.subr.mxu0 0.0
    %1338 = vmatpush1.msra.mxu0 0.0
    %1339 = vmatprep.subr.mxu0 0.0
    %1340 = vmatpush1.msra.mxu0 0.0
    %1341 = vmatprep.subr.mxu0 0.0
    %1342 = vmatpush1.msra.mxu0 0.0
    %1343 = vmatprep.subr.mxu0 0.0
    %1344 = vmatpush1.msra.mxu0 0.0
    %1345 = vmatprep.subr.mxu0 0.0
    %1346 = vmatpush1.msra.mxu0 0.0
    %1347 = vmatprep.subr.mxu0 0.0
    %1348 = vmatpush1.msra.mxu0 0.0
    %1349 = vmatprep.subr.mxu0 0.0
    %1350 = vmatpush1.msra.mxu0 0.0
    %1351 = vmatprep.subr.mxu0 0.0
    %1352 = vmatpush1.msra.mxu0 0.0
    %1353 = vmatprep.mubr.f32.mxu0 0.0
    %1354 = vmatmul.mubr.f32.gmra.mrb[0].mxu0 %v1287
    %v1355 = vpop.f32.mrb[0].mxu0
    %v1356 = vadd.f32 %v188, %v1355
    %v1357 = vpop.f32.mrb[0].mxu0
    %1358 = vdwg.mxu0
    %v1360 = vrot.slane %v1356, 4
    %1361 = vrot.lane.b32.xlu0 %v1360, 96
    %v1362 = vpop.permute.xlu0 %1361
    %v1364 = vadd.f32 %v314, %v1362
    %v1365 = vadd.f32 %v316, %v1362
    %v1366 = vxor.u32 %v1364, 2147483648
    %v1367 = vxor.u32 %v1365, 2147483648
    %v1368 = vmul.f32 %v1366, 1.442695
    %v1369 = vpow.pop %v1368
    %v1370 = vmul.f32 %v1367, 1.442695
    %v1371 = vpow.pop %v1370
    %v1372 = vadd.f32 %v1369, 1.0
    %v1373 = vadd.f32 %v1371, 1.0
    %v1374 = vrcp.pop %v1372
    %v1375 = vmul.f32 1.0, %v1374
    %v1376 = vrcp.pop %v1373
    %v1377 = vmul.f32 1.0, %v1376
    %1378 = vrot.lane.b32.xlu0 %v1360, 32
    %v1379 = vpop.permute.xlu0 %1378
    %v1381 = vmul.f32 %v1375, %v1379
    %1383 = vrot.lane.b32.xlu0 %v1381, 64
    %v1384 = vpop.permute.xlu0 %1383
    %v1386 = vadd.f32 %v316, %v1384
    %v1387 = vtanh.pop %v1386
    %v1388 = vsub.f32 1.0, %v1377
    %1390 = vrot.lane.b32.xlu0 %v1387, 96
    %v1391 = vpop.permute.xlu0 %1390
    %v1393 = vmul.f32 %v1388, %v1391
    %v1394 = vrot.slane %v1182, 4
    %v1396 = vmul.f32 %v1377, %v1394
    %v1397 = vadd.f32 %v1393, %v1396
    %1399 = vrot.lane.b32.xlu0 %v1285, 96
    %v1400 = vpop.permute.xlu0 %1399
    %v1401 = vsel %vm228, %v1400, 0
    %1403 = vmatprep.subr.mxu0 0.0
    %1404 = vmatpush1.msra.mxu0 %v160
    %1405 = vmatprep.subr.mxu0 0.0
    %1406 = vmatpush1.msra.mxu0 %v161
    %1407 = vmatprep.subr.mxu0 0.0
    %1408 = vmatpush1.msra.mxu0 %v162
    %1409 = vmatprep.subr.mxu0 0.0
    %1410 = vmatpush1.msra.mxu0 %v163
    %1411 = vmatprep.subr.mxu0 0.0
    %1412 = vmatpush1.msra.mxu0 0.0
    %1413 = vmatprep.subr.mxu0 0.0
    %1414 = vmatpush1.msra.mxu0 0.0
    %1415 = vmatprep.subr.mxu0 0.0
    %1416 = vmatpush1.msra.mxu0 0.0
    %1417 = vmatprep.subr.mxu0 0.0
    %1418 = vmatpush1.msra.mxu0 0.0
    %1419 = vmatprep.subr.mxu0 0.0
    %1420 = vmatpush1.msra.mxu0 0.0
    %1421 = vmatprep.subr.mxu0 0.0
    %1422 = vmatpush1.msra.mxu0 0.0
    %1423 = vmatprep.subr.mxu0 0.0
    %1424 = vmatpush1.msra.mxu0 0.0
    %1425 = vmatprep.subr.mxu0 0.0
    %1426 = vmatpush1.msra.mxu0 0.0
    %1427 = vmatprep.subr.mxu0 0.0
    %1428 = vmatpush1.msra.mxu0 0.0
    %1429 = vmatprep.subr.mxu0 0.0
    %1430 = vmatpush1.msra.mxu0 0.0
    %1431 = vmatprep.subr.mxu0 0.0
    %1432 = vmatpush1.msra.mxu0 0.0
    %1433 = vmatprep.subr.mxu0 0.0
    %1434 = vmatpush1.msra.mxu0 0.0
    %1435 = vmatprep.subr.mxu0 0.0
    %1436 = vmatpush1.msra.mxu0 0.0
    %1437 = vmatprep.subr.mxu0 0.0
    %1438 = vmatpush1.msra.mxu0 0.0
    %1439 = vmatprep.subr.mxu0 0.0
    %1440 = vmatpush1.msra.mxu0 0.0
    %1441 = vmatprep.subr.mxu0 0.0
    %1442 = vmatpush1.msra.mxu0 0.0
    %1443 = vmatprep.subr.mxu0 0.0
    %1444 = vmatpush1.msra.mxu0 0.0
    %1445 = vmatprep.subr.mxu0 0.0
    %1446 = vmatpush1.msra.mxu0 0.0
    %1447 = vmatprep.subr.mxu0 0.0
    %1448 = vmatpush1.msra.mxu0 0.0
    %1449 = vmatprep.subr.mxu0 0.0
    %1450 = vmatpush1.msra.mxu0 0.0
    %1451 = vmatprep.subr.mxu0 0.0
    %1452 = vmatpush1.msra.mxu0 0.0
    %1453 = vmatprep.subr.mxu0 0.0
    %1454 = vmatpush1.msra.mxu0 0.0
    %1455 = vmatprep.subr.mxu0 0.0
    %1456 = vmatpush1.msra.mxu0 0.0
    %1457 = vmatprep.subr.mxu0 0.0
    %1458 = vmatpush1.msra.mxu0 0.0
    %1459 = vmatprep.subr.mxu0 0.0
    %1460 = vmatpush1.msra.mxu0 0.0
    %1461 = vmatprep.subr.mxu0 0.0
    %1462 = vmatpush1.msra.mxu0 0.0
    %1463 = vmatprep.subr.mxu0 0.0
    %1464 = vmatpush1.msra.mxu0 0.0
    %1465 = vmatprep.subr.mxu0 0.0
    %1466 = vmatpush1.msra.mxu0 0.0
    %1467 = vmatprep.mubr.f32.mxu0 0.0
    %1468 = vmatmul.mubr.f32.gmra.mrb[0].mxu0 %v1401
    %v1469 = vpop.f32.mrb[0].mxu0
    %v1470 = vadd.f32 %v181, %v1469
    %v1471 = vpop.f32.mrb[0].mxu0
    %1472 = vdwg.mxu0
    %v1474 = vrot.slane %v1470, 4
    %v1476 = vadd.f32 %v320, %v1474
    %v1477 = vxor.u32 %v1476, 2147483648
    %v1478 = vmul.f32 %v1477, 1.442695
    %v1479 = vpow.pop %v1478
    %v1480 = vadd.f32 %v1479, 1.0
    %v1481 = vrcp.pop %v1480
    %v1482 = vmul.f32 1.0, %v1481
    %1483 = vrot.lane.b32.xlu0 %v1474, 64
    %v1484 = vpop.permute.xlu0 %1483
    %v1486 = vmul.f32 %v1482, %v1484
    %1488 = vrot.lane.b32.xlu0 %v1486, 64
    %v1489 = vpop.permute.xlu0 %1488
    %v1491 = vadd.f32 %v320, %v1489
    %v1492 = vtanh.pop %v1491
    %v1493 = vsub.f32 1.0, %v1482
    %1495 = vrot.lane.b32.xlu0 %v1492, 96
    %v1496 = vpop.permute.xlu0 %1495
    %v1498 = vmul.f32 %v1493, %v1496
    %v1499 = vrot.slane %v1285, 4
    %v1501 = vmul.f32 %v1482, %v1499
    %v1502 = vadd.f32 %v1498, %v1501
    %v1504 = vrot.slane %v1397, 4
    %v1505 = vsel %vm228, %v1504, 0
    %1507 = vmatprep.subr.mxu0 0.0
    %1508 = vmatpush1.msra.mxu0 %v164
    %1509 = vmatprep.subr.mxu0 0.0
    %1510 = vmatpush1.msra.mxu0 %v165
    %1511 = vmatprep.subr.mxu0 0.0
    %1512 = vmatpush1.msra.mxu0 %v166
    %1513 = vmatprep.subr.mxu0 0.0
    %1514 = vmatpush1.msra.mxu0 %v167
    %1515 = vmatprep.subr.mxu0 0.0
    %1516 = vmatpush1.msra.mxu0 0.0
    %1517 = vmatprep.subr.mxu0 0.0
    %1518 = vmatpush1.msra.mxu0 0.0
    %1519 = vmatprep.subr.mxu0 0.0
    %1520 = vmatpush1.msra.mxu0 0.0
    %1521 = vmatprep.subr.mxu0 0.0
    %1522 = vmatpush1.msra.mxu0 0.0
    %1523 = vmatprep.subr.mxu0 0.0
    %1524 = vmatpush1.msra.mxu0 0.0
    %1525 = vmatprep.subr.mxu0 0.0
    %1526 = vmatpush1.msra.mxu0 0.0
    %1527 = vmatprep.subr.mxu0 0.0
    %1528 = vmatpush1.msra.mxu0 0.0
    %1529 = vmatprep.subr.mxu0 0.0
    %1530 = vmatpush1.msra.mxu0 0.0
    %1531 = vmatprep.subr.mxu0 0.0
    %1532 = vmatpush1.msra.mxu0 0.0
    %1533 = vmatprep.subr.mxu0 0.0
    %1534 = vmatpush1.msra.mxu0 0.0
    %1535 = vmatprep.subr.mxu0 0.0
    %1536 = vmatpush1.msra.mxu0 0.0
    %1537 = vmatprep.subr.mxu0 0.0
    %1538 = vmatpush1.msra.mxu0 0.0
    %1539 = vmatprep.subr.mxu0 0.0
    %1540 = vmatpush1.msra.mxu0 0.0
    %1541 = vmatprep.subr.mxu0 0.0
    %1542 = vmatpush1.msra.mxu0 0.0
    %1543 = vmatprep.subr.mxu0 0.0
    %1544 = vmatpush1.msra.mxu0 0.0
    %1545 = vmatprep.subr.mxu0 0.0
    %1546 = vmatpush1.msra.mxu0 0.0
    %1547 = vmatprep.subr.mxu0 0.0
    %1548 = vmatpush1.msra.mxu0 0.0
    %1549 = vmatprep.subr.mxu0 0.0
    %1550 = vmatpush1.msra.mxu0 0.0
    %1551 = vmatprep.subr.mxu0 0.0
    %1552 = vmatpush1.msra.mxu0 0.0
    %1553 = vmatprep.subr.mxu0 0.0
    %1554 = vmatpush1.msra.mxu0 0.0
    %1555 = vmatprep.subr.mxu0 0.0
    %1556 = vmatpush1.msra.mxu0 0.0
    %1557 = vmatprep.subr.mxu0 0.0
    %1558 = vmatpush1.msra.mxu0 0.0
    %1559 = vmatprep.subr.mxu0 0.0
    %1560 = vmatpush1.msra.mxu0 0.0
    %1561 = vmatprep.subr.mxu0 0.0
    %1562 = vmatpush1.msra.mxu0 0.0
    %1563 = vmatprep.subr.mxu0 0.0
    %1564 = vmatpush1.msra.mxu0 0.0
    %1565 = vmatprep.subr.mxu0 0.0
    %1566 = vmatpush1.msra.mxu0 0.0
    %1567 = vmatprep.subr.mxu0 0.0
    %1568 = vmatpush1.msra.mxu0 0.0
    %1569 = vmatprep.subr.mxu0 0.0
    %1570 = vmatpush1.msra.mxu0 0.0
    %1571 = vmatprep.mubr.f32.mxu0 0.0
    %1572 = vmatmul.mubr.f32.gmra.mrb[0].mxu0 %v1505
    %v1573 = vpop.f32.mrb[0].mxu0
    %v1574 = vadd.f32 %v188, %v1573
    %v1575 = vpop.f32.mrb[0].mxu0
    %1576 = vdwg.mxu0
    %1578 = vrot.lane.b32.xlu0 %v1574, 96
    %v1579 = vpop.permute.xlu0 %1578
    %v1581 = vadd.f32 %v314, %v1579
    %v1582 = vadd.f32 %v316, %v1579
    %v1583 = vxor.u32 %v1581, 2147483648
    %v1584 = vxor.u32 %v1582, 2147483648
    %v1585 = vmul.f32 %v1583, 1.442695
    %v1586 = vpow.pop %v1585
    %v1587 = vmul.f32 %v1584, 1.442695
    %v1588 = vpow.pop %v1587
    %v1589 = vadd.f32 %v1586, 1.0
    %v1590 = vadd.f32 %v1588, 1.0
    %v1591 = vrcp.pop %v1589
    %v1592 = vmul.f32 1.0, %v1591
    %v1593 = vrcp.pop %v1590
    %v1594 = vmul.f32 1.0, %v1593
    %1595 = vrot.lane.b32.xlu0 %v1574, 32
    %v1596 = vpop.permute.xlu0 %1595
    %v1598 = vmul.f32 %v1592, %v1596
    %1600 = vrot.lane.b32.xlu0 %v1598, 64
    %v1601 = vpop.permute.xlu0 %1600
    %v1603 = vadd.f32 %v316, %v1601
    %v1604 = vtanh.pop %v1603
    %v1605 = vsub.f32 1.0, %v1594
    %1607 = vrot.lane.b32.xlu0 %v1604, 96
    %v1608 = vpop.permute.xlu0 %1607
    %v1610 = vmul.f32 %v1605, %v1608
    %v1612 = vmul.f32 %v1594, %v1504
    %v1613 = vadd.f32 %v1610, %v1612
    %v1615 = vrot.slane %v1502, 4
    %1616 = vrot.lane.b32.xlu0 %v1615, 96
    %v1617 = vpop.permute.xlu0 %1616
    %v1618 = vsel %vm228, %v1617, 0
    %1620 = vmatprep.subr.mxu0 0.0
    %1621 = vmatpush1.msra.mxu0 %v160
    %1622 = vmatprep.subr.mxu0 0.0
    %1623 = vmatpush1.msra.mxu0 %v161
    %1624 = vmatprep.subr.mxu0 0.0
    %1625 = vmatpush1.msra.mxu0 %v162
    %1626 = vmatprep.subr.mxu0 0.0
    %1627 = vmatpush1.msra.mxu0 %v163
    %1628 = vmatprep.subr.mxu0 0.0
    %1629 = vmatpush1.msra.mxu0 0.0
    %1630 = vmatprep.subr.mxu0 0.0
    %1631 = vmatpush1.msra.mxu0 0.0
    %1632 = vmatprep.subr.mxu0 0.0
    %1633 = vmatpush1.msra.mxu0 0.0
    %1634 = vmatprep.subr.mxu0 0.0
    %1635 = vmatpush1.msra.mxu0 0.0
    %1636 = vmatprep.subr.mxu0 0.0
    %1637 = vmatpush1.msra.mxu0 0.0
    %1638 = vmatprep.subr.mxu0 0.0
    %1639 = vmatpush1.msra.mxu0 0.0
    %1640 = vmatprep.subr.mxu0 0.0
    %1641 = vmatpush1.msra.mxu0 0.0
    %1642 = vmatprep.subr.mxu0 0.0
    %1643 = vmatpush1.msra.mxu0 0.0
    %1644 = vmatprep.subr.mxu0 0.0
    %1645 = vmatpush1.msra.mxu0 0.0
    %1646 = vmatprep.subr.mxu0 0.0
    %1647 = vmatpush1.msra.mxu0 0.0
    %1648 = vmatprep.subr.mxu0 0.0
    %1649 = vmatpush1.msra.mxu0 0.0
    %1650 = vmatprep.subr.mxu0 0.0
    %1651 = vmatpush1.msra.mxu0 0.0
    %1652 = vmatprep.subr.mxu0 0.0
    %1653 = vmatpush1.msra.mxu0 0.0
    %1654 = vmatprep.subr.mxu0 0.0
    %1655 = vmatpush1.msra.mxu0 0.0
    %1656 = vmatprep.subr.mxu0 0.0
    %1657 = vmatpush1.msra.mxu0 0.0
    %1658 = vmatprep.subr.mxu0 0.0
    %1659 = vmatpush1.msra.mxu0 0.0
    %1660 = vmatprep.subr.mxu0 0.0
    %1661 = vmatpush1.msra.mxu0 0.0
    %1662 = vmatprep.subr.mxu0 0.0
    %1663 = vmatpush1.msra.mxu0 0.0
    %1664 = vmatprep.subr.mxu0 0.0
    %1665 = vmatpush1.msra.mxu0 0.0
    %1666 = vmatprep.subr.mxu0 0.0
    %1667 = vmatpush1.msra.mxu0 0.0
    %1668 = vmatprep.subr.mxu0 0.0
    %1669 = vmatpush1.msra.mxu0 0.0
    %1670 = vmatprep.subr.mxu0 0.0
    %1671 = vmatpush1.msra.mxu0 0.0
    %1672 = vmatprep.subr.mxu0 0.0
    %1673 = vmatpush1.msra.mxu0 0.0
    %1674 = vmatprep.subr.mxu0 0.0
    %1675 = vmatpush1.msra.mxu0 0.0
    %1676 = vmatprep.subr.mxu0 0.0
    %1677 = vmatpush1.msra.mxu0 0.0
    %1678 = vmatprep.subr.mxu0 0.0
    %1679 = vmatpush1.msra.mxu0 0.0
    %1680 = vmatprep.subr.mxu0 0.0
    %1681 = vmatpush1.msra.mxu0 0.0
    %1682 = vmatprep.subr.mxu0 0.0
    %1683 = vmatpush1.msra.mxu0 0.0
    %1684 = vmatprep.mubr.f32.mxu0 0.0
    %1685 = vmatmul.mubr.f32.gmra.mrb[0].mxu0 %v1618
    %v1686 = vpop.f32.mrb[0].mxu0
    %v1687 = vadd.f32 %v181, %v1686
    %v1688 = vpop.f32.mrb[0].mxu0
    %1689 = vdwg.mxu0
    %v1690 = vadd.f32 %v326, %v1687
    %v1691 = vxor.u32 %v1690, 2147483648
    %v1692 = vmul.f32 %v1691, 1.442695
    %v1693 = vpow.pop %v1692
    %v1694 = vadd.f32 %v1693, 1.0
    %v1695 = vrcp.pop %v1694
    %v1696 = vmul.f32 1.0, %v1695
    %1698 = vrot.lane.b32.xlu0 %v1687, 64
    %v1699 = vpop.permute.xlu0 %1698
    %v1701 = vmul.f32 %v1696, %v1699
    %1703 = vrot.lane.b32.xlu0 %v1701, 64
    %v1704 = vpop.permute.xlu0 %1703
    %v1706 = vadd.f32 %v326, %v1704
    %v1707 = vtanh.pop %v1706
    %v1708 = vsub.f32 1.0, %v1696
    %1710 = vrot.lane.b32.xlu0 %v1707, 96
    %v1711 = vpop.permute.xlu0 %1710
    %v1713 = vmul.f32 %v1708, %v1711
    %v1715 = vmul.f32 %v1696, %v1615
    %v1716 = vadd.f32 %v1713, %v1715
    %v1718 = vsel %vm228, %v1613, 0
    %1720 = vmatprep.subr.mxu0 0.0
    %1721 = vmatpush1.msra.mxu0 %v164
    %1722 = vmatprep.subr.mxu0 0.0
    %1723 = vmatpush1.msra.mxu0 %v165
    %1724 = vmatprep.subr.mxu0 0.0
    %1725 = vmatpush1.msra.mxu0 %v166
    %1726 = vmatprep.subr.mxu0 0.0
    %1727 = vmatpush1.msra.mxu0 %v167
    %1728 = vmatprep.subr.mxu0 0.0
    %1729 = vmatpush1.msra.mxu0 0.0
    %1730 = vmatprep.subr.mxu0 0.0
    %1731 = vmatpush1.msra.mxu0 0.0
    %1732 = vmatprep.subr.mxu0 0.0
    %1733 = vmatpush1.msra.mxu0 0.0
    %1734 = vmatprep.subr.mxu0 0.0
    %1735 = vmatpush1.msra.mxu0 0.0
    %1736 = vmatprep.subr.mxu0 0.0
    %1737 = vmatpush1.msra.mxu0 0.0
    %1738 = vmatprep.subr.mxu0 0.0
    %1739 = vmatpush1.msra.mxu0 0.0
    %1740 = vmatprep.subr.mxu0 0.0
    %1741 = vmatpush1.msra.mxu0 0.0
    %1742 = vmatprep.subr.mxu0 0.0
    %1743 = vmatpush1.msra.mxu0 0.0
    %1744 = vmatprep.subr.mxu0 0.0
    %1745 = vmatpush1.msra.mxu0 0.0
    %1746 = vmatprep.subr.mxu0 0.0
    %1747 = vmatpush1.msra.mxu0 0.0
    %1748 = vmatprep.subr.mxu0 0.0
    %1749 = vmatpush1.msra.mxu0 0.0
    %1750 = vmatprep.subr.mxu0 0.0
    %1751 = vmatpush1.msra.mxu0 0.0
    %1752 = vmatprep.subr.mxu0 0.0
    %1753 = vmatpush1.msra.mxu0 0.0
    %1754 = vmatprep.subr.mxu0 0.0
    %1755 = vmatpush1.msra.mxu0 0.0
    %1756 = vmatprep.subr.mxu0 0.0
    %1757 = vmatpush1.msra.mxu0 0.0
    %1758 = vmatprep.subr.mxu0 0.0
    %1759 = vmatpush1.msra.mxu0 0.0
    %1760 = vmatprep.subr.mxu0 0.0
    %1761 = vmatpush1.msra.mxu0 0.0
    %1762 = vmatprep.subr.mxu0 0.0
    %1763 = vmatpush1.msra.mxu0 0.0
    %1764 = vmatprep.subr.mxu0 0.0
    %1765 = vmatpush1.msra.mxu0 0.0
    %1766 = vmatprep.subr.mxu0 0.0
    %1767 = vmatpush1.msra.mxu0 0.0
    %1768 = vmatprep.subr.mxu0 0.0
    %1769 = vmatpush1.msra.mxu0 0.0
    %1770 = vmatprep.subr.mxu0 0.0
    %1771 = vmatpush1.msra.mxu0 0.0
    %1772 = vmatprep.subr.mxu0 0.0
    %1773 = vmatpush1.msra.mxu0 0.0
    %1774 = vmatprep.subr.mxu0 0.0
    %1775 = vmatpush1.msra.mxu0 0.0
    %1776 = vmatprep.subr.mxu0 0.0
    %1777 = vmatpush1.msra.mxu0 0.0
    %1778 = vmatprep.subr.mxu0 0.0
    %1779 = vmatpush1.msra.mxu0 0.0
    %1780 = vmatprep.subr.mxu0 0.0
    %1781 = vmatpush1.msra.mxu0 0.0
    %1782 = vmatprep.subr.mxu0 0.0
    %1783 = vmatpush1.msra.mxu0 0.0
    %1784 = vmatprep.mubr.f32.mxu0 0.0
    %1785 = vmatmul.mubr.f32.gmra.mrb[0].mxu0 %v1718
    %v1786 = vpop.f32.mrb[0].mxu0
    %v1787 = vadd.f32 %v188, %v1786
    %v1788 = vpop.f32.mrb[0].mxu0
    %1789 = vdwg.mxu0
    %v1791 = vrot.slane %v1787, 4
    %1792 = vrot.lane.b32.xlu0 %v1791, 96
    %v1793 = vpop.permute.xlu0 %1792
    %v1795 = vadd.f32 %v308, %v1793
    %v1796 = vadd.f32 %v310, %v1793
    %v1797 = vxor.u32 %v1795, 2147483648
    %v1798 = vxor.u32 %v1796, 2147483648
    %v1799 = vmul.f32 %v1797, 1.442695
    %v1800 = vpow.pop %v1799
    %v1801 = vmul.f32 %v1798, 1.442695
    %v1802 = vpow.pop %v1801
    %v1803 = vadd.f32 %v1800, 1.0
    %v1804 = vadd.f32 %v1802, 1.0
    %v1805 = vrcp.pop %v1803
    %v1806 = vmul.f32 1.0, %v1805
    %v1807 = vrcp.pop %v1804
    %v1808 = vmul.f32 1.0, %v1807
    %1809 = vrot.lane.b32.xlu0 %v1791, 32
    %v1810 = vpop.permute.xlu0 %1809
    %v1812 = vmul.f32 %v1806, %v1810
    %1814 = vrot.lane.b32.xlu0 %v1812, 64
    %v1815 = vpop.permute.xlu0 %1814
    %v1817 = vadd.f32 %v310, %v1815
    %v1818 = vtanh.pop %v1817
    %v1819 = vsub.f32 1.0, %v1808
    %1821 = vrot.lane.b32.xlu0 %v1818, 96
    %v1822 = vpop.permute.xlu0 %1821
    %v1824 = vmul.f32 %v1819, %v1822
    %v1825 = vrot.slane %v1613, 4
    %v1827 = vmul.f32 %v1808, %v1825
    %v1828 = vadd.f32 %v1824, %v1827
    %1830 = vrot.lane.b32.xlu0 %v1716, 96
    %v1831 = vpop.permute.xlu0 %1830
    %v1832 = vsel %vm228, %v1831, 0
    %1834 = vmatprep.subr.mxu0 0.0
    %1835 = vmatpush1.msra.mxu0 %v160
    %1836 = vmatprep.subr.mxu0 0.0
    %1837 = vmatpush1.msra.mxu0 %v161
    %1838 = vmatprep.subr.mxu0 0.0
    %1839 = vmatpush1.msra.mxu0 %v162
    %1840 = vmatprep.subr.mxu0 0.0
    %1841 = vmatpush1.msra.mxu0 %v163
    %1842 = vmatprep.subr.mxu0 0.0
    %1843 = vmatpush1.msra.mxu0 0.0
    %1844 = vmatprep.subr.mxu0 0.0
    %1845 = vmatpush1.msra.mxu0 0.0
    %1846 = vmatprep.subr.mxu0 0.0
    %1847 = vmatpush1.msra.mxu0 0.0
    %1848 = vmatprep.subr.mxu0 0.0
    %1849 = vmatpush1.msra.mxu0 0.0
    %1850 = vmatprep.subr.mxu0 0.0
    %1851 = vmatpush1.msra.mxu0 0.0
    %1852 = vmatprep.subr.mxu0 0.0
    %1853 = vmatpush1.msra.mxu0 0.0
    %1854 = vmatprep.subr.mxu0 0.0
    %1855 = vmatpush1.msra.mxu0 0.0
    %1856 = vmatprep.subr.mxu0 0.0
    %1857 = vmatpush1.msra.mxu0 0.0
    %1858 = vmatprep.subr.mxu0 0.0
    %1859 = vmatpush1.msra.mxu0 0.0
    %1860 = vmatprep.subr.mxu0 0.0
    %1861 = vmatpush1.msra.mxu0 0.0
    %1862 = vmatprep.subr.mxu0 0.0
    %1863 = vmatpush1.msra.mxu0 0.0
    %1864 = vmatprep.subr.mxu0 0.0
    %1865 = vmatpush1.msra.mxu0 0.0
    %1866 = vmatprep.subr.mxu0 0.0
    %1867 = vmatpush1.msra.mxu0 0.0
    %1868 = vmatprep.subr.mxu0 0.0
    %1869 = vmatpush1.msra.mxu0 0.0
    %1870 = vmatprep.subr.mxu0 0.0
    %1871 = vmatpush1.msra.mxu0 0.0
    %1872 = vmatprep.subr.mxu0 0.0
    %1873 = vmatpush1.msra.mxu0 0.0
    %1874 = vmatprep.subr.mxu0 0.0
    %1875 = vmatpush1.msra.mxu0 0.0
    %1876 = vmatprep.subr.mxu0 0.0
    %1877 = vmatpush1.msra.mxu0 0.0
    %1878 = vmatprep.subr.mxu0 0.0
    %1879 = vmatpush1.msra.mxu0 0.0
    %1880 = vmatprep.subr.mxu0 0.0
    %1881 = vmatpush1.msra.mxu0 0.0
    %1882 = vmatprep.subr.mxu0 0.0
    %1883 = vmatpush1.msra.mxu0 0.0
    %1884 = vmatprep.subr.mxu0 0.0
    %1885 = vmatpush1.msra.mxu0 0.0
    %1886 = vmatprep.subr.mxu0 0.0
    %1887 = vmatpush1.msra.mxu0 0.0
    %1888 = vmatprep.subr.mxu0 0.0
    %1889 = vmatpush1.msra.mxu0 0.0
    %1890 = vmatprep.subr.mxu0 0.0
    %1891 = vmatpush1.msra.mxu0 0.0
    %1892 = vmatprep.subr.mxu0 0.0
    %1893 = vmatpush1.msra.mxu0 0.0
    %1894 = vmatprep.subr.mxu0 0.0
    %1895 = vmatpush1.msra.mxu0 0.0
    %1896 = vmatprep.subr.mxu0 0.0
    %1897 = vmatpush1.msra.mxu0 0.0
    %1898 = vmatprep.mubr.f32.mxu0 0.0
    %1899 = vmatmul.mubr.f32.gmra.mrb[0].mxu0 %v1832
    %v1900 = vpop.f32.mrb[0].mxu0
    %v1901 = vadd.f32 %v181, %v1900
    %v1902 = vpop.f32.mrb[0].mxu0
    %1903 = vdwg.mxu0
    %v1905 = vrot.slane %v1901, 4
    %v1907 = vadd.f32 %v326, %v1905
    %v1908 = vxor.u32 %v1907, 2147483648
    %v1909 = vmul.f32 %v1908, 1.442695
    %v1910 = vpow.pop %v1909
    %v1911 = vadd.f32 %v1910, 1.0
    %v1912 = vrcp.pop %v1911
    %v1913 = vmul.f32 1.0, %v1912
    %1914 = vrot.lane.b32.xlu0 %v1905, 64
    %v1915 = vpop.permute.xlu0 %1914
    %v1917 = vmul.f32 %v1913, %v1915
    %1919 = vrot.lane.b32.xlu0 %v1917, 64
    %v1920 = vpop.permute.xlu0 %1919
    %v1922 = vadd.f32 %v326, %v1920
    %v1923 = vtanh.pop %v1922
    %v1924 = vsub.f32 1.0, %v1913
    %1926 = vrot.lane.b32.xlu0 %v1923, 96
    %v1927 = vpop.permute.xlu0 %1926
    %v1929 = vmul.f32 %v1924, %v1927
    %v1930 = vrot.slane %v1716, 4
    %v1932 = vmul.f32 %v1913, %v1930
    %v1933 = vadd.f32 %v1929, %v1932
    %v1935 = vrot.slane %v1828, 4
    %v1936 = vsel %vm228, %v1935, 0
    %1938 = vmatprep.subr.mxu0 0.0
    %1939 = vmatpush1.msra.mxu0 %v164
    %1940 = vmatprep.subr.mxu0 0.0
    %1941 = vmatpush1.msra.mxu0 %v165
    %1942 = vmatprep.subr.mxu0 0.0
    %1943 = vmatpush1.msra.mxu0 %v166
    %1944 = vmatprep.subr.mxu0 0.0
    %1945 = vmatpush1.msra.mxu0 %v167
    %1946 = vmatprep.subr.mxu0 0.0
    %1947 = vmatpush1.msra.mxu0 0.0
    %1948 = vmatprep.subr.mxu0 0.0
    %1949 = vmatpush1.msra.mxu0 0.0
    %1950 = vmatprep.subr.mxu0 0.0
    %1951 = vmatpush1.msra.mxu0 0.0
    %1952 = vmatprep.subr.mxu0 0.0
    %1953 = vmatpush1.msra.mxu0 0.0
    %1954 = vmatprep.subr.mxu0 0.0
    %1955 = vmatpush1.msra.mxu0 0.0
    %1956 = vmatprep.subr.mxu0 0.0
    %1957 = vmatpush1.msra.mxu0 0.0
    %1958 = vmatprep.subr.mxu0 0.0
    %1959 = vmatpush1.msra.mxu0 0.0
    %1960 = vmatprep.subr.mxu0 0.0
    %1961 = vmatpush1.msra.mxu0 0.0
    %1962 = vmatprep.subr.mxu0 0.0
    %1963 = vmatpush1.msra.mxu0 0.0
    %1964 = vmatprep.subr.mxu0 0.0
    %1965 = vmatpush1.msra.mxu0 0.0
    %1966 = vmatprep.subr.mxu0 0.0
    %1967 = vmatpush1.msra.mxu0 0.0
    %1968 = vmatprep.subr.mxu0 0.0
    %1969 = vmatpush1.msra.mxu0 0.0
    %1970 = vmatprep.subr.mxu0 0.0
    %1971 = vmatpush1.msra.mxu0 0.0
    %1972 = vmatprep.subr.mxu0 0.0
    %1973 = vmatpush1.msra.mxu0 0.0
    %1974 = vmatprep.subr.mxu0 0.0
    %1975 = vmatpush1.msra.mxu0 0.0
    %1976 = vmatprep.subr.mxu0 0.0
    %1977 = vmatpush1.msra.mxu0 0.0
    %1978 = vmatprep.subr.mxu0 0.0
    %1979 = vmatpush1.msra.mxu0 0.0
    %1980 = vmatprep.subr.mxu0 0.0
    %1981 = vmatpush1.msra.mxu0 0.0
    %1982 = vmatprep.subr.mxu0 0.0
    %1983 = vmatpush1.msra.mxu0 0.0
    %1984 = vmatprep.subr.mxu0 0.0
    %1985 = vmatpush1.msra.mxu0 0.0
    %1986 = vmatprep.subr.mxu0 0.0
    %1987 = vmatpush1.msra.mxu0 0.0
    %1988 = vmatprep.subr.mxu0 0.0
    %1989 = vmatpush1.msra.mxu0 0.0
    %1990 = vmatprep.subr.mxu0 0.0
    %1991 = vmatpush1.msra.mxu0 0.0
    %1992 = vmatprep.subr.mxu0 0.0
    %1993 = vmatpush1.msra.mxu0 0.0
    %1994 = vmatprep.subr.mxu0 0.0
    %1995 = vmatpush1.msra.mxu0 0.0
    %1996 = vmatprep.subr.mxu0 0.0
    %1997 = vmatpush1.msra.mxu0 0.0
    %1998 = vmatprep.subr.mxu0 0.0
    %1999 = vmatpush1.msra.mxu0 0.0
    %2000 = vmatprep.subr.mxu0 0.0
    %2001 = vmatpush1.msra.mxu0 0.0
    %2002 = vmatprep.mubr.f32.mxu0 0.0
    %2003 = vmatmul.mubr.f32.gmra.mrb[0].mxu0 %v1936
    %v2004 = vpop.f32.mrb[0].mxu0
    %v2005 = vadd.f32 %v188, %v2004
    %v2006 = vpop.f32.mrb[0].mxu0
    %2007 = vdwg.mxu0
    %2009 = vrot.lane.b32.xlu0 %v2005, 96
    %v2010 = vpop.permute.xlu0 %2009
    %v2012 = vadd.f32 %v308, %v2010
    %v2013 = vadd.f32 %v310, %v2010
    %v2014 = vxor.u32 %v2012, 2147483648
    %v2015 = vxor.u32 %v2013, 2147483648
    %v2016 = vmul.f32 %v2014, 1.442695
    %v2017 = vpow.pop %v2016
    %v2018 = vmul.f32 %v2015, 1.442695
    %v2019 = vpow.pop %v2018
    %v2020 = vadd.f32 %v2017, 1.0
    %v2021 = vadd.f32 %v2019, 1.0
    %v2022 = vrcp.pop %v2020
    %v2023 = vmul.f32 1.0, %v2022
    %v2024 = vrcp.pop %v2021
    %v2025 = vmul.f32 1.0, %v2024
    %2026 = vrot.lane.b32.xlu0 %v2005, 32
    %v2027 = vpop.permute.xlu0 %2026
    %v2029 = vmul.f32 %v2023, %v2027
    %2031 = vrot.lane.b32.xlu0 %v2029, 64
    %v2032 = vpop.permute.xlu0 %2031
    %v2034 = vadd.f32 %v310, %v2032
    %v2035 = vtanh.pop %v2034
    %v2036 = vsub.f32 1.0, %v2025
    %2038 = vrot.lane.b32.xlu0 %v2035, 96
    %v2039 = vpop.permute.xlu0 %2038
    %v2041 = vmul.f32 %v2036, %v2039
    %v2043 = vmul.f32 %v2025, %v1935
    %v2044 = vadd.f32 %v2041, %v2043
    %2047 = vrot.lane.b32.xlu0 %v2044, 32
    %v2048 = vpop.permute.xlu0 %2047
    %v2050 = vsel %vm228, %v538, %v2048
    %2051 = vrot.lane.b32.xlu0 %v640, 96
    %v2052 = vpop.permute.xlu0 %2051
    %2054 = vrot.lane.b32.xlu0 %v1828, 32
    %v2055 = vpop.permute.xlu0 %2054
    %v2057 = vsel %vm228, %v2052, %v2055
    %2059 = vrot.lane.b32.xlu0 %v1613, 32
    %v2060 = vpop.permute.xlu0 %2059
    %v2062 = vsel %vm228, %v969, %v2060
    %2063 = vrot.lane.b32.xlu0 %v1071, 96
    %v2064 = vpop.permute.xlu0 %2063
    %2066 = vrot.lane.b32.xlu0 %v1397, 32
    %v2067 = vpop.permute.xlu0 %2066
    %v2069 = vsel %vm228, %v2064, %v2067
    %2071 = vrot.lane.b32.xlu0 %v1182, 32
    %v2072 = vpop.permute.xlu0 %2071
    %v2074 = vsel %vm228, %v1400, %v2072
    %2075 = vrot.lane.b32.xlu0 %v1502, 96
    %v2076 = vpop.permute.xlu0 %2075
    %2078 = vrot.lane.b32.xlu0 %v966, 32
    %v2079 = vpop.permute.xlu0 %2078
    %v2081 = vsel %vm228, %v2076, %v2079
    %2083 = vrot.lane.b32.xlu0 %v751, 32
    %v2084 = vpop.permute.xlu0 %2083
    %v2086 = vsel %vm228, %v1831, %v2084
    %2088 = vrot.lane.b32.xlu0 %v1933, 96
    %v2089 = vpop.permute.xlu0 %2088
    %2091 = vrot.lane.b32.xlu0 %v535, 32
    %v2092 = vpop.permute.xlu0 %2091
    %v2094 = vsel %vm228, %v2089, %v2092
    %vm2095 = vcmask 1043456
    %v2096 = vsel %vm2095, %v2050, %v2057
    %v2097 = vsel %vm2095, %v2062, %v2069
    %v2098 = vsel %vm2095, %v2074, %v2081
    %v2099 = vsel %vm2095, %v2086, %v2094
    %v2100 = vld [vmem:[%s7] sm:$0xff]
    %v2101 = vld [vmem:[%s7 + $0x8] sm:$0xff]
    %v2102 = vld [vmem:[%s7 + $0x10] sm:$0xff]
    %v2103 = vld [vmem:[%s7 + $0x18] sm:$0xff]
    %v2104 = vld [vmem:[%s7 + $0x20] sm:$0xff]
    %v2105 = vld [vmem:[%s7 + $0x28] sm:$0xff]
    %v2106 = vld [vmem:[%s7 + $0x30] sm:$0xff]
    %v2107 = vld [vmem:[%s7 + $0x38] sm:$0xff]
    %v2108 = vld [vmem:[%s7 + $0x40] sm:$0xff]
    %v2109 = vld [vmem:[%s7 + $0x48] sm:$0xff]
    %v2110 = vld [vmem:[%s7 + $0x50] sm:$0xff]
    %v2111 = vld [vmem:[%s7 + $0x58] sm:$0xff]
    %v2112 = vld [vmem:[%s7 + $0x60] sm:$0xff]
    %v2113 = vld [vmem:[%s7 + $0x68] sm:$0xff]
    %v2114 = vld [vmem:[%s7 + $0x70] sm:$0xff]
    %v2115 = vld [vmem:[%s7 + $0x78] sm:$0xff]
    %v2116 = vld [vmem:[#allocation11] sm:$0x3]
    %v2118 = vlaneseq
    %v2119 = vshrl.u32 %v2118, 7
    %v2120 = vsub.s32 0, %v2119
    %v2121 = vrot.slane %v2116, %v2120
    %v2122 = vlaneseq
    %v2123 = vshrl.u32 %v2122, 7
    %v2124 = vsub.s32 1, %v2123
    %v2125 = vrot.slane %v2116, %v2124
    %vm2128 = vcmask 523264
    %v2130 = vsel %vm2128, %v2096, 0
    %v2133 = vsel %vm2128, %v2097, 0
    %v2136 = vsel %vm2128, %v2098, 0
    %v2139 = vsel %vm2128, %v2099, 0
    %2141 = vmatprep.subr.mxu0 %v2101
    %2142 = vmatpush1.msra.mxu0 %v2100
    %2143 = vmatprep.subr.mxu0 %v2103
    %2144 = vmatpush1.msra.mxu0 %v2102
    %2145 = vmatprep.subr.mxu0 %v2105
    %2146 = vmatpush1.msra.mxu0 %v2104
    %2147 = vmatprep.subr.mxu0 %v2107
    %2148 = vmatpush1.msra.mxu0 %v2106
    %2149 = vmatprep.subr.mxu0 %v2109
    %2150 = vmatpush1.msra.mxu0 %v2108
    %2151 = vmatprep.subr.mxu0 %v2111
    %2152 = vmatpush1.msra.mxu0 %v2110
    %2153 = vmatprep.subr.mxu0 %v2113
    %2154 = vmatpush1.msra.mxu0 %v2112
    %2155 = vmatprep.subr.mxu0 %v2115
    %2156 = vmatpush1.msra.mxu0 %v2114
    %2157 = vmatprep.subr.mxu0 0.0
    %2158 = vmatpush1.msra.mxu0 0.0
    %2159 = vmatprep.subr.mxu0 0.0
    %2160 = vmatpush1.msra.mxu0 0.0
    %2161 = vmatprep.subr.mxu0 0.0
    %2162 = vmatpush1.msra.mxu0 0.0
    %2163 = vmatprep.subr.mxu0 0.0
    %2164 = vmatpush1.msra.mxu0 0.0
    %2165 = vmatprep.subr.mxu0 0.0
    %2166 = vmatpush1.msra.mxu0 0.0
    %2167 = vmatprep.subr.mxu0 0.0
    %2168 = vmatpush1.msra.mxu0 0.0
    %2169 = vmatprep.subr.mxu0 0.0
    %2170 = vmatpush1.msra.mxu0 0.0
    %2171 = vmatprep.subr.mxu0 0.0
    %2172 = vmatpush1.msra.mxu0 0.0
    %2173 = vmatprep.subr.mxu0 0.0
    %2174 = vmatpush1.msra.mxu0 0.0
    %2175 = vmatprep.subr.mxu0 0.0
    %2176 = vmatpush1.msra.mxu0 0.0
    %2177 = vmatprep.subr.mxu0 0.0
    %2178 = vmatpush1.msra.mxu0 0.0
    %2179 = vmatprep.subr.mxu0 0.0
    %2180 = vmatpush1.msra.mxu0 0.0
    %2181 = vmatprep.subr.mxu0 0.0
    %2182 = vmatpush1.msra.mxu0 0.0
    %2183 = vmatprep.subr.mxu0 0.0
    %2184 = vmatpush1.msra.mxu0 0.0
    %2185 = vmatprep.subr.mxu0 0.0
    %2186 = vmatpush1.msra.mxu0 0.0
    %2187 = vmatprep.subr.mxu0 0.0
    %2188 = vmatpush1.msra.mxu0 0.0
    %2189 = vmatprep.subr.mxu0 0.0
    %2190 = vmatpush1.msra.mxu0 0.0
    %2191 = vmatprep.subr.mxu0 0.0
    %2192 = vmatpush1.msra.mxu0 0.0
    %2193 = vmatprep.subr.mxu0 0.0
    %2194 = vmatpush1.msra.mxu0 0.0
    %2195 = vmatprep.subr.mxu0 0.0
    %2196 = vmatpush1.msra.mxu0 0.0
    %2197 = vmatprep.subr.mxu0 0.0
    %2198 = vmatpush1.msra.mxu0 0.0
    %2199 = vmatprep.subr.mxu0 0.0
    %2200 = vmatpush1.msra.mxu0 0.0
    %2201 = vmatprep.subr.mxu0 0.0
    %2202 = vmatpush1.msra.mxu0 0.0
    %2203 = vmatprep.subr.mxu0 0.0
    %2204 = vmatpush1.msra.mxu0 0.0
    %2205 = vmatprep.mubr.f32.mxu0 0.0
    %2206 = vmatmul.mubr.f32.gmra.mrb[0].mxu0 %v2130
    %v2207 = vpop.f32.mrb[0].mxu0
    %v2208 = vadd.f32 %v2121, %v2207
    %v2209 = vpop.f32.mrb[0].mxu0
    %v2210 = vadd.f32 %v2125, %v2209
    %2211 = vmatprep.mubr.f32.mxu0 0.0
    %2212 = vmatmul.mubr.f32.gmra.mrb[0].mxu0 %v2133
    %v2213 = vpop.f32.mrb[0].mxu0
    %v2214 = vadd.f32 %v2121, %v2213
    %v2215 = vpop.f32.mrb[0].mxu0
    %v2216 = vadd.f32 %v2125, %v2215
    %2217 = vmatprep.mubr.f32.mxu0 0.0
    %2218 = vmatmul.mubr.f32.gmra.mrb[0].mxu0 %v2136
    %v2219 = vpop.f32.mrb[0].mxu0
    %v2220 = vadd.f32 %v2121, %v2219
    %v2221 = vpop.f32.mrb[0].mxu0
    %v2222 = vadd.f32 %v2125, %v2221
    %2223 = vmatprep.mubr.f32.mxu0 0.0
    %2224 = vmatmul.mubr.f32.gmra.mrb[0].mxu0 %v2139
    %v2225 = vpop.f32.mrb[0].mxu0
    %v2226 = vadd.f32 %v2121, %v2225
    %v2227 = vpop.f32.mrb[0].mxu0
    %v2228 = vadd.f32 %v2125, %v2227
    %2229 = vdwg.mxu0
    %2230 = vmatprep.subr.mxu0 0.0
    %2231 = vmatpush1.msra.mxu0 %v168
    %2232 = vmatprep.subr.mxu0 0.0
    %2233 = vmatpush1.msra.mxu0 %v169
    %2234 = vmatprep.subr.mxu0 0.0
    %2235 = vmatpush1.msra.mxu0 %v170
    %2236 = vmatprep.subr.mxu0 0.0
    %2237 = vmatpush1.msra.mxu0 %v171
    %2238 = vmatprep.subr.mxu0 0.0
    %2239 = vmatpush1.msra.mxu0 0.0
    %2240 = vmatprep.subr.mxu0 0.0
    %2241 = vmatpush1.msra.mxu0 0.0
    %2242 = vmatprep.subr.mxu0 0.0
    %2243 = vmatpush1.msra.mxu0 0.0
    %2244 = vmatprep.subr.mxu0 0.0
    %2245 = vmatpush1.msra.mxu0 0.0
    %2246 = vmatprep.subr.mxu0 0.0
    %2247 = vmatpush1.msra.mxu0 0.0
    %2248 = vmatprep.subr.mxu0 0.0
    %2249 = vmatpush1.msra.mxu0 0.0
    %2250 = vmatprep.subr.mxu0 0.0
    %2251 = vmatpush1.msra.mxu0 0.0
    %2252 = vmatprep.subr.mxu0 0.0
    %2253 = vmatpush1.msra.mxu0 0.0
    %2254 = vmatprep.subr.mxu0 0.0
    %2255 = vmatpush1.msra.mxu0 0.0
    %2256 = vmatprep.subr.mxu0 0.0
    %2257 = vmatpush1.msra.mxu0 0.0
    %2258 = vmatprep.subr.mxu0 0.0
    %2259 = vmatpush1.msra.mxu0 0.0
    %2260 = vmatprep.subr.mxu0 0.0
    %2261 = vmatpush1.msra.mxu0 0.0
    %2262 = vmatprep.subr.mxu0 0.0
    %2263 = vmatpush1.msra.mxu0 0.0
    %2264 = vmatprep.subr.mxu0 0.0
    %2265 = vmatpush1.msra.mxu0 0.0
    %2266 = vmatprep.subr.mxu0 0.0
    %2267 = vmatpush1.msra.mxu0 0.0
    %2268 = vmatprep.subr.mxu0 0.0
    %2269 = vmatpush1.msra.mxu0 0.0
    %2270 = vmatprep.subr.mxu0 0.0
    %2271 = vmatpush1.msra.mxu0 0.0
    %2272 = vmatprep.subr.mxu0 0.0
    %2273 = vmatpush1.msra.mxu0 0.0
    %2274 = vmatprep.subr.mxu0 0.0
    %2275 = vmatpush1.msra.mxu0 0.0
    %2276 = vmatprep.subr.mxu0 0.0
    %2277 = vmatpush1.msra.mxu0 0.0
    %2278 = vmatprep.subr.mxu0 0.0
    %2279 = vmatpush1.msra.mxu0 0.0
    %2280 = vmatprep.subr.mxu0 0.0
    %2281 = vmatpush1.msra.mxu0 0.0
    %2282 = vmatprep.subr.mxu0 0.0
    %2283 = vmatpush1.msra.mxu0 0.0
    %2284 = vmatprep.subr.mxu0 0.0
    %2285 = vmatpush1.msra.mxu0 0.0
    %2286 = vmatprep.subr.mxu0 0.0
    %2287 = vmatpush1.msra.mxu0 0.0
    %2288 = vmatprep.subr.mxu0 0.0
    %2289 = vmatpush1.msra.mxu0 0.0
    %2290 = vmatprep.subr.mxu0 0.0
    %2291 = vmatpush1.msra.mxu0 0.0
    %2292 = vmatprep.subr.mxu0 0.0
    %2293 = vmatpush1.msra.mxu0 0.0
    %2294 = vmatprep.mubr.f32.mxu0 0.0
    %2295 = vmatmul.mubr.f32.gmra.mrb[0].mxu0 %v331
    %v2296 = vpop.f32.mrb[0].mxu0
    %v2297 = vadd.f32 %v195, %v2296
    %v2298 = vpop.f32.mrb[0].mxu0
    %2299 = vdwg.mxu0
    %v2300 = vadd.f32 %v2208, %v2297
    %v2301 = vxor.u32 %v2300, 2147483648
    %v2302 = vmul.f32 %v2301, 1.442695
    %v2303 = vpow.pop %v2302
    %v2304 = vadd.f32 %v2303, 1.0
    %v2305 = vrcp.pop %v2304
    %v2306 = vmul.f32 1.0, %v2305
    %2308 = vrot.lane.b32.xlu0 %v2297, 64
    %v2309 = vpop.permute.xlu0 %2308
    %v2311 = vmul.f32 %v2306, %v2309
    %2313 = vrot.lane.b32.xlu0 %v2311, 64
    %v2314 = vpop.permute.xlu0 %2313
    %v2316 = vadd.f32 %v2208, %v2314
    %v2317 = vtanh.pop %v2316
    %v2318 = vsub.f32 1.0, %v2306
    %2320 = vrot.lane.b32.xlu0 %v2317, 96
    %v2321 = vpop.permute.xlu0 %2320
    %v2323 = vmul.f32 %v2318, %v2321
    %v2324 = vmul.f32 %v2306, 0.0
    %v2325 = vadd.f32 %v2323, %v2324
    %2326 = vmatprep.subr.mxu0 0.0
    %2327 = vmatpush1.msra.mxu0 %v172
    %2328 = vmatprep.subr.mxu0 0.0
    %2329 = vmatpush1.msra.mxu0 %v173
    %2330 = vmatprep.subr.mxu0 0.0
    %2331 = vmatpush1.msra.mxu0 %v174
    %2332 = vmatprep.subr.mxu0 0.0
    %2333 = vmatpush1.msra.mxu0 %v175
    %2334 = vmatprep.subr.mxu0 0.0
    %2335 = vmatpush1.msra.mxu0 0.0
    %2336 = vmatprep.subr.mxu0 0.0
    %2337 = vmatpush1.msra.mxu0 0.0
    %2338 = vmatprep.subr.mxu0 0.0
    %2339 = vmatpush1.msra.mxu0 0.0
    %2340 = vmatprep.subr.mxu0 0.0
    %2341 = vmatpush1.msra.mxu0 0.0
    %2342 = vmatprep.subr.mxu0 0.0
    %2343 = vmatpush1.msra.mxu0 0.0
    %2344 = vmatprep.subr.mxu0 0.0
    %2345 = vmatpush1.msra.mxu0 0.0
    %2346 = vmatprep.subr.mxu0 0.0
    %2347 = vmatpush1.msra.mxu0 0.0
    %2348 = vmatprep.subr.mxu0 0.0
    %2349 = vmatpush1.msra.mxu0 0.0
    %2350 = vmatprep.subr.mxu0 0.0
    %2351 = vmatpush1.msra.mxu0 0.0
    %2352 = vmatprep.subr.mxu0 0.0
    %2353 = vmatpush1.msra.mxu0 0.0
    %2354 = vmatprep.subr.mxu0 0.0
    %2355 = vmatpush1.msra.mxu0 0.0
    %2356 = vmatprep.subr.mxu0 0.0
    %2357 = vmatpush1.msra.mxu0 0.0
    %2358 = vmatprep.subr.mxu0 0.0
    %2359 = vmatpush1.msra.mxu0 0.0
    %2360 = vmatprep.subr.mxu0 0.0
    %2361 = vmatpush1.msra.mxu0 0.0
    %2362 = vmatprep.subr.mxu0 0.0
    %2363 = vmatpush1.msra.mxu0 0.0
    %2364 = vmatprep.subr.mxu0 0.0
    %2365 = vmatpush1.msra.mxu0 0.0
    %2366 = vmatprep.subr.mxu0 0.0
    %2367 = vmatpush1.msra.mxu0 0.0
    %2368 = vmatprep.subr.mxu0 0.0
    %2369 = vmatpush1.msra.mxu0 0.0
    %2370 = vmatprep.subr.mxu0 0.0
    %2371 = vmatpush1.msra.mxu0 0.0
    %2372 = vmatprep.subr.mxu0 0.0
    %2373 = vmatpush1.msra.mxu0 0.0
    %2374 = vmatprep.subr.mxu0 0.0
    %2375 = vmatpush1.msra.mxu0 0.0
    %2376 = vmatprep.subr.mxu0 0.0
    %2377 = vmatpush1.msra.mxu0 0.0
    %2378 = vmatprep.subr.mxu0 0.0
    %2379 = vmatpush1.msra.mxu0 0.0
    %2380 = vmatprep.subr.mxu0 0.0
    %2381 = vmatpush1.msra.mxu0 0.0
    %2382 = vmatprep.subr.mxu0 0.0
    %2383 = vmatpush1.msra.mxu0 0.0
    %2384 = vmatprep.subr.mxu0 0.0
    %2385 = vmatpush1.msra.mxu0 0.0
    %2386 = vmatprep.subr.mxu0 0.0
    %2387 = vmatpush1.msra.mxu0 0.0
    %2388 = vmatprep.subr.mxu0 0.0
    %2389 = vmatpush1.msra.mxu0 0.0
    %2390 = vmatprep.mubr.f32.mxu0 0.0
    %2391 = vmatmul.mubr.f32.gmra.mrb[0].mxu0 %v331
    %v2392 = vpop.f32.mrb[0].mxu0
    %v2393 = vadd.f32 %v202, %v2392
    %v2394 = vpop.f32.mrb[0].mxu0
    %2395 = vdwg.mxu0
    %v2397 = vrot.slane %v2393, 4
    %2398 = vrot.lane.b32.xlu0 %v2397, 96
    %v2399 = vpop.permute.xlu0 %2398
    %v2401 = vadd.f32 %v2226, %v2399
    %v2402 = vadd.f32 %v2228, %v2399
    %v2403 = vxor.u32 %v2401, 2147483648
    %v2404 = vxor.u32 %v2402, 2147483648
    %v2405 = vmul.f32 %v2403, 1.442695
    %v2406 = vpow.pop %v2405
    %v2407 = vmul.f32 %v2404, 1.442695
    %v2408 = vpow.pop %v2407
    %v2409 = vadd.f32 %v2406, 1.0
    %v2410 = vadd.f32 %v2408, 1.0
    %v2411 = vrcp.pop %v2409
    %v2412 = vmul.f32 1.0, %v2411
    %v2413 = vrcp.pop %v2410
    %v2414 = vmul.f32 1.0, %v2413
    %2415 = vrot.lane.b32.xlu0 %v2397, 32
    %v2416 = vpop.permute.xlu0 %2415
    %v2418 = vmul.f32 %v2412, %v2416
    %2420 = vrot.lane.b32.xlu0 %v2418, 64
    %v2421 = vpop.permute.xlu0 %2420
    %v2423 = vadd.f32 %v2228, %v2421
    %v2424 = vtanh.pop %v2423
    %v2425 = vsub.f32 1.0, %v2414
    %2427 = vrot.lane.b32.xlu0 %v2424, 96
    %v2428 = vpop.permute.xlu0 %2427
    %v2430 = vmul.f32 %v2425, %v2428
    %v2431 = vmul.f32 %v2414, 0.0
    %v2432 = vadd.f32 %v2430, %v2431
    %2434 = vrot.lane.b32.xlu0 %v2325, 96
    %v2435 = vpop.permute.xlu0 %2434
    %v2436 = vsel %vm228, %v2435, 0
    %2438 = vmatprep.subr.mxu0 0.0
    %2439 = vmatpush1.msra.mxu0 %v168
    %2440 = vmatprep.subr.mxu0 0.0
    %2441 = vmatpush1.msra.mxu0 %v169
    %2442 = vmatprep.subr.mxu0 0.0
    %2443 = vmatpush1.msra.mxu0 %v170
    %2444 = vmatprep.subr.mxu0 0.0
    %2445 = vmatpush1.msra.mxu0 %v171
    %2446 = vmatprep.subr.mxu0 0.0
    %2447 = vmatpush1.msra.mxu0 0.0
    %2448 = vmatprep.subr.mxu0 0.0
    %2449 = vmatpush1.msra.mxu0 0.0
    %2450 = vmatprep.subr.mxu0 0.0
    %2451 = vmatpush1.msra.mxu0 0.0
    %2452 = vmatprep.subr.mxu0 0.0
    %2453 = vmatpush1.msra.mxu0 0.0
    %2454 = vmatprep.subr.mxu0 0.0
    %2455 = vmatpush1.msra.mxu0 0.0
    %2456 = vmatprep.subr.mxu0 0.0
    %2457 = vmatpush1.msra.mxu0 0.0
    %2458 = vmatprep.subr.mxu0 0.0
    %2459 = vmatpush1.msra.mxu0 0.0
    %2460 = vmatprep.subr.mxu0 0.0
    %2461 = vmatpush1.msra.mxu0 0.0
    %2462 = vmatprep.subr.mxu0 0.0
    %2463 = vmatpush1.msra.mxu0 0.0
    %2464 = vmatprep.subr.mxu0 0.0
    %2465 = vmatpush1.msra.mxu0 0.0
    %2466 = vmatprep.subr.mxu0 0.0
    %2467 = vmatpush1.msra.mxu0 0.0
    %2468 = vmatprep.subr.mxu0 0.0
    %2469 = vmatpush1.msra.mxu0 0.0
    %2470 = vmatprep.subr.mxu0 0.0
    %2471 = vmatpush1.msra.mxu0 0.0
    %2472 = vmatprep.subr.mxu0 0.0
    %2473 = vmatpush1.msra.mxu0 0.0
    %2474 = vmatprep.subr.mxu0 0.0
    %2475 = vmatpush1.msra.mxu0 0.0
    %2476 = vmatprep.subr.mxu0 0.0
    %2477 = vmatpush1.msra.mxu0 0.0
    %2478 = vmatprep.subr.mxu0 0.0
    %2479 = vmatpush1.msra.mxu0 0.0
    %2480 = vmatprep.subr.mxu0 0.0
    %2481 = vmatpush1.msra.mxu0 0.0
    %2482 = vmatprep.subr.mxu0 0.0
    %2483 = vmatpush1.msra.mxu0 0.0
    %2484 = vmatprep.subr.mxu0 0.0
    %2485 = vmatpush1.msra.mxu0 0.0
    %2486 = vmatprep.subr.mxu0 0.0
    %2487 = vmatpush1.msra.mxu0 0.0
    %2488 = vmatprep.subr.mxu0 0.0
    %2489 = vmatpush1.msra.mxu0 0.0
    %2490 = vmatprep.subr.mxu0 0.0
    %2491 = vmatpush1.msra.mxu0 0.0
    %2492 = vmatprep.subr.mxu0 0.0
    %2493 = vmatpush1.msra.mxu0 0.0
    %2494 = vmatprep.subr.mxu0 0.0
    %2495 = vmatpush1.msra.mxu0 0.0
    %2496 = vmatprep.subr.mxu0 0.0
    %2497 = vmatpush1.msra.mxu0 0.0
    %2498 = vmatprep.subr.mxu0 0.0
    %2499 = vmatpush1.msra.mxu0 0.0
    %2500 = vmatprep.subr.mxu0 0.0
    %2501 = vmatpush1.msra.mxu0 0.0
    %2502 = vmatprep.mubr.f32.mxu0 0.0
    %2503 = vmatmul.mubr.f32.gmra.mrb[0].mxu0 %v2436
    %v2504 = vpop.f32.mrb[0].mxu0
    %v2505 = vadd.f32 %v195, %v2504
    %v2506 = vpop.f32.mrb[0].mxu0
    %2507 = vdwg.mxu0
    %v2509 = vrot.slane %v2505, 4
    %v2511 = vadd.f32 %v2208, %v2509
    %v2512 = vxor.u32 %v2511, 2147483648
    %v2513 = vmul.f32 %v2512, 1.442695
    %v2514 = vpow.pop %v2513
    %v2515 = vadd.f32 %v2514, 1.0
    %v2516 = vrcp.pop %v2515
    %v2517 = vmul.f32 1.0, %v2516
    %2518 = vrot.lane.b32.xlu0 %v2509, 64
    %v2519 = vpop.permute.xlu0 %2518
    %v2521 = vmul.f32 %v2517, %v2519
    %2523 = vrot.lane.b32.xlu0 %v2521, 64
    %v2524 = vpop.permute.xlu0 %2523
    %v2526 = vadd.f32 %v2208, %v2524
    %v2527 = vtanh.pop %v2526
    %v2528 = vsub.f32 1.0, %v2517
    %2530 = vrot.lane.b32.xlu0 %v2527, 96
    %v2531 = vpop.permute.xlu0 %2530
    %v2533 = vmul.f32 %v2528, %v2531
    %v2534 = vrot.slane %v2325, 4
    %v2536 = vmul.f32 %v2517, %v2534
    %v2537 = vadd.f32 %v2533, %v2536
    %v2539 = vrot.slane %v2432, 4
    %v2540 = vsel %vm228, %v2539, 0
    %2542 = vmatprep.subr.mxu0 0.0
    %2543 = vmatpush1.msra.mxu0 %v172
    %2544 = vmatprep.subr.mxu0 0.0
    %2545 = vmatpush1.msra.mxu0 %v173
    %2546 = vmatprep.subr.mxu0 0.0
    %2547 = vmatpush1.msra.mxu0 %v174
    %2548 = vmatprep.subr.mxu0 0.0
    %2549 = vmatpush1.msra.mxu0 %v175
    %2550 = vmatprep.subr.mxu0 0.0
    %2551 = vmatpush1.msra.mxu0 0.0
    %2552 = vmatprep.subr.mxu0 0.0
    %2553 = vmatpush1.msra.mxu0 0.0
    %2554 = vmatprep.subr.mxu0 0.0
    %2555 = vmatpush1.msra.mxu0 0.0
    %2556 = vmatprep.subr.mxu0 0.0
    %2557 = vmatpush1.msra.mxu0 0.0
    %2558 = vmatprep.subr.mxu0 0.0
    %2559 = vmatpush1.msra.mxu0 0.0
    %2560 = vmatprep.subr.mxu0 0.0
    %2561 = vmatpush1.msra.mxu0 0.0
    %2562 = vmatprep.subr.mxu0 0.0
    %2563 = vmatpush1.msra.mxu0 0.0
    %2564 = vmatprep.subr.mxu0 0.0
    %2565 = vmatpush1.msra.mxu0 0.0
    %2566 = vmatprep.subr.mxu0 0.0
    %2567 = vmatpush1.msra.mxu0 0.0
    %2568 = vmatprep.subr.mxu0 0.0
    %2569 = vmatpush1.msra.mxu0 0.0
    %2570 = vmatprep.subr.mxu0 0.0
    %2571 = vmatpush1.msra.mxu0 0.0
    %2572 = vmatprep.subr.mxu0 0.0
    %2573 = vmatpush1.msra.mxu0 0.0
    %2574 = vmatprep.subr.mxu0 0.0
    %2575 = vmatpush1.msra.mxu0 0.0
    %2576 = vmatprep.subr.mxu0 0.0
    %2577 = vmatpush1.msra.mxu0 0.0
    %2578 = vmatprep.subr.mxu0 0.0
    %2579 = vmatpush1.msra.mxu0 0.0
    %2580 = vmatprep.subr.mxu0 0.0
    %2581 = vmatpush1.msra.mxu0 0.0
    %2582 = vmatprep.subr.mxu0 0.0
    %2583 = vmatpush1.msra.mxu0 0.0
    %2584 = vmatprep.subr.mxu0 0.0
    %2585 = vmatpush1.msra.mxu0 0.0
    %2586 = vmatprep.subr.mxu0 0.0
    %2587 = vmatpush1.msra.mxu0 0.0
    %2588 = vmatprep.subr.mxu0 0.0
    %2589 = vmatpush1.msra.mxu0 0.0
    %2590 = vmatprep.subr.mxu0 0.0
    %2591 = vmatpush1.msra.mxu0 0.0
    %2592 = vmatprep.subr.mxu0 0.0
    %2593 = vmatpush1.msra.mxu0 0.0
    %2594 = vmatprep.subr.mxu0 0.0
    %2595 = vmatpush1.msra.mxu0 0.0
    %2596 = vmatprep.subr.mxu0 0.0
    %2597 = vmatpush1.msra.mxu0 0.0
    %2598 = vmatprep.subr.mxu0 0.0
    %2599 = vmatpush1.msra.mxu0 0.0
    %2600 = vmatprep.subr.mxu0 0.0
    %2601 = vmatpush1.msra.mxu0 0.0
    %2602 = vmatprep.subr.mxu0 0.0
    %2603 = vmatpush1.msra.mxu0 0.0
    %2604 = vmatprep.subr.mxu0 0.0
    %2605 = vmatpush1.msra.mxu0 0.0
    %2606 = vmatprep.mubr.f32.mxu0 0.0
    %2607 = vmatmul.mubr.f32.gmra.mrb[0].mxu0 %v2540
    %v2608 = vpop.f32.mrb[0].mxu0
    %v2609 = vadd.f32 %v202, %v2608
    %v2610 = vpop.f32.mrb[0].mxu0
    %2611 = vdwg.mxu0
    %2613 = vrot.lane.b32.xlu0 %v2609, 96
    %v2614 = vpop.permute.xlu0 %2613
    %v2616 = vadd.f32 %v2226, %v2614
    %v2617 = vadd.f32 %v2228, %v2614
    %v2618 = vxor.u32 %v2616, 2147483648
    %v2619 = vxor.u32 %v2617, 2147483648
    %v2620 = vmul.f32 %v2618, 1.442695
    %v2621 = vpow.pop %v2620
    %v2622 = vmul.f32 %v2619, 1.442695
    %v2623 = vpow.pop %v2622
    %v2624 = vadd.f32 %v2621, 1.0
    %v2625 = vadd.f32 %v2623, 1.0
    %v2626 = vrcp.pop %v2624
    %v2627 = vmul.f32 1.0, %v2626
    %v2628 = vrcp.pop %v2625
    %v2629 = vmul.f32 1.0, %v2628
    %2630 = vrot.lane.b32.xlu0 %v2609, 32
    %v2631 = vpop.permute.xlu0 %2630
    %v2633 = vmul.f32 %v2627, %v2631
    %2635 = vrot.lane.b32.xlu0 %v2633, 64
    %v2636 = vpop.permute.xlu0 %2635
    %v2638 = vadd.f32 %v2228, %v2636
    %v2639 = vtanh.pop %v2638
    %v2640 = vsub.f32 1.0, %v2629
    %2642 = vrot.lane.b32.xlu0 %v2639, 96
    %v2643 = vpop.permute.xlu0 %2642
    %v2645 = vmul.f32 %v2640, %v2643
    %v2647 = vmul.f32 %v2629, %v2539
    %v2648 = vadd.f32 %v2645, %v2647
    %v2650 = vrot.slane %v2537, 4
    %2651 = vrot.lane.b32.xlu0 %v2650, 96
    %v2652 = vpop.permute.xlu0 %2651
    %v2653 = vsel %vm228, %v2652, 0
    %2655 = vmatprep.subr.mxu0 0.0
    %2656 = vmatpush1.msra.mxu0 %v168
    %2657 = vmatprep.subr.mxu0 0.0
    %2658 = vmatpush1.msra.mxu0 %v169
    %2659 = vmatprep.subr.mxu0 0.0
    %2660 = vmatpush1.msra.mxu0 %v170
    %2661 = vmatprep.subr.mxu0 0.0
    %2662 = vmatpush1.msra.mxu0 %v171
    %2663 = vmatprep.subr.mxu0 0.0
    %2664 = vmatpush1.msra.mxu0 0.0
    %2665 = vmatprep.subr.mxu0 0.0
    %2666 = vmatpush1.msra.mxu0 0.0
    %2667 = vmatprep.subr.mxu0 0.0
    %2668 = vmatpush1.msra.mxu0 0.0
    %2669 = vmatprep.subr.mxu0 0.0
    %2670 = vmatpush1.msra.mxu0 0.0
    %2671 = vmatprep.subr.mxu0 0.0
    %2672 = vmatpush1.msra.mxu0 0.0
    %2673 = vmatprep.subr.mxu0 0.0
    %2674 = vmatpush1.msra.mxu0 0.0
    %2675 = vmatprep.subr.mxu0 0.0
    %2676 = vmatpush1.msra.mxu0 0.0
    %2677 = vmatprep.subr.mxu0 0.0
    %2678 = vmatpush1.msra.mxu0 0.0
    %2679 = vmatprep.subr.mxu0 0.0
    %2680 = vmatpush1.msra.mxu0 0.0
    %2681 = vmatprep.subr.mxu0 0.0
    %2682 = vmatpush1.msra.mxu0 0.0
    %2683 = vmatprep.subr.mxu0 0.0
    %2684 = vmatpush1.msra.mxu0 0.0
    %2685 = vmatprep.subr.mxu0 0.0
    %2686 = vmatpush1.msra.mxu0 0.0
    %2687 = vmatprep.subr.mxu0 0.0
    %2688 = vmatpush1.msra.mxu0 0.0
    %2689 = vmatprep.subr.mxu0 0.0
    %2690 = vmatpush1.msra.mxu0 0.0
    %2691 = vmatprep.subr.mxu0 0.0
    %2692 = vmatpush1.msra.mxu0 0.0
    %2693 = vmatprep.subr.mxu0 0.0
    %2694 = vmatpush1.msra.mxu0 0.0
    %2695 = vmatprep.subr.mxu0 0.0
    %2696 = vmatpush1.msra.mxu0 0.0
    %2697 = vmatprep.subr.mxu0 0.0
    %2698 = vmatpush1.msra.mxu0 0.0
    %2699 = vmatprep.subr.mxu0 0.0
    %2700 = vmatpush1.msra.mxu0 0.0
    %2701 = vmatprep.subr.mxu0 0.0
    %2702 = vmatpush1.msra.mxu0 0.0
    %2703 = vmatprep.subr.mxu0 0.0
    %2704 = vmatpush1.msra.mxu0 0.0
    %2705 = vmatprep.subr.mxu0 0.0
    %2706 = vmatpush1.msra.mxu0 0.0
    %2707 = vmatprep.subr.mxu0 0.0
    %2708 = vmatpush1.msra.mxu0 0.0
    %2709 = vmatprep.subr.mxu0 0.0
    %2710 = vmatpush1.msra.mxu0 0.0
    %2711 = vmatprep.subr.mxu0 0.0
    %2712 = vmatpush1.msra.mxu0 0.0
    %2713 = vmatprep.subr.mxu0 0.0
    %2714 = vmatpush1.msra.mxu0 0.0
    %2715 = vmatprep.subr.mxu0 0.0
    %2716 = vmatpush1.msra.mxu0 0.0
    %2717 = vmatprep.subr.mxu0 0.0
    %2718 = vmatpush1.msra.mxu0 0.0
    %2719 = vmatprep.mubr.f32.mxu0 0.0
    %2720 = vmatmul.mubr.f32.gmra.mrb[0].mxu0 %v2653
    %v2721 = vpop.f32.mrb[0].mxu0
    %v2722 = vadd.f32 %v195, %v2721
    %v2723 = vpop.f32.mrb[0].mxu0
    %2724 = vdwg.mxu0
    %v2725 = vadd.f32 %v2214, %v2722
    %v2726 = vxor.u32 %v2725, 2147483648
    %v2727 = vmul.f32 %v2726, 1.442695
    %v2728 = vpow.pop %v2727
    %v2729 = vadd.f32 %v2728, 1.0
    %v2730 = vrcp.pop %v2729
    %v2731 = vmul.f32 1.0, %v2730
    %2733 = vrot.lane.b32.xlu0 %v2722, 64
    %v2734 = vpop.permute.xlu0 %2733
    %v2736 = vmul.f32 %v2731, %v2734
    %2738 = vrot.lane.b32.xlu0 %v2736, 64
    %v2739 = vpop.permute.xlu0 %2738
    %v2741 = vadd.f32 %v2214, %v2739
    %v2742 = vtanh.pop %v2741
    %v2743 = vsub.f32 1.0, %v2731
    %2745 = vrot.lane.b32.xlu0 %v2742, 96
    %v2746 = vpop.permute.xlu0 %2745
    %v2748 = vmul.f32 %v2743, %v2746
    %v2750 = vmul.f32 %v2731, %v2650
    %v2751 = vadd.f32 %v2748, %v2750
    %v2753 = vsel %vm228, %v2648, 0
    %2755 = vmatprep.subr.mxu0 0.0
    %2756 = vmatpush1.msra.mxu0 %v172
    %2757 = vmatprep.subr.mxu0 0.0
    %2758 = vmatpush1.msra.mxu0 %v173
    %2759 = vmatprep.subr.mxu0 0.0
    %2760 = vmatpush1.msra.mxu0 %v174
    %2761 = vmatprep.subr.mxu0 0.0
    %2762 = vmatpush1.msra.mxu0 %v175
    %2763 = vmatprep.subr.mxu0 0.0
    %2764 = vmatpush1.msra.mxu0 0.0
    %2765 = vmatprep.subr.mxu0 0.0
    %2766 = vmatpush1.msra.mxu0 0.0
    %2767 = vmatprep.subr.mxu0 0.0
    %2768 = vmatpush1.msra.mxu0 0.0
    %2769 = vmatprep.subr.mxu0 0.0
    %2770 = vmatpush1.msra.mxu0 0.0
    %2771 = vmatprep.subr.mxu0 0.0
    %2772 = vmatpush1.msra.mxu0 0.0
    %2773 = vmatprep.subr.mxu0 0.0
    %2774 = vmatpush1.msra.mxu0 0.0
    %2775 = vmatprep.subr.mxu0 0.0
    %2776 = vmatpush1.msra.mxu0 0.0
    %2777 = vmatprep.subr.mxu0 0.0
    %2778 = vmatpush1.msra.mxu0 0.0
    %2779 = vmatprep.subr.mxu0 0.0
    %2780 = vmatpush1.msra.mxu0 0.0
    %2781 = vmatprep.subr.mxu0 0.0
    %2782 = vmatpush1.msra.mxu0 0.0
    %2783 = vmatprep.subr.mxu0 0.0
    %2784 = vmatpush1.msra.mxu0 0.0
    %2785 = vmatprep.subr.mxu0 0.0
    %2786 = vmatpush1.msra.mxu0 0.0
    %2787 = vmatprep.subr.mxu0 0.0
    %2788 = vmatpush1.msra.mxu0 0.0
    %2789 = vmatprep.subr.mxu0 0.0
    %2790 = vmatpush1.msra.mxu0 0.0
    %2791 = vmatprep.subr.mxu0 0.0
    %2792 = vmatpush1.msra.mxu0 0.0
    %2793 = vmatprep.subr.mxu0 0.0
    %2794 = vmatpush1.msra.mxu0 0.0
    %2795 = vmatprep.subr.mxu0 0.0
    %2796 = vmatpush1.msra.mxu0 0.0
    %2797 = vmatprep.subr.mxu0 0.0
    %2798 = vmatpush1.msra.mxu0 0.0
    %2799 = vmatprep.subr.mxu0 0.0
    %2800 = vmatpush1.msra.mxu0 0.0
    %2801 = vmatprep.subr.mxu0 0.0
    %2802 = vmatpush1.msra.mxu0 0.0
    %2803 = vmatprep.subr.mxu0 0.0
    %2804 = vmatpush1.msra.mxu0 0.0
    %2805 = vmatprep.subr.mxu0 0.0
    %2806 = vmatpush1.msra.mxu0 0.0
    %2807 = vmatprep.subr.mxu0 0.0
    %2808 = vmatpush1.msra.mxu0 0.0
    %2809 = vmatprep.subr.mxu0 0.0
    %2810 = vmatpush1.msra.mxu0 0.0
    %2811 = vmatprep.subr.mxu0 0.0
    %2812 = vmatpush1.msra.mxu0 0.0
    %2813 = vmatprep.subr.mxu0 0.0
    %2814 = vmatpush1.msra.mxu0 0.0
    %2815 = vmatprep.subr.mxu0 0.0
    %2816 = vmatpush1.msra.mxu0 0.0
    %2817 = vmatprep.subr.mxu0 0.0
    %2818 = vmatpush1.msra.mxu0 0.0
    %2819 = vmatprep.mubr.f32.mxu0 0.0
    %2820 = vmatmul.mubr.f32.gmra.mrb[0].mxu0 %v2753
    %v2821 = vpop.f32.mrb[0].mxu0
    %v2822 = vadd.f32 %v202, %v2821
    %v2823 = vpop.f32.mrb[0].mxu0
    %2824 = vdwg.mxu0
    %v2826 = vrot.slane %v2822, 4
    %2827 = vrot.lane.b32.xlu0 %v2826, 96
    %v2828 = vpop.permute.xlu0 %2827
    %v2830 = vadd.f32 %v2220, %v2828
    %v2831 = vadd.f32 %v2222, %v2828
    %v2832 = vxor.u32 %v2830, 2147483648
    %v2833 = vxor.u32 %v2831, 2147483648
    %v2834 = vmul.f32 %v2832, 1.442695
    %v2835 = vpow.pop %v2834
    %v2836 = vmul.f32 %v2833, 1.442695
    %v2837 = vpow.pop %v2836
    %v2838 = vadd.f32 %v2835, 1.0
    %v2839 = vadd.f32 %v2837, 1.0
    %v2840 = vrcp.pop %v2838
    %v2841 = vmul.f32 1.0, %v2840
    %v2842 = vrcp.pop %v2839
    %v2843 = vmul.f32 1.0, %v2842
    %2844 = vrot.lane.b32.xlu0 %v2826, 32
    %v2845 = vpop.permute.xlu0 %2844
    %v2847 = vmul.f32 %v2841, %v2845
    %2849 = vrot.lane.b32.xlu0 %v2847, 64
    %v2850 = vpop.permute.xlu0 %2849
    %v2852 = vadd.f32 %v2222, %v2850
    %v2853 = vtanh.pop %v2852
    %v2854 = vsub.f32 1.0, %v2843
    %2856 = vrot.lane.b32.xlu0 %v2853, 96
    %v2857 = vpop.permute.xlu0 %2856
    %v2859 = vmul.f32 %v2854, %v2857
    %v2860 = vrot.slane %v2648, 4
    %v2862 = vmul.f32 %v2843, %v2860
    %v2863 = vadd.f32 %v2859, %v2862
    %2865 = vrot.lane.b32.xlu0 %v2751, 96
    %v2866 = vpop.permute.xlu0 %2865
    %v2867 = vsel %vm228, %v2866, 0
    %2869 = vmatprep.subr.mxu0 0.0
    %2870 = vmatpush1.msra.mxu0 %v168
    %2871 = vmatprep.subr.mxu0 0.0
    %2872 = vmatpush1.msra.mxu0 %v169
    %2873 = vmatprep.subr.mxu0 0.0
    %2874 = vmatpush1.msra.mxu0 %v170
    %2875 = vmatprep.subr.mxu0 0.0
    %2876 = vmatpush1.msra.mxu0 %v171
    %2877 = vmatprep.subr.mxu0 0.0
    %2878 = vmatpush1.msra.mxu0 0.0
    %2879 = vmatprep.subr.mxu0 0.0
    %2880 = vmatpush1.msra.mxu0 0.0
    %2881 = vmatprep.subr.mxu0 0.0
    %2882 = vmatpush1.msra.mxu0 0.0
    %2883 = vmatprep.subr.mxu0 0.0
    %2884 = vmatpush1.msra.mxu0 0.0
    %2885 = vmatprep.subr.mxu0 0.0
    %2886 = vmatpush1.msra.mxu0 0.0
    %2887 = vmatprep.subr.mxu0 0.0
    %2888 = vmatpush1.msra.mxu0 0.0
    %2889 = vmatprep.subr.mxu0 0.0
    %2890 = vmatpush1.msra.mxu0 0.0
    %2891 = vmatprep.subr.mxu0 0.0
    %2892 = vmatpush1.msra.mxu0 0.0
    %2893 = vmatprep.subr.mxu0 0.0
    %2894 = vmatpush1.msra.mxu0 0.0
    %2895 = vmatprep.subr.mxu0 0.0
    %2896 = vmatpush1.msra.mxu0 0.0
    %2897 = vmatprep.subr.mxu0 0.0
    %2898 = vmatpush1.msra.mxu0 0.0
    %2899 = vmatprep.subr.mxu0 0.0
    %2900 = vmatpush1.msra.mxu0 0.0
    %2901 = vmatprep.subr.mxu0 0.0
    %2902 = vmatpush1.msra.mxu0 0.0
    %2903 = vmatprep.subr.mxu0 0.0
    %2904 = vmatpush1.msra.mxu0 0.0
    %2905 = vmatprep.subr.mxu0 0.0
    %2906 = vmatpush1.msra.mxu0 0.0
    %2907 = vmatprep.subr.mxu0 0.0
    %2908 = vmatpush1.msra.mxu0 0.0
    %2909 = vmatprep.subr.mxu0 0.0
    %2910 = vmatpush1.msra.mxu0 0.0
    %2911 = vmatprep.subr.mxu0 0.0
    %2912 = vmatpush1.msra.mxu0 0.0
    %2913 = vmatprep.subr.mxu0 0.0
    %2914 = vmatpush1.msra.mxu0 0.0
    %2915 = vmatprep.subr.mxu0 0.0
    %2916 = vmatpush1.msra.mxu0 0.0
    %2917 = vmatprep.subr.mxu0 0.0
    %2918 = vmatpush1.msra.mxu0 0.0
    %2919 = vmatprep.subr.mxu0 0.0
    %2920 = vmatpush1.msra.mxu0 0.0
    %2921 = vmatprep.subr.mxu0 0.0
    %2922 = vmatpush1.msra.mxu0 0.0
    %2923 = vmatprep.subr.mxu0 0.0
    %2924 = vmatpush1.msra.mxu0 0.0
    %2925 = vmatprep.subr.mxu0 0.0
    %2926 = vmatpush1.msra.mxu0 0.0
    %2927 = vmatprep.subr.mxu0 0.0
    %2928 = vmatpush1.msra.mxu0 0.0
    %2929 = vmatprep.subr.mxu0 0.0
    %2930 = vmatpush1.msra.mxu0 0.0
    %2931 = vmatprep.subr.mxu0 0.0
    %2932 = vmatpush1.msra.mxu0 0.0
    %2933 = vmatprep.mubr.f32.mxu0 0.0
    %2934 = vmatmul.mubr.f32.gmra.mrb[0].mxu0 %v2867
    %v2935 = vpop.f32.mrb[0].mxu0
    %v2936 = vadd.f32 %v195, %v2935
    %v2937 = vpop.f32.mrb[0].mxu0
    %2938 = vdwg.mxu0
    %v2940 = vrot.slane %v2936, 4
    %v2942 = vadd.f32 %v2214, %v2940
    %v2943 = vxor.u32 %v2942, 2147483648
    %v2944 = vmul.f32 %v2943, 1.442695
    %v2945 = vpow.pop %v2944
    %v2946 = vadd.f32 %v2945, 1.0
    %v2947 = vrcp.pop %v2946
    %v2948 = vmul.f32 1.0, %v2947
    %2949 = vrot.lane.b32.xlu0 %v2940, 64
    %v2950 = vpop.permute.xlu0 %2949
    %v2952 = vmul.f32 %v2948, %v2950
    %2954 = vrot.lane.b32.xlu0 %v2952, 64
    %v2955 = vpop.permute.xlu0 %2954
    %v2957 = vadd.f32 %v2214, %v2955
    %v2958 = vtanh.pop %v2957
    %v2959 = vsub.f32 1.0, %v2948
    %2961 = vrot.lane.b32.xlu0 %v2958, 96
    %v2962 = vpop.permute.xlu0 %2961
    %v2964 = vmul.f32 %v2959, %v2962
    %v2965 = vrot.slane %v2751, 4
    %v2967 = vmul.f32 %v2948, %v2965
    %v2968 = vadd.f32 %v2964, %v2967
    %v2970 = vrot.slane %v2863, 4
    %v2971 = vsel %vm228, %v2970, 0
    %2973 = vmatprep.subr.mxu0 0.0
    %2974 = vmatpush1.msra.mxu0 %v172
    %2975 = vmatprep.subr.mxu0 0.0
    %2976 = vmatpush1.msra.mxu0 %v173
    %2977 = vmatprep.subr.mxu0 0.0
    %2978 = vmatpush1.msra.mxu0 %v174
    %2979 = vmatprep.subr.mxu0 0.0
    %2980 = vmatpush1.msra.mxu0 %v175
    %2981 = vmatprep.subr.mxu0 0.0
    %2982 = vmatpush1.msra.mxu0 0.0
    %2983 = vmatprep.subr.mxu0 0.0
    %2984 = vmatpush1.msra.mxu0 0.0
    %2985 = vmatprep.subr.mxu0 0.0
    %2986 = vmatpush1.msra.mxu0 0.0
    %2987 = vmatprep.subr.mxu0 0.0
    %2988 = vmatpush1.msra.mxu0 0.0
    %2989 = vmatprep.subr.mxu0 0.0
    %2990 = vmatpush1.msra.mxu0 0.0
    %2991 = vmatprep.subr.mxu0 0.0
    %2992 = vmatpush1.msra.mxu0 0.0
    %2993 = vmatprep.subr.mxu0 0.0
    %2994 = vmatpush1.msra.mxu0 0.0
    %2995 = vmatprep.subr.mxu0 0.0
    %2996 = vmatpush1.msra.mxu0 0.0
    %2997 = vmatprep.subr.mxu0 0.0
    %2998 = vmatpush1.msra.mxu0 0.0
    %2999 = vmatprep.subr.mxu0 0.0
    %3000 = vmatpush1.msra.mxu0 0.0
    %3001 = vmatprep.subr.mxu0 0.0
    %3002 = vmatpush1.msra.mxu0 0.0
    %3003 = vmatprep.subr.mxu0 0.0
    %3004 = vmatpush1.msra.mxu0 0.0
    %3005 = vmatprep.subr.mxu0 0.0
    %3006 = vmatpush1.msra.mxu0 0.0
    %3007 = vmatprep.subr.mxu0 0.0
    %3008 = vmatpush1.msra.mxu0 0.0
    %3009 = vmatprep.subr.mxu0 0.0
    %3010 = vmatpush1.msra.mxu0 0.0
    %3011 = vmatprep.subr.mxu0 0.0
    %3012 = vmatpush1.msra.mxu0 0.0
    %3013 = vmatprep.subr.mxu0 0.0
    %3014 = vmatpush1.msra.mxu0 0.0
    %3015 = vmatprep.subr.mxu0 0.0
    %3016 = vmatpush1.msra.mxu0 0.0
    %3017 = vmatprep.subr.mxu0 0.0
    %3018 = vmatpush1.msra.mxu0 0.0
    %3019 = vmatprep.subr.mxu0 0.0
    %3020 = vmatpush1.msra.mxu0 0.0
    %3021 = vmatprep.subr.mxu0 0.0
    %3022 = vmatpush1.msra.mxu0 0.0
    %3023 = vmatprep.subr.mxu0 0.0
    %3024 = vmatpush1.msra.mxu0 0.0
    %3025 = vmatprep.subr.mxu0 0.0
    %3026 = vmatpush1.msra.mxu0 0.0
    %3027 = vmatprep.subr.mxu0 0.0
    %3028 = vmatpush1.msra.mxu0 0.0
    %3029 = vmatprep.subr.mxu0 0.0
    %3030 = vmatpush1.msra.mxu0 0.0
    %3031 = vmatprep.subr.mxu0 0.0
    %3032 = vmatpush1.msra.mxu0 0.0
    %3033 = vmatprep.subr.mxu0 0.0
    %3034 = vmatpush1.msra.mxu0 0.0
    %3035 = vmatprep.subr.mxu0 0.0
    %3036 = vmatpush1.msra.mxu0 0.0
    %3037 = vmatprep.mubr.f32.mxu0 0.0
    %3038 = vmatmul.mubr.f32.gmra.mrb[0].mxu0 %v2971
    %v3039 = vpop.f32.mrb[0].mxu0
    %v3040 = vadd.f32 %v202, %v3039
    %v3041 = vpop.f32.mrb[0].mxu0
    %3042 = vdwg.mxu0
    %3044 = vrot.lane.b32.xlu0 %v3040, 96
    %v3045 = vpop.permute.xlu0 %3044
    %v3047 = vadd.f32 %v2220, %v3045
    %v3048 = vadd.f32 %v2222, %v3045
    %v3049 = vxor.u32 %v3047, 2147483648
    %v3050 = vxor.u32 %v3048, 2147483648
    %v3051 = vmul.f32 %v3049, 1.442695
    %v3052 = vpow.pop %v3051
    %v3053 = vmul.f32 %v3050, 1.442695
    %v3054 = vpow.pop %v3053
    %v3055 = vadd.f32 %v3052, 1.0
    %v3056 = vadd.f32 %v3054, 1.0
    %v3057 = vrcp.pop %v3055
    %v3058 = vmul.f32 1.0, %v3057
    %v3059 = vrcp.pop %v3056
    %v3060 = vmul.f32 1.0, %v3059
    %3061 = vrot.lane.b32.xlu0 %v3040, 32
    %v3062 = vpop.permute.xlu0 %3061
    %v3064 = vmul.f32 %v3058, %v3062
    %3066 = vrot.lane.b32.xlu0 %v3064, 64
    %v3067 = vpop.permute.xlu0 %3066
    %v3069 = vadd.f32 %v2222, %v3067
    %v3070 = vtanh.pop %v3069
    %v3071 = vsub.f32 1.0, %v3060
    %3073 = vrot.lane.b32.xlu0 %v3070, 96
    %v3074 = vpop.permute.xlu0 %3073
    %v3076 = vmul.f32 %v3071, %v3074
    %v3078 = vmul.f32 %v3060, %v2970
    %v3079 = vadd.f32 %v3076, %v3078
    %v3081 = vrot.slane %v2968, 4
    %3082 = vrot.lane.b32.xlu0 %v3081, 96
    %v3083 = vpop.permute.xlu0 %3082
    %v3084 = vsel %vm228, %v3083, 0
    %3086 = vmatprep.subr.mxu0 0.0
    %3087 = vmatpush1.msra.mxu0 %v168
    %3088 = vmatprep.subr.mxu0 0.0
    %3089 = vmatpush1.msra.mxu0 %v169
    %3090 = vmatprep.subr.mxu0 0.0
    %3091 = vmatpush1.msra.mxu0 %v170
    %3092 = vmatprep.subr.mxu0 0.0
    %3093 = vmatpush1.msra.mxu0 %v171
    %3094 = vmatprep.subr.mxu0 0.0
    %3095 = vmatpush1.msra.mxu0 0.0
    %3096 = vmatprep.subr.mxu0 0.0
    %3097 = vmatpush1.msra.mxu0 0.0
    %3098 = vmatprep.subr.mxu0 0.0
    %3099 = vmatpush1.msra.mxu0 0.0
    %3100 = vmatprep.subr.mxu0 0.0
    %3101 = vmatpush1.msra.mxu0 0.0
    %3102 = vmatprep.subr.mxu0 0.0
    %3103 = vmatpush1.msra.mxu0 0.0
    %3104 = vmatprep.subr.mxu0 0.0
    %3105 = vmatpush1.msra.mxu0 0.0
    %3106 = vmatprep.subr.mxu0 0.0
    %3107 = vmatpush1.msra.mxu0 0.0
    %3108 = vmatprep.subr.mxu0 0.0
    %3109 = vmatpush1.msra.mxu0 0.0
    %3110 = vmatprep.subr.mxu0 0.0
    %3111 = vmatpush1.msra.mxu0 0.0
    %3112 = vmatprep.subr.mxu0 0.0
    %3113 = vmatpush1.msra.mxu0 0.0
    %3114 = vmatprep.subr.mxu0 0.0
    %3115 = vmatpush1.msra.mxu0 0.0
    %3116 = vmatprep.subr.mxu0 0.0
    %3117 = vmatpush1.msra.mxu0 0.0
    %3118 = vmatprep.subr.mxu0 0.0
    %3119 = vmatpush1.msra.mxu0 0.0
    %3120 = vmatprep.subr.mxu0 0.0
    %3121 = vmatpush1.msra.mxu0 0.0
    %3122 = vmatprep.subr.mxu0 0.0
    %3123 = vmatpush1.msra.mxu0 0.0
    %3124 = vmatprep.subr.mxu0 0.0
    %3125 = vmatpush1.msra.mxu0 0.0
    %3126 = vmatprep.subr.mxu0 0.0
    %3127 = vmatpush1.msra.mxu0 0.0
    %3128 = vmatprep.subr.mxu0 0.0
    %3129 = vmatpush1.msra.mxu0 0.0
    %3130 = vmatprep.subr.mxu0 0.0
    %3131 = vmatpush1.msra.mxu0 0.0
    %3132 = vmatprep.subr.mxu0 0.0
    %3133 = vmatpush1.msra.mxu0 0.0
    %3134 = vmatprep.subr.mxu0 0.0
    %3135 = vmatpush1.msra.mxu0 0.0
    %3136 = vmatprep.subr.mxu0 0.0
    %3137 = vmatpush1.msra.mxu0 0.0
    %3138 = vmatprep.subr.mxu0 0.0
    %3139 = vmatpush1.msra.mxu0 0.0
    %3140 = vmatprep.subr.mxu0 0.0
    %3141 = vmatpush1.msra.mxu0 0.0
    %3142 = vmatprep.subr.mxu0 0.0
    %3143 = vmatpush1.msra.mxu0 0.0
    %3144 = vmatprep.subr.mxu0 0.0
    %3145 = vmatpush1.msra.mxu0 0.0
    %3146 = vmatprep.subr.mxu0 0.0
    %3147 = vmatpush1.msra.mxu0 0.0
    %3148 = vmatprep.subr.mxu0 0.0
    %3149 = vmatpush1.msra.mxu0 0.0
    %3150 = vmatprep.mubr.f32.mxu0 0.0
    %3151 = vmatmul.mubr.f32.gmra.mrb[0].mxu0 %v3084
    %v3152 = vpop.f32.mrb[0].mxu0
    %v3153 = vadd.f32 %v195, %v3152
    %v3154 = vpop.f32.mrb[0].mxu0
    %3155 = vdwg.mxu0
    %v3156 = vadd.f32 %v2220, %v3153
    %v3157 = vxor.u32 %v3156, 2147483648
    %v3158 = vmul.f32 %v3157, 1.442695
    %v3159 = vpow.pop %v3158
    %v3160 = vadd.f32 %v3159, 1.0
    %v3161 = vrcp.pop %v3160
    %v3162 = vmul.f32 1.0, %v3161
    %3164 = vrot.lane.b32.xlu0 %v3153, 64
    %v3165 = vpop.permute.xlu0 %3164
    %v3167 = vmul.f32 %v3162, %v3165
    %3169 = vrot.lane.b32.xlu0 %v3167, 64
    %v3170 = vpop.permute.xlu0 %3169
    %v3172 = vadd.f32 %v2220, %v3170
    %v3173 = vtanh.pop %v3172
    %v3174 = vsub.f32 1.0, %v3162
    %3176 = vrot.lane.b32.xlu0 %v3173, 96
    %v3177 = vpop.permute.xlu0 %3176
    %v3179 = vmul.f32 %v3174, %v3177
    %v3181 = vmul.f32 %v3162, %v3081
    %v3182 = vadd.f32 %v3179, %v3181
    %v3184 = vsel %vm228, %v3079, 0
    %3186 = vmatprep.subr.mxu0 0.0
    %3187 = vmatpush1.msra.mxu0 %v172
    %3188 = vmatprep.subr.mxu0 0.0
    %3189 = vmatpush1.msra.mxu0 %v173
    %3190 = vmatprep.subr.mxu0 0.0
    %3191 = vmatpush1.msra.mxu0 %v174
    %3192 = vmatprep.subr.mxu0 0.0
    %3193 = vmatpush1.msra.mxu0 %v175
    %3194 = vmatprep.subr.mxu0 0.0
    %3195 = vmatpush1.msra.mxu0 0.0
    %3196 = vmatprep.subr.mxu0 0.0
    %3197 = vmatpush1.msra.mxu0 0.0
    %3198 = vmatprep.subr.mxu0 0.0
    %3199 = vmatpush1.msra.mxu0 0.0
    %3200 = vmatprep.subr.mxu0 0.0
    %3201 = vmatpush1.msra.mxu0 0.0
    %3202 = vmatprep.subr.mxu0 0.0
    %3203 = vmatpush1.msra.mxu0 0.0
    %3204 = vmatprep.subr.mxu0 0.0
    %3205 = vmatpush1.msra.mxu0 0.0
    %3206 = vmatprep.subr.mxu0 0.0
    %3207 = vmatpush1.msra.mxu0 0.0
    %3208 = vmatprep.subr.mxu0 0.0
    %3209 = vmatpush1.msra.mxu0 0.0
    %3210 = vmatprep.subr.mxu0 0.0
    %3211 = vmatpush1.msra.mxu0 0.0
    %3212 = vmatprep.subr.mxu0 0.0
    %3213 = vmatpush1.msra.mxu0 0.0
    %3214 = vmatprep.subr.mxu0 0.0
    %3215 = vmatpush1.msra.mxu0 0.0
    %3216 = vmatprep.subr.mxu0 0.0
    %3217 = vmatpush1.msra.mxu0 0.0
    %3218 = vmatprep.subr.mxu0 0.0
    %3219 = vmatpush1.msra.mxu0 0.0
    %3220 = vmatprep.subr.mxu0 0.0
    %3221 = vmatpush1.msra.mxu0 0.0
    %3222 = vmatprep.subr.mxu0 0.0
    %3223 = vmatpush1.msra.mxu0 0.0
    %3224 = vmatprep.subr.mxu0 0.0
    %3225 = vmatpush1.msra.mxu0 0.0
    %3226 = vmatprep.subr.mxu0 0.0
    %3227 = vmatpush1.msra.mxu0 0.0
    %3228 = vmatprep.subr.mxu0 0.0
    %3229 = vmatpush1.msra.mxu0 0.0
    %3230 = vmatprep.subr.mxu0 0.0
    %3231 = vmatpush1.msra.mxu0 0.0
    %3232 = vmatprep.subr.mxu0 0.0
    %3233 = vmatpush1.msra.mxu0 0.0
    %3234 = vmatprep.subr.mxu0 0.0
    %3235 = vmatpush1.msra.mxu0 0.0
    %3236 = vmatprep.subr.mxu0 0.0
    %3237 = vmatpush1.msra.mxu0 0.0
    %3238 = vmatprep.subr.mxu0 0.0
    %3239 = vmatpush1.msra.mxu0 0.0
    %3240 = vmatprep.subr.mxu0 0.0
    %3241 = vmatpush1.msra.mxu0 0.0
    %3242 = vmatprep.subr.mxu0 0.0
    %3243 = vmatpush1.msra.mxu0 0.0
    %3244 = vmatprep.subr.mxu0 0.0
    %3245 = vmatpush1.msra.mxu0 0.0
    %3246 = vmatprep.subr.mxu0 0.0
    %3247 = vmatpush1.msra.mxu0 0.0
    %3248 = vmatprep.subr.mxu0 0.0
    %3249 = vmatpush1.msra.mxu0 0.0
    %3250 = vmatprep.mubr.f32.mxu0 0.0
    %3251 = vmatmul.mubr.f32.gmra.mrb[0].mxu0 %v3184
    %v3252 = vpop.f32.mrb[0].mxu0
    %v3253 = vadd.f32 %v202, %v3252
    %v3254 = vpop.f32.mrb[0].mxu0
    %3255 = vdwg.mxu0
    %v3257 = vrot.slane %v3253, 4
    %3258 = vrot.lane.b32.xlu0 %v3257, 96
    %v3259 = vpop.permute.xlu0 %3258
    %v3261 = vadd.f32 %v2214, %v3259
    %v3262 = vadd.f32 %v2216, %v3259
    %v3263 = vxor.u32 %v3261, 2147483648
    %v3264 = vxor.u32 %v3262, 2147483648
    %v3265 = vmul.f32 %v3263, 1.442695
    %v3266 = vpow.pop %v3265
    %v3267 = vmul.f32 %v3264, 1.442695
    %v3268 = vpow.pop %v3267
    %v3269 = vadd.f32 %v3266, 1.0
    %v3270 = vadd.f32 %v3268, 1.0
    %v3271 = vrcp.pop %v3269
    %v3272 = vmul.f32 1.0, %v3271
    %v3273 = vrcp.pop %v3270
    %v3274 = vmul.f32 1.0, %v3273
    %3275 = vrot.lane.b32.xlu0 %v3257, 32
    %v3276 = vpop.permute.xlu0 %3275
    %v3278 = vmul.f32 %v3272, %v3276
    %3280 = vrot.lane.b32.xlu0 %v3278, 64
    %v3281 = vpop.permute.xlu0 %3280
    %v3283 = vadd.f32 %v2216, %v3281
    %v3284 = vtanh.pop %v3283
    %v3285 = vsub.f32 1.0, %v3274
    %3287 = vrot.lane.b32.xlu0 %v3284, 96
    %v3288 = vpop.permute.xlu0 %3287
    %v3290 = vmul.f32 %v3285, %v3288
    %v3291 = vrot.slane %v3079, 4
    %v3293 = vmul.f32 %v3274, %v3291
    %v3294 = vadd.f32 %v3290, %v3293
    %3296 = vrot.lane.b32.xlu0 %v3182, 96
    %v3297 = vpop.permute.xlu0 %3296
    %v3298 = vsel %vm228, %v3297, 0
    %3300 = vmatprep.subr.mxu0 0.0
    %3301 = vmatpush1.msra.mxu0 %v168
    %3302 = vmatprep.subr.mxu0 0.0
    %3303 = vmatpush1.msra.mxu0 %v169
    %3304 = vmatprep.subr.mxu0 0.0
    %3305 = vmatpush1.msra.mxu0 %v170
    %3306 = vmatprep.subr.mxu0 0.0
    %3307 = vmatpush1.msra.mxu0 %v171
    %3308 = vmatprep.subr.mxu0 0.0
    %3309 = vmatpush1.msra.mxu0 0.0
    %3310 = vmatprep.subr.mxu0 0.0
    %3311 = vmatpush1.msra.mxu0 0.0
    %3312 = vmatprep.subr.mxu0 0.0
    %3313 = vmatpush1.msra.mxu0 0.0
    %3314 = vmatprep.subr.mxu0 0.0
    %3315 = vmatpush1.msra.mxu0 0.0
    %3316 = vmatprep.subr.mxu0 0.0
    %3317 = vmatpush1.msra.mxu0 0.0
    %3318 = vmatprep.subr.mxu0 0.0
    %3319 = vmatpush1.msra.mxu0 0.0
    %3320 = vmatprep.subr.mxu0 0.0
    %3321 = vmatpush1.msra.mxu0 0.0
    %3322 = vmatprep.subr.mxu0 0.0
    %3323 = vmatpush1.msra.mxu0 0.0
    %3324 = vmatprep.subr.mxu0 0.0
    %3325 = vmatpush1.msra.mxu0 0.0
    %3326 = vmatprep.subr.mxu0 0.0
    %3327 = vmatpush1.msra.mxu0 0.0
    %3328 = vmatprep.subr.mxu0 0.0
    %3329 = vmatpush1.msra.mxu0 0.0
    %3330 = vmatprep.subr.mxu0 0.0
    %3331 = vmatpush1.msra.mxu0 0.0
    %3332 = vmatprep.subr.mxu0 0.0
    %3333 = vmatpush1.msra.mxu0 0.0
    %3334 = vmatprep.subr.mxu0 0.0
    %3335 = vmatpush1.msra.mxu0 0.0
    %3336 = vmatprep.subr.mxu0 0.0
    %3337 = vmatpush1.msra.mxu0 0.0
    %3338 = vmatprep.subr.mxu0 0.0
    %3339 = vmatpush1.msra.mxu0 0.0
    %3340 = vmatprep.subr.mxu0 0.0
    %3341 = vmatpush1.msra.mxu0 0.0
    %3342 = vmatprep.subr.mxu0 0.0
    %3343 = vmatpush1.msra.mxu0 0.0
    %3344 = vmatprep.subr.mxu0 0.0
    %3345 = vmatpush1.msra.mxu0 0.0
    %3346 = vmatprep.subr.mxu0 0.0
    %3347 = vmatpush1.msra.mxu0 0.0
    %3348 = vmatprep.subr.mxu0 0.0
    %3349 = vmatpush1.msra.mxu0 0.0
    %3350 = vmatprep.subr.mxu0 0.0
    %3351 = vmatpush1.msra.mxu0 0.0
    %3352 = vmatprep.subr.mxu0 0.0
    %3353 = vmatpush1.msra.mxu0 0.0
    %3354 = vmatprep.subr.mxu0 0.0
    %3355 = vmatpush1.msra.mxu0 0.0
    %3356 = vmatprep.subr.mxu0 0.0
    %3357 = vmatpush1.msra.mxu0 0.0
    %3358 = vmatprep.subr.mxu0 0.0
    %3359 = vmatpush1.msra.mxu0 0.0
    %3360 = vmatprep.subr.mxu0 0.0
    %3361 = vmatpush1.msra.mxu0 0.0
    %3362 = vmatprep.subr.mxu0 0.0
    %3363 = vmatpush1.msra.mxu0 0.0
    %3364 = vmatprep.mubr.f32.mxu0 0.0
    %3365 = vmatmul.mubr.f32.gmra.mrb[0].mxu0 %v3298
    %v3366 = vpop.f32.mrb[0].mxu0
    %v3367 = vadd.f32 %v195, %v3366
    %v3368 = vpop.f32.mrb[0].mxu0
    %3369 = vdwg.mxu0
    %v3371 = vrot.slane %v3367, 4
    %v3373 = vadd.f32 %v2220, %v3371
    %v3374 = vxor.u32 %v3373, 2147483648
    %v3375 = vmul.f32 %v3374, 1.442695
    %v3376 = vpow.pop %v3375
    %v3377 = vadd.f32 %v3376, 1.0
    %v3378 = vrcp.pop %v3377
    %v3379 = vmul.f32 1.0, %v3378
    %3380 = vrot.lane.b32.xlu0 %v3371, 64
    %v3381 = vpop.permute.xlu0 %3380
    %v3383 = vmul.f32 %v3379, %v3381
    %3385 = vrot.lane.b32.xlu0 %v3383, 64
    %v3386 = vpop.permute.xlu0 %3385
    %v3388 = vadd.f32 %v2220, %v3386
    %v3389 = vtanh.pop %v3388
    %v3390 = vsub.f32 1.0, %v3379
    %3392 = vrot.lane.b32.xlu0 %v3389, 96
    %v3393 = vpop.permute.xlu0 %3392
    %v3395 = vmul.f32 %v3390, %v3393
    %v3396 = vrot.slane %v3182, 4
    %v3398 = vmul.f32 %v3379, %v3396
    %v3399 = vadd.f32 %v3395, %v3398
    %v3401 = vrot.slane %v3294, 4
    %v3402 = vsel %vm228, %v3401, 0
    %3404 = vmatprep.subr.mxu0 0.0
    %3405 = vmatpush1.msra.mxu0 %v172
    %3406 = vmatprep.subr.mxu0 0.0
    %3407 = vmatpush1.msra.mxu0 %v173
    %3408 = vmatprep.subr.mxu0 0.0
    %3409 = vmatpush1.msra.mxu0 %v174
    %3410 = vmatprep.subr.mxu0 0.0
    %3411 = vmatpush1.msra.mxu0 %v175
    %3412 = vmatprep.subr.mxu0 0.0
    %3413 = vmatpush1.msra.mxu0 0.0
    %3414 = vmatprep.subr.mxu0 0.0
    %3415 = vmatpush1.msra.mxu0 0.0
    %3416 = vmatprep.subr.mxu0 0.0
    %3417 = vmatpush1.msra.mxu0 0.0
    %3418 = vmatprep.subr.mxu0 0.0
    %3419 = vmatpush1.msra.mxu0 0.0
    %3420 = vmatprep.subr.mxu0 0.0
    %3421 = vmatpush1.msra.mxu0 0.0
    %3422 = vmatprep.subr.mxu0 0.0
    %3423 = vmatpush1.msra.mxu0 0.0
    %3424 = vmatprep.subr.mxu0 0.0
    %3425 = vmatpush1.msra.mxu0 0.0
    %3426 = vmatprep.subr.mxu0 0.0
    %3427 = vmatpush1.msra.mxu0 0.0
    %3428 = vmatprep.subr.mxu0 0.0
    %3429 = vmatpush1.msra.mxu0 0.0
    %3430 = vmatprep.subr.mxu0 0.0
    %3431 = vmatpush1.msra.mxu0 0.0
    %3432 = vmatprep.subr.mxu0 0.0
    %3433 = vmatpush1.msra.mxu0 0.0
    %3434 = vmatprep.subr.mxu0 0.0
    %3435 = vmatpush1.msra.mxu0 0.0
    %3436 = vmatprep.subr.mxu0 0.0
    %3437 = vmatpush1.msra.mxu0 0.0
    %3438 = vmatprep.subr.mxu0 0.0
    %3439 = vmatpush1.msra.mxu0 0.0
    %3440 = vmatprep.subr.mxu0 0.0
    %3441 = vmatpush1.msra.mxu0 0.0
    %3442 = vmatprep.subr.mxu0 0.0
    %3443 = vmatpush1.msra.mxu0 0.0
    %3444 = vmatprep.subr.mxu0 0.0
    %3445 = vmatpush1.msra.mxu0 0.0
    %3446 = vmatprep.subr.mxu0 0.0
    %3447 = vmatpush1.msra.mxu0 0.0
    %3448 = vmatprep.subr.mxu0 0.0
    %3449 = vmatpush1.msra.mxu0 0.0
    %3450 = vmatprep.subr.mxu0 0.0
    %3451 = vmatpush1.msra.mxu0 0.0
    %3452 = vmatprep.subr.mxu0 0.0
    %3453 = vmatpush1.msra.mxu0 0.0
    %3454 = vmatprep.subr.mxu0 0.0
    %3455 = vmatpush1.msra.mxu0 0.0
    %3456 = vmatprep.subr.mxu0 0.0
    %3457 = vmatpush1.msra.mxu0 0.0
    %3458 = vmatprep.subr.mxu0 0.0
    %3459 = vmatpush1.msra.mxu0 0.0
    %3460 = vmatprep.subr.mxu0 0.0
    %3461 = vmatpush1.msra.mxu0 0.0
    %3462 = vmatprep.subr.mxu0 0.0
    %3463 = vmatpush1.msra.mxu0 0.0
    %3464 = vmatprep.subr.mxu0 0.0
    %3465 = vmatpush1.msra.mxu0 0.0
    %3466 = vmatprep.subr.mxu0 0.0
    %3467 = vmatpush1.msra.mxu0 0.0
    %3468 = vmatprep.mubr.f32.mxu0 0.0
    %3469 = vmatmul.mubr.f32.gmra.mrb[0].mxu0 %v3402
    %v3470 = vpop.f32.mrb[0].mxu0
    %v3471 = vadd.f32 %v202, %v3470
    %v3472 = vpop.f32.mrb[0].mxu0
    %3473 = vdwg.mxu0
    %3475 = vrot.lane.b32.xlu0 %v3471, 96
    %v3476 = vpop.permute.xlu0 %3475
    %v3478 = vadd.f32 %v2214, %v3476
    %v3479 = vadd.f32 %v2216, %v3476
    %v3480 = vxor.u32 %v3478, 2147483648
    %v3481 = vxor.u32 %v3479, 2147483648
    %v3482 = vmul.f32 %v3480, 1.442695
    %v3483 = vpow.pop %v3482
    %v3484 = vmul.f32 %v3481, 1.442695
    %v3485 = vpow.pop %v3484
    %v3486 = vadd.f32 %v3483, 1.0
    %v3487 = vadd.f32 %v3485, 1.0
    %v3488 = vrcp.pop %v3486
    %v3489 = vmul.f32 1.0, %v3488
    %v3490 = vrcp.pop %v3487
    %v3491 = vmul.f32 1.0, %v3490
    %3492 = vrot.lane.b32.xlu0 %v3471, 32
    %v3493 = vpop.permute.xlu0 %3492
    %v3495 = vmul.f32 %v3489, %v3493
    %3497 = vrot.lane.b32.xlu0 %v3495, 64
    %v3498 = vpop.permute.xlu0 %3497
    %v3500 = vadd.f32 %v2216, %v3498
    %v3501 = vtanh.pop %v3500
    %v3502 = vsub.f32 1.0, %v3491
    %3504 = vrot.lane.b32.xlu0 %v3501, 96
    %v3505 = vpop.permute.xlu0 %3504
    %v3507 = vmul.f32 %v3502, %v3505
    %v3509 = vmul.f32 %v3491, %v3401
    %v3510 = vadd.f32 %v3507, %v3509
    %v3512 = vrot.slane %v3399, 4
    %3513 = vrot.lane.b32.xlu0 %v3512, 96
    %v3514 = vpop.permute.xlu0 %3513
    %v3515 = vsel %vm228, %v3514, 0
    %3517 = vmatprep.subr.mxu0 0.0
    %3518 = vmatpush1.msra.mxu0 %v168
    %3519 = vmatprep.subr.mxu0 0.0
    %3520 = vmatpush1.msra.mxu0 %v169
    %3521 = vmatprep.subr.mxu0 0.0
    %3522 = vmatpush1.msra.mxu0 %v170
    %3523 = vmatprep.subr.mxu0 0.0
    %3524 = vmatpush1.msra.mxu0 %v171
    %3525 = vmatprep.subr.mxu0 0.0
    %3526 = vmatpush1.msra.mxu0 0.0
    %3527 = vmatprep.subr.mxu0 0.0
    %3528 = vmatpush1.msra.mxu0 0.0
    %3529 = vmatprep.subr.mxu0 0.0
    %3530 = vmatpush1.msra.mxu0 0.0
    %3531 = vmatprep.subr.mxu0 0.0
    %3532 = vmatpush1.msra.mxu0 0.0
    %3533 = vmatprep.subr.mxu0 0.0
    %3534 = vmatpush1.msra.mxu0 0.0
    %3535 = vmatprep.subr.mxu0 0.0
    %3536 = vmatpush1.msra.mxu0 0.0
    %3537 = vmatprep.subr.mxu0 0.0
    %3538 = vmatpush1.msra.mxu0 0.0
    %3539 = vmatprep.subr.mxu0 0.0
    %3540 = vmatpush1.msra.mxu0 0.0
    %3541 = vmatprep.subr.mxu0 0.0
    %3542 = vmatpush1.msra.mxu0 0.0
    %3543 = vmatprep.subr.mxu0 0.0
    %3544 = vmatpush1.msra.mxu0 0.0
    %3545 = vmatprep.subr.mxu0 0.0
    %3546 = vmatpush1.msra.mxu0 0.0
    %3547 = vmatprep.subr.mxu0 0.0
    %3548 = vmatpush1.msra.mxu0 0.0
    %3549 = vmatprep.subr.mxu0 0.0
    %3550 = vmatpush1.msra.mxu0 0.0
    %3551 = vmatprep.subr.mxu0 0.0
    %3552 = vmatpush1.msra.mxu0 0.0
    %3553 = vmatprep.subr.mxu0 0.0
    %3554 = vmatpush1.msra.mxu0 0.0
    %3555 = vmatprep.subr.mxu0 0.0
    %3556 = vmatpush1.msra.mxu0 0.0
    %3557 = vmatprep.subr.mxu0 0.0
    %3558 = vmatpush1.msra.mxu0 0.0
    %3559 = vmatprep.subr.mxu0 0.0
    %3560 = vmatpush1.msra.mxu0 0.0
    %3561 = vmatprep.subr.mxu0 0.0
    %3562 = vmatpush1.msra.mxu0 0.0
    %3563 = vmatprep.subr.mxu0 0.0
    %3564 = vmatpush1.msra.mxu0 0.0
    %3565 = vmatprep.subr.mxu0 0.0
    %3566 = vmatpush1.msra.mxu0 0.0
    %3567 = vmatprep.subr.mxu0 0.0
    %3568 = vmatpush1.msra.mxu0 0.0
    %3569 = vmatprep.subr.mxu0 0.0
    %3570 = vmatpush1.msra.mxu0 0.0
    %3571 = vmatprep.subr.mxu0 0.0
    %3572 = vmatpush1.msra.mxu0 0.0
    %3573 = vmatprep.subr.mxu0 0.0
    %3574 = vmatpush1.msra.mxu0 0.0
    %3575 = vmatprep.subr.mxu0 0.0
    %3576 = vmatpush1.msra.mxu0 0.0
    %3577 = vmatprep.subr.mxu0 0.0
    %3578 = vmatpush1.msra.mxu0 0.0
    %3579 = vmatprep.subr.mxu0 0.0
    %3580 = vmatpush1.msra.mxu0 0.0
    %3581 = vmatprep.mubr.f32.mxu0 0.0
    %3582 = vmatmul.mubr.f32.gmra.mrb[0].mxu0 %v3515
    %v3583 = vpop.f32.mrb[0].mxu0
    %v3584 = vadd.f32 %v195, %v3583
    %v3585 = vpop.f32.mrb[0].mxu0
    %3586 = vdwg.mxu0
    %v3587 = vadd.f32 %v2226, %v3584
    %v3588 = vxor.u32 %v3587, 2147483648
    %v3589 = vmul.f32 %v3588, 1.442695
    %v3590 = vpow.pop %v3589
    %v3591 = vadd.f32 %v3590, 1.0
    %v3592 = vrcp.pop %v3591
    %v3593 = vmul.f32 1.0, %v3592
    %3595 = vrot.lane.b32.xlu0 %v3584, 64
    %v3596 = vpop.permute.xlu0 %3595
    %v3598 = vmul.f32 %v3593, %v3596
    %3600 = vrot.lane.b32.xlu0 %v3598, 64
    %v3601 = vpop.permute.xlu0 %3600
    %v3603 = vadd.f32 %v2226, %v3601
    %v3604 = vtanh.pop %v3603
    %v3605 = vsub.f32 1.0, %v3593
    %3607 = vrot.lane.b32.xlu0 %v3604, 96
    %v3608 = vpop.permute.xlu0 %3607
    %v3610 = vmul.f32 %v3605, %v3608
    %v3612 = vmul.f32 %v3593, %v3512
    %v3613 = vadd.f32 %v3610, %v3612
    %v3615 = vsel %vm228, %v3510, 0
    %3617 = vmatprep.subr.mxu0 0.0
    %3618 = vmatpush1.msra.mxu0 %v172
    %3619 = vmatprep.subr.mxu0 0.0
    %3620 = vmatpush1.msra.mxu0 %v173
    %3621 = vmatprep.subr.mxu0 0.0
    %3622 = vmatpush1.msra.mxu0 %v174
    %3623 = vmatprep.subr.mxu0 0.0
    %3624 = vmatpush1.msra.mxu0 %v175
    %3625 = vmatprep.subr.mxu0 0.0
    %3626 = vmatpush1.msra.mxu0 0.0
    %3627 = vmatprep.subr.mxu0 0.0
    %3628 = vmatpush1.msra.mxu0 0.0
    %3629 = vmatprep.subr.mxu0 0.0
    %3630 = vmatpush1.msra.mxu0 0.0
    %3631 = vmatprep.subr.mxu0 0.0
    %3632 = vmatpush1.msra.mxu0 0.0
    %3633 = vmatprep.subr.mxu0 0.0
    %3634 = vmatpush1.msra.mxu0 0.0
    %3635 = vmatprep.subr.mxu0 0.0
    %3636 = vmatpush1.msra.mxu0 0.0
    %3637 = vmatprep.subr.mxu0 0.0
    %3638 = vmatpush1.msra.mxu0 0.0
    %3639 = vmatprep.subr.mxu0 0.0
    %3640 = vmatpush1.msra.mxu0 0.0
    %3641 = vmatprep.subr.mxu0 0.0
    %3642 = vmatpush1.msra.mxu0 0.0
    %3643 = vmatprep.subr.mxu0 0.0
    %3644 = vmatpush1.msra.mxu0 0.0
    %3645 = vmatprep.subr.mxu0 0.0
    %3646 = vmatpush1.msra.mxu0 0.0
    %3647 = vmatprep.subr.mxu0 0.0
    %3648 = vmatpush1.msra.mxu0 0.0
    %3649 = vmatprep.subr.mxu0 0.0
    %3650 = vmatpush1.msra.mxu0 0.0
    %3651 = vmatprep.subr.mxu0 0.0
    %3652 = vmatpush1.msra.mxu0 0.0
    %3653 = vmatprep.subr.mxu0 0.0
    %3654 = vmatpush1.msra.mxu0 0.0
    %3655 = vmatprep.subr.mxu0 0.0
    %3656 = vmatpush1.msra.mxu0 0.0
    %3657 = vmatprep.subr.mxu0 0.0
    %3658 = vmatpush1.msra.mxu0 0.0
    %3659 = vmatprep.subr.mxu0 0.0
    %3660 = vmatpush1.msra.mxu0 0.0
    %3661 = vmatprep.subr.mxu0 0.0
    %3662 = vmatpush1.msra.mxu0 0.0
    %3663 = vmatprep.subr.mxu0 0.0
    %3664 = vmatpush1.msra.mxu0 0.0
    %3665 = vmatprep.subr.mxu0 0.0
    %3666 = vmatpush1.msra.mxu0 0.0
    %3667 = vmatprep.subr.mxu0 0.0
    %3668 = vmatpush1.msra.mxu0 0.0
    %3669 = vmatprep.subr.mxu0 0.0
    %3670 = vmatpush1.msra.mxu0 0.0
    %3671 = vmatprep.subr.mxu0 0.0
    %3672 = vmatpush1.msra.mxu0 0.0
    %3673 = vmatprep.subr.mxu0 0.0
    %3674 = vmatpush1.msra.mxu0 0.0
    %3675 = vmatprep.subr.mxu0 0.0
    %3676 = vmatpush1.msra.mxu0 0.0
    %3677 = vmatprep.subr.mxu0 0.0
    %3678 = vmatpush1.msra.mxu0 0.0
    %3679 = vmatprep.subr.mxu0 0.0
    %3680 = vmatpush1.msra.mxu0 0.0
    %3681 = vmatprep.mubr.f32.mxu0 0.0
    %3682 = vmatmul.mubr.f32.gmra.mrb[0].mxu0 %v3615
    %v3683 = vpop.f32.mrb[0].mxu0
    %v3684 = vadd.f32 %v202, %v3683
    %v3685 = vpop.f32.mrb[0].mxu0
    %3686 = vdwg.mxu0
    %v3688 = vrot.slane %v3684, 4
    %3689 = vrot.lane.b32.xlu0 %v3688, 96
    %v3690 = vpop.permute.xlu0 %3689
    %v3692 = vadd.f32 %v2208, %v3690
    %v3693 = vadd.f32 %v2210, %v3690
    %v3694 = vxor.u32 %v3692, 2147483648
    %v3695 = vxor.u32 %v3693, 2147483648
    %v3696 = vmul.f32 %v3694, 1.442695
    %v3697 = vpow.pop %v3696
    %v3698 = vmul.f32 %v3695, 1.442695
    %v3699 = vpow.pop %v3698
    %v3700 = vadd.f32 %v3697, 1.0
    %v3701 = vadd.f32 %v3699, 1.0
    %v3702 = vrcp.pop %v3700
    %v3703 = vmul.f32 1.0, %v3702
    %v3704 = vrcp.pop %v3701
    %v3705 = vmul.f32 1.0, %v3704
    %3706 = vrot.lane.b32.xlu0 %v3688, 32
    %v3707 = vpop.permute.xlu0 %3706
    %v3709 = vmul.f32 %v3703, %v3707
    %3711 = vrot.lane.b32.xlu0 %v3709, 64
    %v3712 = vpop.permute.xlu0 %3711
    %v3714 = vadd.f32 %v2210, %v3712
    %v3715 = vtanh.pop %v3714
    %v3716 = vsub.f32 1.0, %v3705
    %3718 = vrot.lane.b32.xlu0 %v3715, 96
    %v3719 = vpop.permute.xlu0 %3718
    %v3721 = vmul.f32 %v3716, %v3719
    %v3722 = vrot.slane %v3510, 4
    %v3724 = vmul.f32 %v3705, %v3722
    %v3725 = vadd.f32 %v3721, %v3724
    %3727 = vrot.lane.b32.xlu0 %v3613, 96
    %v3728 = vpop.permute.xlu0 %3727
    %v3729 = vsel %vm228, %v3728, 0
    %3731 = vmatprep.subr.mxu0 0.0
    %3732 = vmatpush1.msra.mxu0 %v168
    %3733 = vmatprep.subr.mxu0 0.0
    %3734 = vmatpush1.msra.mxu0 %v169
    %3735 = vmatprep.subr.mxu0 0.0
    %3736 = vmatpush1.msra.mxu0 %v170
    %3737 = vmatprep.subr.mxu0 0.0
    %3738 = vmatpush1.msra.mxu0 %v171
    %3739 = vmatprep.subr.mxu0 0.0
    %3740 = vmatpush1.msra.mxu0 0.0
    %3741 = vmatprep.subr.mxu0 0.0
    %3742 = vmatpush1.msra.mxu0 0.0
    %3743 = vmatprep.subr.mxu0 0.0
    %3744 = vmatpush1.msra.mxu0 0.0
    %3745 = vmatprep.subr.mxu0 0.0
    %3746 = vmatpush1.msra.mxu0 0.0
    %3747 = vmatprep.subr.mxu0 0.0
    %3748 = vmatpush1.msra.mxu0 0.0
    %3749 = vmatprep.subr.mxu0 0.0
    %3750 = vmatpush1.msra.mxu0 0.0
    %3751 = vmatprep.subr.mxu0 0.0
    %3752 = vmatpush1.msra.mxu0 0.0
    %3753 = vmatprep.subr.mxu0 0.0
    %3754 = vmatpush1.msra.mxu0 0.0
    %3755 = vmatprep.subr.mxu0 0.0
    %3756 = vmatpush1.msra.mxu0 0.0
    %3757 = vmatprep.subr.mxu0 0.0
    %3758 = vmatpush1.msra.mxu0 0.0
    %3759 = vmatprep.subr.mxu0 0.0
    %3760 = vmatpush1.msra.mxu0 0.0
    %3761 = vmatprep.subr.mxu0 0.0
    %3762 = vmatpush1.msra.mxu0 0.0
    %3763 = vmatprep.subr.mxu0 0.0
    %3764 = vmatpush1.msra.mxu0 0.0
    %3765 = vmatprep.subr.mxu0 0.0
    %3766 = vmatpush1.msra.mxu0 0.0
    %3767 = vmatprep.subr.mxu0 0.0
    %3768 = vmatpush1.msra.mxu0 0.0
    %3769 = vmatprep.subr.mxu0 0.0
    %3770 = vmatpush1.msra.mxu0 0.0
    %3771 = vmatprep.subr.mxu0 0.0
    %3772 = vmatpush1.msra.mxu0 0.0
    %3773 = vmatprep.subr.mxu0 0.0
    %3774 = vmatpush1.msra.mxu0 0.0
    %3775 = vmatprep.subr.mxu0 0.0
    %3776 = vmatpush1.msra.mxu0 0.0
    %3777 = vmatprep.subr.mxu0 0.0
    %3778 = vmatpush1.msra.mxu0 0.0
    %3779 = vmatprep.subr.mxu0 0.0
    %3780 = vmatpush1.msra.mxu0 0.0
    %3781 = vmatprep.subr.mxu0 0.0
    %3782 = vmatpush1.msra.mxu0 0.0
    %3783 = vmatprep.subr.mxu0 0.0
    %3784 = vmatpush1.msra.mxu0 0.0
    %3785 = vmatprep.subr.mxu0 0.0
    %3786 = vmatpush1.msra.mxu0 0.0
    %3787 = vmatprep.subr.mxu0 0.0
    %3788 = vmatpush1.msra.mxu0 0.0
    %3789 = vmatprep.subr.mxu0 0.0
    %3790 = vmatpush1.msra.mxu0 0.0
    %3791 = vmatprep.subr.mxu0 0.0
    %3792 = vmatpush1.msra.mxu0 0.0
    %3793 = vmatprep.subr.mxu0 0.0
    %3794 = vmatpush1.msra.mxu0 0.0
    %3795 = vmatprep.mubr.f32.mxu0 0.0
    %3796 = vmatmul.mubr.f32.gmra.mrb[0].mxu0 %v3729
    %v3797 = vpop.f32.mrb[0].mxu0
    %v3798 = vadd.f32 %v195, %v3797
    %v3799 = vpop.f32.mrb[0].mxu0
    %3800 = vdwg.mxu0
    %v3802 = vrot.slane %v3798, 4
    %v3804 = vadd.f32 %v2226, %v3802
    %v3805 = vxor.u32 %v3804, 2147483648
    %v3806 = vmul.f32 %v3805, 1.442695
    %v3807 = vpow.pop %v3806
    %v3808 = vadd.f32 %v3807, 1.0
    %v3809 = vrcp.pop %v3808
    %v3810 = vmul.f32 1.0, %v3809
    %3811 = vrot.lane.b32.xlu0 %v3802, 64
    %v3812 = vpop.permute.xlu0 %3811
    %v3814 = vmul.f32 %v3810, %v3812
    %3816 = vrot.lane.b32.xlu0 %v3814, 64
    %v3817 = vpop.permute.xlu0 %3816
    %v3819 = vadd.f32 %v2226, %v3817
    %v3820 = vtanh.pop %v3819
    %v3821 = vsub.f32 1.0, %v3810
    %3823 = vrot.lane.b32.xlu0 %v3820, 96
    %v3824 = vpop.permute.xlu0 %3823
    %v3826 = vmul.f32 %v3821, %v3824
    %v3827 = vrot.slane %v3613, 4
    %v3829 = vmul.f32 %v3810, %v3827
    %v3830 = vadd.f32 %v3826, %v3829
    %v3832 = vrot.slane %v3725, 4
    %v3833 = vsel %vm228, %v3832, 0
    %3835 = vmatprep.subr.mxu0 0.0
    %3836 = vmatpush1.msra.mxu0 %v172
    %3837 = vmatprep.subr.mxu0 0.0
    %3838 = vmatpush1.msra.mxu0 %v173
    %3839 = vmatprep.subr.mxu0 0.0
    %3840 = vmatpush1.msra.mxu0 %v174
    %3841 = vmatprep.subr.mxu0 0.0
    %3842 = vmatpush1.msra.mxu0 %v175
    %3843 = vmatprep.subr.mxu0 0.0
    %3844 = vmatpush1.msra.mxu0 0.0
    %3845 = vmatprep.subr.mxu0 0.0
    %3846 = vmatpush1.msra.mxu0 0.0
    %3847 = vmatprep.subr.mxu0 0.0
    %3848 = vmatpush1.msra.mxu0 0.0
    %3849 = vmatprep.subr.mxu0 0.0
    %3850 = vmatpush1.msra.mxu0 0.0
    %3851 = vmatprep.subr.mxu0 0.0
    %3852 = vmatpush1.msra.mxu0 0.0
    %3853 = vmatprep.subr.mxu0 0.0
    %3854 = vmatpush1.msra.mxu0 0.0
    %3855 = vmatprep.subr.mxu0 0.0
    %3856 = vmatpush1.msra.mxu0 0.0
    %3857 = vmatprep.subr.mxu0 0.0
    %3858 = vmatpush1.msra.mxu0 0.0
    %3859 = vmatprep.subr.mxu0 0.0
    %3860 = vmatpush1.msra.mxu0 0.0
    %3861 = vmatprep.subr.mxu0 0.0
    %3862 = vmatpush1.msra.mxu0 0.0
    %3863 = vmatprep.subr.mxu0 0.0
    %3864 = vmatpush1.msra.mxu0 0.0
    %3865 = vmatprep.subr.mxu0 0.0
    %3866 = vmatpush1.msra.mxu0 0.0
    %3867 = vmatprep.subr.mxu0 0.0
    %3868 = vmatpush1.msra.mxu0 0.0
    %3869 = vmatprep.subr.mxu0 0.0
    %3870 = vmatpush1.msra.mxu0 0.0
    %3871 = vmatprep.subr.mxu0 0.0
    %3872 = vmatpush1.msra.mxu0 0.0
    %3873 = vmatprep.subr.mxu0 0.0
    %3874 = vmatpush1.msra.mxu0 0.0
    %3875 = vmatprep.subr.mxu0 0.0
    %3876 = vmatpush1.msra.mxu0 0.0
    %3877 = vmatprep.subr.mxu0 0.0
    %3878 = vmatpush1.msra.mxu0 0.0
    %3879 = vmatprep.subr.mxu0 0.0
    %3880 = vmatpush1.msra.mxu0 0.0
    %3881 = vmatprep.subr.mxu0 0.0
    %3882 = vmatpush1.msra.mxu0 0.0
    %3883 = vmatprep.subr.mxu0 0.0
    %3884 = vmatpush1.msra.mxu0 0.0
    %3885 = vmatprep.subr.mxu0 0.0
    %3886 = vmatpush1.msra.mxu0 0.0
    %3887 = vmatprep.subr.mxu0 0.0
    %3888 = vmatpush1.msra.mxu0 0.0
    %3889 = vmatprep.subr.mxu0 0.0
    %3890 = vmatpush1.msra.mxu0 0.0
    %3891 = vmatprep.subr.mxu0 0.0
    %3892 = vmatpush1.msra.mxu0 0.0
    %3893 = vmatprep.subr.mxu0 0.0
    %3894 = vmatpush1.msra.mxu0 0.0
    %3895 = vmatprep.subr.mxu0 0.0
    %3896 = vmatpush1.msra.mxu0 0.0
    %3897 = vmatprep.subr.mxu0 0.0
    %3898 = vmatpush1.msra.mxu0 0.0
    %3899 = vmatprep.mubr.f32.mxu0 0.0
    %3900 = vmatmul.mubr.f32.gmra.mrb[0].mxu0 %v3833
    %v3901 = vpop.f32.mrb[0].mxu0
    %v3902 = vadd.f32 %v202, %v3901
    %v3903 = vpop.f32.mrb[0].mxu0
    %3904 = vdwg.mxu0
    %3906 = vrot.lane.b32.xlu0 %v3902, 96
    %v3907 = vpop.permute.xlu0 %3906
    %v3909 = vadd.f32 %v2208, %v3907
    %v3910 = vadd.f32 %v2210, %v3907
    %v3911 = vxor.u32 %v3909, 2147483648
    %v3912 = vxor.u32 %v3910, 2147483648
    %v3913 = vmul.f32 %v3911, 1.442695
    %v3914 = vpow.pop %v3913
    %v3915 = vmul.f32 %v3912, 1.442695
    %v3916 = vpow.pop %v3915
    %v3917 = vadd.f32 %v3914, 1.0
    %v3918 = vadd.f32 %v3916, 1.0
    %v3919 = vrcp.pop %v3917
    %v3920 = vmul.f32 1.0, %v3919
    %v3921 = vrcp.pop %v3918
    %v3922 = vmul.f32 1.0, %v3921
    %3923 = vrot.lane.b32.xlu0 %v3902, 32
    %v3924 = vpop.permute.xlu0 %3923
    %v3926 = vmul.f32 %v3920, %v3924
    %3928 = vrot.lane.b32.xlu0 %v3926, 64
    %v3929 = vpop.permute.xlu0 %3928
    %v3931 = vadd.f32 %v2210, %v3929
    %v3932 = vtanh.pop %v3931
    %v3933 = vsub.f32 1.0, %v3922
    %3935 = vrot.lane.b32.xlu0 %v3932, 96
    %v3936 = vpop.permute.xlu0 %3935
    %v3938 = vmul.f32 %v3933, %v3936
    %v3940 = vmul.f32 %v3922, %v3832
    %v3941 = vadd.f32 %v3938, %v3940
    %v3942 = vrot.slane %v2044, 4
    %3943 = vrot.lane.b32.xlu0 %v3942, 32
    %v3944 = vpop.permute.xlu0 %3943
    %3947 = vrot.lane.b32.xlu0 %v3830, 32
    %v3948 = vpop.permute.xlu0 %3947
    %v3951 = vrot.slane %v3941, 4
    %3952 = vrot.lane.b32.xlu0 %v3951, 96
    %v3953 = vpop.permute.xlu0 %3952
    %v3955 = vsel %vm228, %v2089, %v3944
    %v3956 = vsel %vm2128, %v3955, %v3948
    %vm3957 = vcmask 785408
    %v3958 = vsel %vm3957, %v3956, %v3953
    %v3959 = vld [vmem:[%s13] sm:$0xff]
    %v3960 = vld [vmem:[%s13 + $0x8] sm:$0xff]
    %v3961 = vld [vmem:[%s13 + $0x10] sm:$0xff]
    %v3962 = vld [vmem:[%s13 + $0x18] sm:$0xff]
    %v3963 = vld [vmem:[%s13 + $0x20] sm:$0xff]
    %v3964 = vld [vmem:[%s13 + $0x28] sm:$0xff]
    %v3965 = vld [vmem:[%s13 + $0x30] sm:$0xff]
    %v3966 = vld [vmem:[%s13 + $0x38] sm:$0xff]
    %v3967 = vld [vmem:[%s13 + $0x40] sm:$0xff]
    %v3968 = vld [vmem:[%s13 + $0x48] sm:$0xff]
    %v3969 = vld [vmem:[%s13 + $0x50] sm:$0xff]
    %v3970 = vld [vmem:[%s13 + $0x58] sm:$0xff]
    %v3971 = vld [vmem:[%s13 + $0x60] sm:$0xff]
    %v3972 = vld [vmem:[%s13 + $0x68] sm:$0xff]
    %v3973 = vld [vmem:[%s13 + $0x70] sm:$0xff]
    %v3974 = vld [vmem:[%s13 + $0x78] sm:$0xff]
    %v3975 = vld [vmem:[%s14] sm:$0x1]
    %v3977 = vlaneseq
    %v3978 = vshrl.u32 %v3977, 7
    %v3979 = vsub.s32 0, %v3978
    %v3980 = vrot.slane %v3975, %v3979
    %v3983 = vrot.slane %v3958, 4
    %3985 = vmatprep.subr.mxu0 0.0
    %3986 = vmatpush1.msra.mxu0 %v3959
    %3987 = vmatprep.subr.mxu0 0.0
    %3988 = vmatpush1.msra.mxu0 %v3960
    %3989 = vmatprep.subr.mxu0 0.0
    %3990 = vmatpush1.msra.mxu0 %v3961
    %3991 = vmatprep.subr.mxu0 0.0
    %3992 = vmatpush1.msra.mxu0 %v3962
    %3993 = vmatprep.subr.mxu0 0.0
    %3994 = vmatpush1.msra.mxu0 %v3963
    %3995 = vmatprep.subr.mxu0 0.0
    %3996 = vmatpush1.msra.mxu0 %v3964
    %3997 = vmatprep.subr.mxu0 0.0
    %3998 = vmatpush1.msra.mxu0 %v3965
    %3999 = vmatprep.subr.mxu0 0.0
    %4000 = vmatpush1.msra.mxu0 %v3966
    %4001 = vmatprep.subr.mxu0 0.0
    %4002 = vmatpush1.msra.mxu0 %v3967
    %4003 = vmatprep.subr.mxu0 0.0
    %4004 = vmatpush1.msra.mxu0 %v3968
    %4005 = vmatprep.subr.mxu0 0.0
    %4006 = vmatpush1.msra.mxu0 %v3969
    %4007 = vmatprep.subr.mxu0 0.0
    %4008 = vmatpush1.msra.mxu0 %v3970
    %4009 = vmatprep.subr.mxu0 0.0
    %4010 = vmatpush1.msra.mxu0 %v3971
    %4011 = vmatprep.subr.mxu0 0.0
    %4012 = vmatpush1.msra.mxu0 %v3972
    %4013 = vmatprep.subr.mxu0 0.0
    %4014 = vmatpush1.msra.mxu0 %v3973
    %4015 = vmatprep.subr.mxu0 0.0
    %4016 = vmatpush1.msra.mxu0 %v3974
    %4017 = vmatprep.subr.mxu0 0.0
    %4018 = vmatpush1.msra.mxu0 0.0
    %4019 = vmatprep.subr.mxu0 0.0
    %4020 = vmatpush1.msra.mxu0 0.0
    %4021 = vmatprep.subr.mxu0 0.0
    %4022 = vmatpush1.msra.mxu0 0.0
    %4023 = vmatprep.subr.mxu0 0.0
    %4024 = vmatpush1.msra.mxu0 0.0
    %4025 = vmatprep.subr.mxu0 0.0
    %4026 = vmatpush1.msra.mxu0 0.0
    %4027 = vmatprep.subr.mxu0 0.0
    %4028 = vmatpush1.msra.mxu0 0.0
    %4029 = vmatprep.subr.mxu0 0.0
    %4030 = vmatpush1.msra.mxu0 0.0
    %4031 = vmatprep.subr.mxu0 0.0
    %4032 = vmatpush1.msra.mxu0 0.0
    %4033 = vmatprep.subr.mxu0 0.0
    %4034 = vmatpush1.msra.mxu0 0.0
    %4035 = vmatprep.subr.mxu0 0.0
    %4036 = vmatpush1.msra.mxu0 0.0
    %4037 = vmatprep.subr.mxu0 0.0
    %4038 = vmatpush1.msra.mxu0 0.0
    %4039 = vmatprep.subr.mxu0 0.0
    %4040 = vmatpush1.msra.mxu0 0.0
    %4041 = vmatprep.subr.mxu0 0.0
    %4042 = vmatpush1.msra.mxu0 0.0
    %4043 = vmatprep.subr.mxu0 0.0
    %4044 = vmatpush1.msra.mxu0 0.0
    %4045 = vmatprep.subr.mxu0 0.0
    %4046 = vmatpush1.msra.mxu0 0.0
    %4047 = vmatprep.subr.mxu0 0.0
    %4048 = vmatpush1.msra.mxu0 0.0
    %4049 = vmatprep.mubr.f32.mxu0 0.0
    %4050 = vmatmul.mubr.f32.gmra.mrb[0].mxu0 %v3983
    %v4051 = vpop.f32.mrb[0].mxu0
    %v4052 = vadd.f32 %v3980, %v4051
    %v4053 = vpop.f32.mrb[0].mxu0
    %4054 = vdwg.mxu0
    %v4055 = vtanh.pop %v4052
    %v4056 = vld [vmem:[%s15] sm:$0xff]
    %v4057 = vld [vmem:[%s15 + $0x8] sm:$0xff]
    %v4058 = vld [vmem:[%s15 + $0x10] sm:$0xff]
    %v4059 = vld [vmem:[%s15 + $0x18] sm:$0xff]
    %v4060 = vld [vmem:[%s16] sm:$0x1]
    %v4062 = vlaneseq
    %v4063 = vshrl.u32 %v4062, 7
    %v4064 = vsub.s32 0, %v4063
    %v4065 = vrot.slane %v4060, %v4064
    %v4068 = vsel %vm228, %v4055, 0
    %4070 = vmatprep.subr.mxu0 0.0
    %4071 = vmatpush1.msra.mxu0 %v4056
    %4072 = vmatprep.subr.mxu0 0.0
    %4073 = vmatpush1.msra.mxu0 %v4057
    %4074 = vmatprep.subr.mxu0 0.0
    %4075 = vmatpush1.msra.mxu0 %v4058
    %4076 = vmatprep.subr.mxu0 0.0
    %4077 = vmatpush1.msra.mxu0 %v4059
    %4078 = vmatprep.subr.mxu0 0.0
    %4079 = vmatpush1.msra.mxu0 0.0
    %4080 = vmatprep.subr.mxu0 0.0
    %4081 = vmatpush1.msra.mxu0 0.0
    %4082 = vmatprep.subr.mxu0 0.0
    %4083 = vmatpush1.msra.mxu0 0.0
    %4084 = vmatprep.subr.mxu0 0.0
    %4085 = vmatpush1.msra.mxu0 0.0
    %4086 = vmatprep.subr.mxu0 0.0
    %4087 = vmatpush1.msra.mxu0 0.0
    %4088 = vmatprep.subr.mxu0 0.0
    %4089 = vmatpush1.msra.mxu0 0.0
    %4090 = vmatprep.subr.mxu0 0.0
    %4091 = vmatpush1.msra.mxu0 0.0
    %4092 = vmatprep.subr.mxu0 0.0
    %4093 = vmatpush1.msra.mxu0 0.0
    %4094 = vmatprep.subr.mxu0 0.0
    %4095 = vmatpush1.msra.mxu0 0.0
    %4096 = vmatprep.subr.mxu0 0.0
    %4097 = vmatpush1.msra.mxu0 0.0
    %4098 = vmatprep.subr.mxu0 0.0
    %4099 = vmatpush1.msra.mxu0 0.0
    %4100 = vmatprep.subr.mxu0 0.0
    %4101 = vmatpush1.msra.mxu0 0.0
    %4102 = vmatprep.subr.mxu0 0.0
    %4103 = vmatpush1.msra.mxu0 0.0
    %4104 = vmatprep.subr.mxu0 0.0
    %4105 = vmatpush1.msra.mxu0 0.0
    %4106 = vmatprep.subr.mxu0 0.0
    %4107 = vmatpush1.msra.mxu0 0.0
    %4108 = vmatprep.subr.mxu0 0.0
    %4109 = vmatpush1.msra.mxu0 0.0
    %4110 = vmatprep.subr.mxu0 0.0
    %4111 = vmatpush1.msra.mxu0 0.0
    %4112 = vmatprep.subr.mxu0 0.0
    %4113 = vmatpush1.msra.mxu0 0.0
    %4114 = vmatprep.subr.mxu0 0.0
    %4115 = vmatpush1.msra.mxu0 0.0
    %4116 = vmatprep.subr.mxu0 0.0
    %4117 = vmatpush1.msra.mxu0 0.0
    %4118 = vmatprep.subr.mxu0 0.0
    %4119 = vmatpush1.msra.mxu0 0.0
    %4120 = vmatprep.subr.mxu0 0.0
    %4121 = vmatpush1.msra.mxu0 0.0
    %4122 = vmatprep.subr.mxu0 0.0
    %4123 = vmatpush1.msra.mxu0 0.0
    %4124 = vmatprep.subr.mxu0 0.0
    %4125 = vmatpush1.msra.mxu0 0.0
    %4126 = vmatprep.subr.mxu0 0.0
    %4127 = vmatpush1.msra.mxu0 0.0
    %4128 = vmatprep.subr.mxu0 0.0
    %4129 = vmatpush1.msra.mxu0 0.0
    %4130 = vmatprep.subr.mxu0 0.0
    %4131 = vmatpush1.msra.mxu0 0.0
    %4132 = vmatprep.subr.mxu0 0.0
    %4133 = vmatpush1.msra.mxu0 0.0
    %4134 = vmatprep.mubr.f32.mxu0 0.0
    %4135 = vmatmul.mubr.f32.gmra.mrb[0].mxu0 %v4068
    %v4136 = vpop.f32.mrb[0].mxu0
    %v4137 = vadd.f32 %v4065, %v4136
    %v4138 = vpop.f32.mrb[0].mxu0
    %4139 = vdwg.mxu0
    %vm4140 = vcmask 109568
    %v4141 = vsel %vm4140, %v4137, -inf
    %4142 = vmax.xlane.f32.xlu0 %v4141
    %v4143 = vpop.xlane.xlu0 %4142
    %v4144 = vsub.f32 %v4137, %v4143
    %v4145 = vmul.f32 %v4144, 1.442695
    %v4146 = vpow.pop %v4145
    %v4147 = vsel %vm4140, %v4146, 0.0
    %4148 = vadd.xlane.f32.xlu0 %v4147
    %v4149 = vpop.xlane.xlu0 %4148
    %v4150 = vrcp.pop %v4149
    %v4151 = vmul.f32 %v4146, %v4150
    %4152 = vst.msk [vmem:[#allocation16] sm:$0xf] %vm4140, %v4151
    // Predicated region
    $region102: #{tpu_custom_call.1} parent=1 // pred_check
      _
    $region103: #{tpu_custom_call.1} parent=1 // pred_check_branch
      %4154 = sbr.rel (0) target = $region105
    $region104: #{tpu_custom_call.1} parent=1 // pred_region
      %s4156 = ssub.s32 64, 64
      %4157 = vsyncadd [#allocation4], %s4156
      %s4159 = sshll.u32 [#allocation16], 4
      %s4160 = int_to_ptr.vmem [resolvable:$true] %s4159
      %4162 = dma.vmem_to_hbm [thread:$0]  %s4160, 64, %s17, [#allocation4]
    $region105: #{tpu_custom_call.1} parent=1 // pred_fallthru
      _
    // Predicated region
    $region106: #{tpu_custom_call.1} parent=1 // pred_check
      _
    $region107: #{tpu_custom_call.1} parent=1 // pred_check_branch
      %4164 = sbr.rel (0) target = $region109
    $region108: #{tpu_custom_call.1} parent=1 // pred_region
      %4165 = dma.done [#allocation4], 64
    $region109: #{tpu_custom_call.1} parent=1 // pred_fallthru
      _
    %4166 = vsyncpa [#allocation3], 1
    %4167 = vsyncpa [#allocation6], 1
    %4168 = vsyncpa [#allocation9], 1
    %4169 = vsyncpa [#allocation12], 1
    %4170 = vsyncpa [#allocation15], 1
    %4171 = vsyncpa [#allocation4], 1

</llo_original>
